<compile_context>
chip_gen: v7x
topology: tpu7x:2x2x1
jax: 0.10.0
libtpu: 0.0.40
codegen_flags: <defaults>
</compile_context>

<pallas_src>
import functools

import jax
import jax.numpy as jnp
from jax.experimental import pallas as pl
from jax.experimental.pallas import tpu as pltpu

LANE = 128   # lane width: pad all feature dims to a multiple of this
SUB = 8      # f32 sublanes: pad the (batch) row dim to this

_HIGHEST = jax.lax.Precision.HIGHEST


def _round_up(n, m):
    return ((n + m - 1) // m) * m


def _pad2d(a, rows, cols):
    out = jnp.zeros((rows, cols), a.dtype)
    return out.at[: a.shape[0], : a.shape[1]].set(a)


# ----------------------------- fused kernel -------------------------------- #

def _make_lsm_kernel(num_layers):
    """Grid axis = timesteps.  Per step:
       kernel(x_t, s0_0..s0_{L-1}, Win_0.., Wres_0.., b_0.., Wout,
              s_out_0..s_out_{L-1}, out_t)
    The state OUTPUT refs (constant block index) are the recurrent carry."""
    L = num_layers

    def kernel(*refs):
        x_ref = refs[0]                              # (b_pad, in_pad)  this timestep
        s0_refs = refs[1: 1 + L]                     # initial states
        win_refs = refs[1 + L: 1 + 2 * L]            # (prev_pad, cur_pad)
        wres_refs = refs[1 + 2 * L: 1 + 3 * L]       # (cur_pad, cur_pad)
        b_refs = refs[1 + 3 * L: 1 + 4 * L]          # (b_pad, cur_pad) pre-broadcast
        wout_ref = refs[1 + 4 * L]                   # (last_pad, out_pad)
        s_refs = refs[2 + 4 * L: 2 + 5 * L]          # carried states (VMEM resident)
        out_ref = refs[2 + 5 * L]                    # (b_pad, out_pad) this timestep

        t = pl.program_id(0)

        @pl.when(t == 0)
        def _():
            for i in range(L):
                s_refs[i][...] = s0_refs[i][...]

        drive = x_ref[...]
        for i in range(L):                           # static unroll over layers
            acc = jnp.dot(drive, win_refs[i][...],
                          preferred_element_type=jnp.float32,
                          precision=_HIGHEST)
            acc = acc + jnp.dot(s_refs[i][...], wres_refs[i][...],
                                preferred_element_type=jnp.float32,
                                precision=_HIGHEST)
            new_s = jnp.tanh(acc + b_refs[i][...])
            s_refs[i][...] = new_s
            drive = new_s

        out_ref[...] = jnp.dot(drive, wout_ref[...],
                               preferred_element_type=jnp.float32,
                               precision=_HIGHEST)

    return kernel


@functools.partial(jax.jit, static_argnames=("out_size",),
                   donate_argnames=("states_p",))
def _lsm_sequence_forward(x_seq, states_p, win_p, wres_p, bias_p, wout_p,
                          *, out_size):
    """Run T recurrent steps in ONE pallas_call.  x_seq: (T, batch, in_size)."""
    num_layers = len(states_p)
    T, batch, in_size = x_seq.shape
    b_pad = states_p[0].shape[0]
    in_pad = win_p[0].shape[0]
    out_pad = wout_p.shape[1]

    # Stage/pad the whole input sequence once (lane-dense, full sublanes).
    x_p = jnp.zeros((T, b_pad, in_pad), jnp.float32)
    x_p = x_p.at[:, :batch, :in_size].set(x_seq.astype(jnp.float32))

    def const_spec(shape):
        return pl.BlockSpec(shape, lambda t: (0, 0))   # DMA'd once, VMEM resident

    in_specs = (
        [pl.BlockSpec((None, b_pad, in_pad), lambda t: (t, 0, 0))]
        + [const_spec(s.shape) for s in states_p]
        + [const_spec(w.shape) for w in win_p]
        + [const_spec(w.shape) for w in wres_p]
        + [const_spec(b.shape) for b in bias_p]
        + [const_spec(wout_p.shape)]
    )
    out_specs = (
        tuple(const_spec(s.shape) for s in states_p)
        + (pl.BlockSpec((None, b_pad, out_pad), lambda t: (t, 0, 0)),)
    )
    out_shape = (
        tuple(jax.ShapeDtypeStruct(s.shape, jnp.float32) for s in states_p)
        + (jax.ShapeDtypeStruct((T, b_pad, out_pad), jnp.float32),)
    )

    results = pl.pallas_call(
        _make_lsm_kernel(num_layers),
        grid=(T,),
        in_specs=in_specs,
        out_specs=out_specs,
        out_shape=out_shape,
        # state input i (arg index 1+i) writes back into state output i
        input_output_aliases={1 + i: i for i in range(num_layers)},
        compiler_params=pltpu.CompilerParams(
            dimension_semantics=("arbitrary",)),
    )(x_p, *states_p, *win_p, *wres_p, *bias_p, wout_p)

    new_states = tuple(results[:num_layers])
    out_seq_p = results[num_layers]
    return out_seq_p[:, :batch, :out_size], new_states


# ------------------------------- module ------------------------------------ #

class LiquidStateMachine:
    """JAX/Pallas port of the PyTorch LiquidStateMachine module."""

    def __init__(self, input_size, output_size, layer, key):
        topology = [input_size] + list(layer)
        self.input_size = input_size
        self.output_size = output_size
        self.layer_sizes = list(layer)

        # --- unpadded parameters (exact PyTorch layout; used by the reference) ---
        self.input_weights = []
        self.reservoir_weights = []
        self.reservoir_biases = []
        init_states = []
        for i in range(1, len(topology)):
            prev, cur = topology[i - 1], topology[i]
            key, k_s, k_in, k_res = jax.random.split(key, 4)
            init_states.append(jax.random.normal(k_s, (1, cur), jnp.float32))
            self.reservoir_biases.append(jnp.zeros((1, cur), jnp.float32))
            self.input_weights.append(
                jax.random.normal(k_in, (prev, cur), jnp.float32))
            self.reservoir_weights.append(
                jax.random.normal(k_res, (cur, cur), jnp.float32))
        key, k_out = jax.random.split(key)
        self.output_weight = jax.random.normal(
            k_out, (topology[-1], output_size), jnp.float32)
        self.init_states = init_states   # unpadded snapshot of initial states

        # --- padded parameters for the kernel (built once) ---
        # TODO(synk): at reservoir sizes >= ~2k, switch weights to bf16 and/or an
        # N-tiled "parallel" grid axis so this still fits v7x's 64 MiB VMEM and
        # uses both of its TensorCores.
        pads = [_round_up(t, LANE) for t in topology]
        win_p, wres_p, bias_p, states_p = [], [], [], []
        for i in range(1, len(topology)):
            prev, cur = topology[i - 1], topology[i]
            p_pad, c_pad = pads[i - 1], pads[i]
            win_p.append(_pad2d(self.input_weights[i - 1], p_pad, c_pad))
            wres_p.append(_pad2d(self.reservoir_weights[i - 1], c_pad, c_pad))
            # pre-broadcast bias to a full (SUB, c_pad) tile -> plain vreg add
            b = _pad2d(self.reservoir_biases[i - 1], 1, c_pad)
            bias_p.append(jnp.broadcast_to(b, (SUB, c_pad)) + 0.0)
            states_p.append(_pad2d(init_states[i - 1], SUB, c_pad))
        self._win_p = tuple(win_p)
        self._wres_p = tuple(wres_p)
        self._bias_p = tuple(bias_p)
        self._states_p = tuple(states_p)
        self._wout_p = _pad2d(self.output_weight, pads[-1],
                              _round_up(output_size, LANE))

    def current_states(self):
        """Unpadded (1, cur) views of the current reservoir states."""
        return [s[:1, :cur] for s, cur in zip(self._states_p, self.layer_sizes)]

    def forward_sequence(self, x_seq):
        """x_seq: (T, batch, input_size) -> (T, batch, output_size); one launch."""
        out_seq, new_states = _lsm_sequence_forward(
            x_seq, self._states_p, self._win_p, self._wres_p, self._bias_p,
            self._wout_p, out_size=self.output_size)
        self._states_p = new_states
        return out_seq

    def forward(self, x):
        """Single recurrent step, identical semantics to the PyTorch forward."""
        return self.forward_sequence(x[None])[0]


# ----------------------------- reference ----------------------------------- #

def reference_forward(x, states, w_in, w_res, biases, w_out):
    states = list(states)
    states[0] = jnp.tanh(
        jnp.dot(x, w_in[0], precision=_HIGHEST)
        + jnp.dot(states[0], w_res[0], precision=_HIGHEST) + biases[0])
    for i in range(1, len(states)):
        states[i] = jnp.tanh(
            jnp.dot(states[i - 1], w_in[i], precision=_HIGHEST)
            + jnp.dot(states[i], w_res[i], precision=_HIGHEST) + biases[i])
    return jnp.dot(states[-1], w_out, precision=_HIGHEST), states


# ------------------------------- main --------------------------------------- #

if __name__ == "__main__":
    key = jax.random.PRNGKey(0)

    input_size = 32
    output_size = 16
    layers = [64, 32]
    batch = 1          # matches the PyTorch module's (1, N) state convention
    T = 4              # timesteps fused into one kernel launch

    key, k_model, k_seq, k_single = jax.random.split(key, 4)
    lsm = LiquidStateMachine(input_size, output_size, layers, k_model)

    x_seq = jax.random.normal(k_seq, (T, batch, input_size), jnp.float32)
    x_single = jax.random.normal(k_single, (batch, input_size), jnp.float32)

    # T recurrent steps in ONE fused Pallas launch, then one more single step.
    out_seq = lsm.forward_sequence(x_seq)
    out_last = lsm.forward(x_single)
    out_last = jax.block_until_ready(out_last)

    # pure-JAX reference, stepping T + 1 times
    ref_states = list(lsm.init_states)
    ref_outs = []
    for t in range(T):
        o, ref_states = reference_forward(
            x_seq[t], ref_states, lsm.input_weights, lsm.reservoir_weights,
            lsm.reservoir_biases, lsm.output_weight)
        ref_outs.append(o)
    ref_out_seq = jnp.stack(ref_outs)
    ref_out_last, ref_states = reference_forward(
        x_single, ref_states, lsm.input_weights, lsm.reservoir_weights,
        lsm.reservoir_biases, lsm.output_weight)

    assert out_seq.shape == (T, batch, output_size)
    assert out_last.shape == (batch, output_size)
    assert jnp.allclose(out_seq, ref_out_seq, atol=1e-4, rtol=1e-4)
    assert jnp.allclose(out_last, ref_out_last, atol=1e-4, rtol=1e-4)
    for s_pallas, s_ref in zip(lsm.current_states(), ref_states):
        assert s_pallas.shape == s_ref.shape
        assert jnp.allclose(s_pallas, s_ref, atol=1e-4, rtol=1e-4)

    print("KERNEL_OK")
</pallas_src>

<mosaic_0001>
module attributes {stable_mosaic.version = 11 : i64} {
  func.func @kernel(%arg0: i32, %arg1: memref<1x8x128xf32, #tpu.memory_space<vmem>>, %arg2: memref<8x128xf32, #tpu.memory_space<vmem>>, %arg3: memref<8x128xf32, #tpu.memory_space<vmem>>, %arg4: memref<128x128xf32, #tpu.memory_space<vmem>>, %arg5: memref<128x128xf32, #tpu.memory_space<vmem>>, %arg6: memref<128x128xf32, #tpu.memory_space<vmem>>, %arg7: memref<128x128xf32, #tpu.memory_space<vmem>>, %arg8: memref<8x128xf32, #tpu.memory_space<vmem>>, %arg9: memref<8x128xf32, #tpu.memory_space<vmem>>, %arg10: memref<128x128xf32, #tpu.memory_space<vmem>>, %arg11: memref<8x128xf32, #tpu.memory_space<vmem>>, %arg12: memref<8x128xf32, #tpu.memory_space<vmem>>, %arg13: memref<1x8x128xf32, #tpu.memory_space<vmem>>) attributes {dimension_semantics = [#tpu.dimension_semantics<arbitrary>], iteration_bounds = array<i64: 4>, scalar_prefetch = 0 : i64, scratch_operands = 0 : i64, tpu.core_type = #tpu.core_type<tc>, window_params = [{transform_indices = @transform_0, window_bounds = array<i64: 1, 8, 128>}, {pipeline_mode = #tpu.pipeline_mode<synchronous>, transform_indices = @transform_1, window_bounds = array<i64: 8, 128>}, {pipeline_mode = #tpu.pipeline_mode<synchronous>, transform_indices = @transform_2, window_bounds = array<i64: 8, 128>}, {pipeline_mode = #tpu.pipeline_mode<synchronous>, transform_indices = @transform_3, window_bounds = array<i64: 128, 128>}, {pipeline_mode = #tpu.pipeline_mode<synchronous>, transform_indices = @transform_4, window_bounds = array<i64: 128, 128>}, {pipeline_mode = #tpu.pipeline_mode<synchronous>, transform_indices = @transform_5, window_bounds = array<i64: 128, 128>}, {pipeline_mode = #tpu.pipeline_mode<synchronous>, transform_indices = @transform_6, window_bounds = array<i64: 128, 128>}, {pipeline_mode = #tpu.pipeline_mode<synchronous>, transform_indices = @transform_7, window_bounds = array<i64: 8, 128>}, {pipeline_mode = #tpu.pipeline_mode<synchronous>, transform_indices = @transform_8, window_bounds = array<i64: 8, 128>}, {pipeline_mode = #tpu.pipeline_mode<synchronous>, transform_indices = @transform_9, window_bounds = array<i64: 128, 128>}, {pipeline_mode = #tpu.pipeline_mode<synchronous>, transform_indices = @transform_10, window_bounds = array<i64: 8, 128>}, {pipeline_mode = #tpu.pipeline_mode<synchronous>, transform_indices = @transform_11, window_bounds = array<i64: 8, 128>}, {transform_indices = @transform_12, window_bounds = array<i64: 1, 8, 128>}]} {
    %c0_i32 = arith.constant 0 : i32
    %0 = arith.cmpi eq, %arg0, %c0_i32 : i32
    %1 = arith.extui %0 : i1 to i32
    %c0_i32_0 = arith.constant 0 : i32
    %2 = arith.cmpi ne, %1, %c0_i32_0 : i32
    scf.if %2 {
      %c0_32 = arith.constant 0 : index
      %c0_33 = arith.constant 0 : index
      %30 = vector.load %arg2[%c0_32, %c0_33] : memref<8x128xf32, #tpu.memory_space<vmem>>, vector<8x128xf32>
      %c0_34 = arith.constant 0 : index
      %c0_35 = arith.constant 0 : index
      %31 = vector.load %arg11[%c0_34, %c0_35] : memref<8x128xf32, #tpu.memory_space<vmem>>, vector<8x128xf32>
      tpu.vector_store %arg11[%c0_34, %c0_35], %30 {strides = array<i32>} : memref<8x128xf32, #tpu.memory_space<vmem>>, vector<8x128xf32>,
      %c0_36 = arith.constant 0 : index
      %c0_37 = arith.constant 0 : index
      %32 = vector.load %arg3[%c0_36, %c0_37] : memref<8x128xf32, #tpu.memory_space<vmem>>, vector<8x128xf32>
      %c0_38 = arith.constant 0 : index
      %c0_39 = arith.constant 0 : index
      %33 = vector.load %arg12[%c0_38, %c0_39] : memref<8x128xf32, #tpu.memory_space<vmem>>, vector<8x128xf32>
      tpu.vector_store %arg12[%c0_38, %c0_39], %32 {strides = array<i32>} : memref<8x128xf32, #tpu.memory_space<vmem>>, vector<8x128xf32>,
    } else {
    }
    %c0 = arith.constant 0 : index
    %c0_1 = arith.constant 0 : index
    %c0_2 = arith.constant 0 : index
    %3 = vector.load %arg1[%c0, %c0_1, %c0_2] : memref<1x8x128xf32, #tpu.memory_space<vmem>>, vector<1x8x128xf32>
    %4 = vector.shape_cast %3 : vector<1x8x128xf32> to vector<8x128xf32>
    %c0_3 = arith.constant 0 : index
    %c0_4 = arith.constant 0 : index
    %5 = vector.load %arg4[%c0_3, %c0_4] : memref<128x128xf32, #tpu.memory_space<vmem>>, vector<128x128xf32>
    %cst = arith.constant dense<0.000000e+00> : vector<8x128xf32>
    %6 = tpu.matmul %4, %5, %cst {dimension_numbers = #tpu.dot_dimension_numbers<[1], [0], [0], [1], [0, 0, 1, 1], [], []>, precision = #tpu.contract_precision<fp32>} : vector<8x128xf32>, vector<128x128xf32>, vector<8x128xf32> -> vector<8x128xf32>
    %c0_5 = arith.constant 0 : index
    %c0_6 = arith.constant 0 : index
    %7 = vector.load %arg11[%c0_5, %c0_6] : memref<8x128xf32, #tpu.memory_space<vmem>>, vector<8x128xf32>
    %c0_7 = arith.constant 0 : index
    %c0_8 = arith.constant 0 : index
    %8 = vector.load %arg6[%c0_7, %c0_8] : memref<128x128xf32, #tpu.memory_space<vmem>>, vector<128x128xf32>
    %cst_9 = arith.constant dense<0.000000e+00> : vector<8x128xf32>
    %9 = tpu.matmul %7, %8, %cst_9 {dimension_numbers = #tpu.dot_dimension_numbers<[1], [0], [0], [1], [0, 0, 1, 1], [], []>, precision = #tpu.contract_precision<fp32>} : vector<8x128xf32>, vector<128x128xf32>, vector<8x128xf32> -> vector<8x128xf32>
    %10 = arith.addf %6, %9 : vector<8x128xf32>
    %c0_10 = arith.constant 0 : index
    %c0_11 = arith.constant 0 : index
    %11 = vector.load %arg8[%c0_10, %c0_11] : memref<8x128xf32, #tpu.memory_space<vmem>>, vector<8x128xf32>
    %12 = arith.addf %10, %11 : vector<8x128xf32>
    %13 = math.tanh %12 : vector<8x128xf32>
    %c0_12 = arith.constant 0 : index
    %c0_13 = arith.constant 0 : index
    %14 = vector.load %arg11[%c0_12, %c0_13] : memref<8x128xf32, #tpu.memory_space<vmem>>, vector<8x128xf32>
    tpu.vector_store %arg11[%c0_12, %c0_13], %13 {strides = array<i32>} : memref<8x128xf32, #tpu.memory_space<vmem>>, vector<8x128xf32>,
    %c0_14 = arith.constant 0 : index
    %c0_15 = arith.constant 0 : index
    %15 = vector.load %arg5[%c0_14, %c0_15] : memref<128x128xf32, #tpu.memory_space<vmem>>, vector<128x128xf32>
    %cst_16 = arith.constant dense<0.000000e+00> : vector<8x128xf32>
    %16 = tpu.matmul %13, %15, %cst_16 {dimension_numbers = #tpu.dot_dimension_numbers<[1], [0], [0], [1], [0, 0, 1, 1], [], []>, precision = #tpu.contract_precision<fp32>} : vector<8x128xf32>, vector<128x128xf32>, vector<8x128xf32> -> vector<8x128xf32>
    %c0_17 = arith.constant 0 : index
    %c0_18 = arith.constant 0 : index
    %17 = vector.load %arg12[%c0_17, %c0_18] : memref<8x128xf32, #tpu.memory_space<vmem>>, vector<8x128xf32>
    %c0_19 = arith.constant 0 : index
    %c0_20 = arith.constant 0 : index
    %18 = vector.load %arg7[%c0_19, %c0_20] : memref<128x128xf32, #tpu.memory_space<vmem>>, vector<128x128xf32>
    %cst_21 = arith.constant dense<0.000000e+00> : vector<8x128xf32>
    %19 = tpu.matmul %17, %18, %cst_21 {dimension_numbers = #tpu.dot_dimension_numbers<[1], [0], [0], [1], [0, 0, 1, 1], [], []>, precision = #tpu.contract_precision<fp32>} : vector<8x128xf32>, vector<128x128xf32>, vector<8x128xf32> -> vector<8x128xf32>
    %20 = arith.addf %16, %19 : vector<8x128xf32>
    %c0_22 = arith.constant 0 : index
    %c0_23 = arith.constant 0 : index
    %21 = vector.load %arg9[%c0_22, %c0_23] : memref<8x128xf32, #tpu.memory_space<vmem>>, vector<8x128xf32>
    %22 = arith.addf %20, %21 : vector<8x128xf32>
    %23 = math.tanh %22 : vector<8x128xf32>
    %c0_24 = arith.constant 0 : index
    %c0_25 = arith.constant 0 : index
    %24 = vector.load %arg12[%c0_24, %c0_25] : memref<8x128xf32, #tpu.memory_space<vmem>>, vector<8x128xf32>
    tpu.vector_store %arg12[%c0_24, %c0_25], %23 {strides = array<i32>} : memref<8x128xf32, #tpu.memory_space<vmem>>, vector<8x128xf32>,
    %c0_26 = arith.constant 0 : index
    %c0_27 = arith.constant 0 : index
    %25 = vector.load %arg10[%c0_26, %c0_27] : memref<128x128xf32, #tpu.memory_space<vmem>>, vector<128x128xf32>
    %cst_28 = arith.constant dense<0.000000e+00> : vector<8x128xf32>
    %26 = tpu.matmul %23, %25, %cst_28 {dimension_numbers = #tpu.dot_dimension_numbers<[1], [0], [0], [1], [0, 0, 1, 1], [], []>, precision = #tpu.contract_precision<fp32>} : vector<8x128xf32>, vector<128x128xf32>, vector<8x128xf32> -> vector<8x128xf32>
    %c0_29 = arith.constant 0 : index
    %c0_30 = arith.constant 0 : index
    %c0_31 = arith.constant 0 : index
    %27 = vector.load %arg13[%c0_29, %c0_30, %c0_31] : memref<1x8x128xf32, #tpu.memory_space<vmem>>, vector<1x8x128xf32>
    %28 = vector.shape_cast %27 : vector<1x8x128xf32> to vector<8x128xf32>
    %29 = vector.shape_cast %26 : vector<8x128xf32> to vector<1x8x128xf32>
    tpu.vector_store %arg13[%c0_29, %c0_30, %c0_31], %29 {strides = array<i32>} : memref<1x8x128xf32, #tpu.memory_space<vmem>>, vector<1x8x128xf32>,
    return
  }
  func.func @transform_0(%arg0: i32) -> (i32, i32, i32) {
    %c0_i32 = arith.constant 0 : i32
    %c0_i32_0 = arith.constant 0 : i32
    %c0_i32_1 = arith.constant 0 : i32
    return %arg0, %c0_i32, %c0_i32_0 : i32, i32, i32
  }
  func.func @transform_1(%arg0: i32) -> (i32, i32) {
    %c0_i32 = arith.constant 0 : i32
    %c0_i32_0 = arith.constant 0 : i32
    %c0_i32_1 = arith.constant 0 : i32
    return %c0_i32, %c0_i32_0 : i32, i32
  }
  func.func @transform_2(%arg0: i32) -> (i32, i32) {
    %c0_i32 = arith.constant 0 : i32
    %c0_i32_0 = arith.constant 0 : i32
    %c0_i32_1 = arith.constant 0 : i32
    return %c0_i32, %c0_i32_0 : i32, i32
  }
  func.func @transform_3(%arg0: i32) -> (i32, i32) {
    %c0_i32 = arith.constant 0 : i32
    %c0_i32_0 = arith.constant 0 : i32
    %c0_i32_1 = arith.constant 0 : i32
    return %c0_i32, %c0_i32_0 : i32, i32
  }
  func.func @transform_4(%arg0: i32) -> (i32, i32) {
    %c0_i32 = arith.constant 0 : i32
    %c0_i32_0 = arith.constant 0 : i32
    %c0_i32_1 = arith.constant 0 : i32
    return %c0_i32, %c0_i32_0 : i32, i32
  }
  func.func @transform_5(%arg0: i32) -> (i32, i32) {
    %c0_i32 = arith.constant 0 : i32
    %c0_i32_0 = arith.constant 0 : i32
    %c0_i32_1 = arith.constant 0 : i32
    return %c0_i32, %c0_i32_0 : i32, i32
  }
  func.func @transform_6(%arg0: i32) -> (i32, i32) {
    %c0_i32 = arith.constant 0 : i32
    %c0_i32_0 = arith.constant 0 : i32
    %c0_i32_1 = arith.constant 0 : i32
    return %c0_i32, %c0_i32_0 : i32, i32
  }
  func.func @transform_7(%arg0: i32) -> (i32, i32) {
    %c0_i32 = arith.constant 0 : i32
    %c0_i32_0 = arith.constant 0 : i32
    %c0_i32_1 = arith.constant 0 : i32
    return %c0_i32, %c0_i32_0 : i32, i32
  }
  func.func @transform_8(%arg0: i32) -> (i32, i32) {
    %c0_i32 = arith.constant 0 : i32
    %c0_i32_0 = arith.constant 0 : i32
    %c0_i32_1 = arith.constant 0 : i32
    return %c0_i32, %c0_i32_0 : i32, i32
  }
  func.func @transform_9(%arg0: i32) -> (i32, i32) {
    %c0_i32 = arith.constant 0 : i32
    %c0_i32_0 = arith.constant 0 : i32
    %c0_i32_1 = arith.constant 0 : i32
    return %c0_i32, %c0_i32_0 : i32, i32
  }
  func.func @transform_10(%arg0: i32) -> (i32, i32) {
    %c0_i32 = arith.constant 0 : i32
    %c0_i32_0 = arith.constant 0 : i32
    %c0_i32_1 = arith.constant 0 : i32
    return %c0_i32, %c0_i32_0 : i32, i32
  }
  func.func @transform_11(%arg0: i32) -> (i32, i32) {
    %c0_i32 = arith.constant 0 : i32
    %c0_i32_0 = arith.constant 0 : i32
    %c0_i32_1 = arith.constant 0 : i32
    return %c0_i32, %c0_i32_0 : i32, i32
  }
  func.func @transform_12(%arg0: i32) -> (i32, i32, i32) {
    %c0_i32 = arith.constant 0 : i32
    %c0_i32_0 = arith.constant 0 : i32
    %c0_i32_1 = arith.constant 0 : i32
    return %arg0, %c0_i32, %c0_i32_0 : i32, i32, i32
  }
}

</mosaic_0001>

<llo_original>
// kernel: _lsm_sequence_forward.1
$region0: #{_lsm_sequence_forward.1}
  #allocation0 [shape = 'u32[]', space=smem, size = 0x4, offset = 0x4, fixed_abs, tag = 'smem constant byte address 0x4 - core index']
  #allocation1 [shape = 'u32[144,128]{1,0:T(1,128)}', space=vmem, size = 0x12000, scoped, tag = 'internal scratch']
  %s0 = inlined_call_operand.vmem [shape: f32[4,8,128], index: 0, kind: input, shape index: {}]
  %s1 = inlined_call_operand.vmem [shape: f32[8,128], index: 1, kind: input, shape index: {}, may-alias: {1,10}]
  %s2 = inlined_call_operand.vmem [shape: f32[8,128], index: 2, kind: input, shape index: {}, may-alias: {2,11}]
  %s3 = inlined_call_operand.hbm [shape: f32[128,128], index: 3, kind: input, shape index: {}]
  %s4 = inlined_call_operand.hbm [shape: f32[128,128], index: 4, kind: input, shape index: {}]
  %s5 = inlined_call_operand.hbm [shape: f32[128,128], index: 5, kind: input, shape index: {}]
  %s6 = inlined_call_operand.hbm [shape: f32[128,128], index: 6, kind: input, shape index: {}]
  %s7 = inlined_call_operand.vmem [shape: f32[8,128], index: 7, kind: input, shape index: {}]
  %s8 = inlined_call_operand.vmem [shape: f32[8,128], index: 8, kind: input, shape index: {}]
  %s9 = inlined_call_operand.hbm [shape: f32[128,128], index: 9, kind: input, shape index: {}]
  %s10 = inlined_call_operand.vmem [shape: f32[8,128], index: 10, kind: output, shape index: {0}, may-alias: {1,10}]
  %s11 = inlined_call_operand.vmem [shape: f32[8,128], index: 11, kind: output, shape index: {1}, may-alias: {2,11}]
  %s12 = inlined_call_operand.vmem [shape: f32[4,8,128], index: 12, kind: output, shape index: {2}]
  %13 = xla_tuple %s10, %s11, %s12
  %s14 = sld [smem:[#allocation0]]
  $region113: #{_lsm_sequence_forward.1} parent=0
    _
  %s16 = ssub.s32 1, %s14
  %s17 = scalar_select 0, %s16, %s14
  $region1: #{_lsm_sequence_forward.1} parent=0
    #allocation2 [shape = 'u8[65536]{0}', space=vmem, size = 0x10000, scoped, tag = 'input window, operand 3, single buffered']
    #allocation3 [shape = 's32[2]{0}', space=sflag, size = 0x8, scoped, tag = 'scoped memory for _lsm_sequence_forward.1']
    #allocation4 [shape = 'u8[65536]{0}', space=vmem, size = 0x10000, scoped, tag = 'input window, operand 4, single buffered']
    #allocation5 [shape = 's32[1]{0}', space=sflag, size = 0x4, scoped, tag = 'scoped memory for _lsm_sequence_forward.1']
    #allocation6 [shape = 'u8[65536]{0}', space=vmem, size = 0x10000, scoped, tag = 'input window, operand 5, single buffered']
    #allocation7 [shape = 'u8[65536]{0}', space=vmem, size = 0x10000, scoped, tag = 'input window, operand 6, single buffered']
    #allocation8 [shape = 's32[1]{0}', space=sflag, size = 0x4, scoped, tag = 'scoped memory for _lsm_sequence_forward.1']
    #allocation9 [shape = 'u8[65536]{0}', space=vmem, size = 0x10000, scoped, tag = 'input window, operand 9, single buffered']
    %18 = vsyncpa [#allocation3], 0
    %19 = vsyncpa [#allocation5], 0
    %20 = vsyncpa [#allocation8], 0
    loop: start=0, step=1, limit=6
    $region2: #{_lsm_sequence_forward.1} parent=1 // loop_pre_header
      _
    $region3: #{_lsm_sequence_forward.1} parent=1 // loop_header
      %s22 = sphi 0, %s26
      %p23 = scmp.ge.s32.totalorder %s22, 6
      %s32 = sphi 0, %s34
      %s35 = sphi 0, %s32
      %s36 = sphi 0, %s35
      %s52 = sphi 0, %s36
      %s56 = sphi 0, %s56
      %s58 = sphi 0, %s56
      %s59 = sphi 0, %s58
      %s73 = sphi 0, %s59
      %s77 = sphi 0, %s77
      %s79 = sphi 0, %s77
      %s80 = sphi 0, %s79
      %s94 = sphi 0, %s80
      %s98 = sphi 0, %s98
      %s100 = sphi 0, %s98
      %s101 = sphi 0, %s100
      %s115 = sphi 0, %s101
      %s119 = sphi 0, %s119
      %s121 = sphi 0, %s119
      %s122 = sphi 0, %s121
      %s136 = sphi 0, %s122
      %s140 = sphi 0, %s140
      %s142 = sphi 0, %s140
      %s143 = sphi 0, %s142
      %s157 = sphi 0, %s143
      %s161 = sphi 0, %s161
      %s163 = sphi 0, %s161
      %s164 = sphi 0, %s163
      %s178 = sphi 0, %s164
      %s182 = sphi 0, %s182
      %s184 = sphi 0, %s182
      %s185 = sphi 0, %s184
      %s199 = sphi 0, %s185
      %s203 = sphi 0, %s203
      %s205 = sphi 0, %s203
      %s206 = sphi 0, %s205
      %s220 = sphi 0, %s206
      %s224 = sphi 0, %s224
      %s226 = sphi 0, %s224
      %s227 = sphi 0, %s226
      %s241 = sphi 0, %s227
      %s245 = sphi 0, %s245
      %s247 = sphi 0, %s245
      %s248 = sphi 0, %s247
      %s262 = sphi 0, %s248
      %s266 = sphi 0, %s266
      %s268 = sphi 0, %s266
      %s269 = sphi 0, %s268
      %s283 = sphi 0, %s269
      %s289 = sphi 0, %s291
      %s292 = sphi 0, %s289
      %s293 = sphi 0, %s292
      %s309 = sphi 0, %s293
    $region4: #{_lsm_sequence_forward.1} parent=1 // loop_header_branch
      %25 = sbr.rel (%p23) target = $region8
    $region5: #{_lsm_sequence_forward.1} parent=1 // loop_body
      %s27 = ssub.s32 %s22, 1
      %s28 = ssub.s32 %s22, 2
      %s29 = sadd.s32 %s22, 1
      %s30 = ssub.s32 %s22, %s29
      %p31 = scmp.eq.s32.totalorder %s30, 0
      %s33 = sadd.s32 %s32, 1
      %s34 = scalar_select %p31, %s32, %s33
      %p37 = pneg %p31
      %p38 = scmp.eq.s32.totalorder %s22, 3
      %p39 = por %p37, %p38
      %p40 = scmp.ne.s32.totalorder %s32, %s35
      %p41 = scmp.eq.s32.totalorder %s22, 0
      %p42 = por %p40, %p41
      %p43 = scmp.ne.s32.totalorder %s32, %s35
      %p44 = scmp.eq.s32.totalorder %s27, 3
      %p45 = por %p43, %p44
      %p46 = scmp.ne.s32.totalorder %s35, %s36
      %p47 = scmp.eq.s32.totalorder %s27, 0
      %p48 = por %p46, %p47
      %p49 = scmp.ne.s32.totalorder %s35, %s36
      %p50 = scmp.eq.s32.totalorder %s28, 3
      %p51 = por %p49, %p50
      %p53 = scmp.ne.s32.totalorder %s36, %s52
      %p54 = scmp.eq.s32.totalorder %s28, 0
      %p55 = por %p53, %p54
      %s57 = sadd.s32 %s56, 1
      %p60 = scmp.eq.s32.totalorder %s22, 3
      %p61 = scmp.ne.s32.totalorder %s56, %s58
      %p62 = scmp.eq.s32.totalorder %s22, 0
      %p63 = por %p61, %p62
      %p64 = scmp.ne.s32.totalorder %s56, %s58
      %p65 = scmp.eq.s32.totalorder %s27, 3
      %p66 = por %p64, %p65
      %p67 = scmp.ne.s32.totalorder %s58, %s59
      %p68 = scmp.eq.s32.totalorder %s27, 0
      %p69 = por %p67, %p68
      %p70 = scmp.ne.s32.totalorder %s58, %s59
      %p71 = scmp.eq.s32.totalorder %s28, 3
      %p72 = por %p70, %p71
      %p74 = scmp.ne.s32.totalorder %s59, %s73
      %p75 = scmp.eq.s32.totalorder %s28, 0
      %p76 = por %p74, %p75
      %s78 = sadd.s32 %s77, 1
      %p81 = scmp.eq.s32.totalorder %s22, 3
      %p82 = scmp.ne.s32.totalorder %s77, %s79
      %p83 = scmp.eq.s32.totalorder %s22, 0
      %p84 = por %p82, %p83
      %p85 = scmp.ne.s32.totalorder %s77, %s79
      %p86 = scmp.eq.s32.totalorder %s27, 3
      %p87 = por %p85, %p86
      %p88 = scmp.ne.s32.totalorder %s79, %s80
      %p89 = scmp.eq.s32.totalorder %s27, 0
      %p90 = por %p88, %p89
      %p91 = scmp.ne.s32.totalorder %s79, %s80
      %p92 = scmp.eq.s32.totalorder %s28, 3
      %p93 = por %p91, %p92
      %p95 = scmp.ne.s32.totalorder %s80, %s94
      %p96 = scmp.eq.s32.totalorder %s28, 0
      %p97 = por %p95, %p96
      %s99 = sadd.s32 %s98, 1
      %p102 = scmp.eq.s32.totalorder %s22, 3
      %p103 = scmp.ne.s32.totalorder %s98, %s100
      %p104 = scmp.eq.s32.totalorder %s22, 0
      %p105 = por %p103, %p104
      %p106 = scmp.ne.s32.totalorder %s98, %s100
      %p107 = scmp.eq.s32.totalorder %s27, 3
      %p108 = por %p106, %p107
      %p109 = scmp.ne.s32.totalorder %s100, %s101
      %p110 = scmp.eq.s32.totalorder %s27, 0
      %p111 = por %p109, %p110
      %p112 = scmp.ne.s32.totalorder %s100, %s101
      %p113 = scmp.eq.s32.totalorder %s28, 3
      %p114 = por %p112, %p113
      %p116 = scmp.ne.s32.totalorder %s101, %s115
      %p117 = scmp.eq.s32.totalorder %s28, 0
      %p118 = por %p116, %p117
      %s120 = sadd.s32 %s119, 1
      %p123 = scmp.eq.s32.totalorder %s22, 3
      %p124 = scmp.ne.s32.totalorder %s119, %s121
      %p125 = scmp.eq.s32.totalorder %s22, 0
      %p126 = por %p124, %p125
      %p127 = scmp.ne.s32.totalorder %s119, %s121
      %p128 = scmp.eq.s32.totalorder %s27, 3
      %p129 = por %p127, %p128
      %p130 = scmp.ne.s32.totalorder %s121, %s122
      %p131 = scmp.eq.s32.totalorder %s27, 0
      %p132 = por %p130, %p131
      %p133 = scmp.ne.s32.totalorder %s121, %s122
      %p134 = scmp.eq.s32.totalorder %s28, 3
      %p135 = por %p133, %p134
      %p137 = scmp.ne.s32.totalorder %s122, %s136
      %p138 = scmp.eq.s32.totalorder %s28, 0
      %p139 = por %p137, %p138
      %s141 = sadd.s32 %s140, 1
      %p144 = scmp.eq.s32.totalorder %s22, 3
      %p145 = scmp.ne.s32.totalorder %s140, %s142
      %p146 = scmp.eq.s32.totalorder %s22, 0
      %p147 = por %p145, %p146
      %p148 = scmp.ne.s32.totalorder %s140, %s142
      %p149 = scmp.eq.s32.totalorder %s27, 3
      %p150 = por %p148, %p149
      %p151 = scmp.ne.s32.totalorder %s142, %s143
      %p152 = scmp.eq.s32.totalorder %s27, 0
      %p153 = por %p151, %p152
      %p154 = scmp.ne.s32.totalorder %s142, %s143
      %p155 = scmp.eq.s32.totalorder %s28, 3
      %p156 = por %p154, %p155
      %p158 = scmp.ne.s32.totalorder %s143, %s157
      %p159 = scmp.eq.s32.totalorder %s28, 0
      %p160 = por %p158, %p159
      %s162 = sadd.s32 %s161, 1
      %p165 = scmp.eq.s32.totalorder %s22, 3
      %p166 = scmp.ne.s32.totalorder %s161, %s163
      %p167 = scmp.eq.s32.totalorder %s22, 0
      %p168 = por %p166, %p167
      %p169 = scmp.ne.s32.totalorder %s161, %s163
      %p170 = scmp.eq.s32.totalorder %s27, 3
      %p171 = por %p169, %p170
      %p172 = scmp.ne.s32.totalorder %s163, %s164
      %p173 = scmp.eq.s32.totalorder %s27, 0
      %p174 = por %p172, %p173
      %p175 = scmp.ne.s32.totalorder %s163, %s164
      %p176 = scmp.eq.s32.totalorder %s28, 3
      %p177 = por %p175, %p176
      %p179 = scmp.ne.s32.totalorder %s164, %s178
      %p180 = scmp.eq.s32.totalorder %s28, 0
      %p181 = por %p179, %p180
      %s183 = sadd.s32 %s182, 1
      %p186 = scmp.eq.s32.totalorder %s22, 3
      %p187 = scmp.ne.s32.totalorder %s182, %s184
      %p188 = scmp.eq.s32.totalorder %s22, 0
      %p189 = por %p187, %p188
      %p190 = scmp.ne.s32.totalorder %s182, %s184
      %p191 = scmp.eq.s32.totalorder %s27, 3
      %p192 = por %p190, %p191
      %p193 = scmp.ne.s32.totalorder %s184, %s185
      %p194 = scmp.eq.s32.totalorder %s27, 0
      %p195 = por %p193, %p194
      %p196 = scmp.ne.s32.totalorder %s184, %s185
      %p197 = scmp.eq.s32.totalorder %s28, 3
      %p198 = por %p196, %p197
      %p200 = scmp.ne.s32.totalorder %s185, %s199
      %p201 = scmp.eq.s32.totalorder %s28, 0
      %p202 = por %p200, %p201
      %s204 = sadd.s32 %s203, 1
      %p207 = scmp.eq.s32.totalorder %s22, 3
      %p208 = scmp.ne.s32.totalorder %s203, %s205
      %p209 = scmp.eq.s32.totalorder %s22, 0
      %p210 = por %p208, %p209
      %p211 = scmp.ne.s32.totalorder %s203, %s205
      %p212 = scmp.eq.s32.totalorder %s27, 3
      %p213 = por %p211, %p212
      %p214 = scmp.ne.s32.totalorder %s205, %s206
      %p215 = scmp.eq.s32.totalorder %s27, 0
      %p216 = por %p214, %p215
      %p217 = scmp.ne.s32.totalorder %s205, %s206
      %p218 = scmp.eq.s32.totalorder %s28, 3
      %p219 = por %p217, %p218
      %p221 = scmp.ne.s32.totalorder %s206, %s220
      %p222 = scmp.eq.s32.totalorder %s28, 0
      %p223 = por %p221, %p222
      %s225 = sadd.s32 %s224, 1
      %p228 = scmp.eq.s32.totalorder %s22, 3
      %p229 = scmp.ne.s32.totalorder %s224, %s226
      %p230 = scmp.eq.s32.totalorder %s22, 0
      %p231 = por %p229, %p230
      %p232 = scmp.ne.s32.totalorder %s224, %s226
      %p233 = scmp.eq.s32.totalorder %s27, 3
      %p234 = por %p232, %p233
      %p235 = scmp.ne.s32.totalorder %s226, %s227
      %p236 = scmp.eq.s32.totalorder %s27, 0
      %p237 = por %p235, %p236
      %p238 = scmp.ne.s32.totalorder %s226, %s227
      %p239 = scmp.eq.s32.totalorder %s28, 3
      %p240 = por %p238, %p239
      %p242 = scmp.ne.s32.totalorder %s227, %s241
      %p243 = scmp.eq.s32.totalorder %s28, 0
      %p244 = por %p242, %p243
      %s246 = sadd.s32 %s245, 1
      %p249 = scmp.eq.s32.totalorder %s22, 3
      %p250 = scmp.ne.s32.totalorder %s245, %s247
      %p251 = scmp.eq.s32.totalorder %s22, 0
      %p252 = por %p250, %p251
      %p253 = scmp.ne.s32.totalorder %s245, %s247
      %p254 = scmp.eq.s32.totalorder %s27, 3
      %p255 = por %p253, %p254
      %p256 = scmp.ne.s32.totalorder %s247, %s248
      %p257 = scmp.eq.s32.totalorder %s27, 0
      %p258 = por %p256, %p257
      %p259 = scmp.ne.s32.totalorder %s247, %s248
      %p260 = scmp.eq.s32.totalorder %s28, 3
      %p261 = por %p259, %p260
      %p263 = scmp.ne.s32.totalorder %s248, %s262
      %p264 = scmp.eq.s32.totalorder %s28, 0
      %p265 = por %p263, %p264
      %s267 = sadd.s32 %s266, 1
      %p270 = scmp.eq.s32.totalorder %s22, 3
      %p271 = scmp.ne.s32.totalorder %s266, %s268
      %p272 = scmp.eq.s32.totalorder %s22, 0
      %p273 = por %p271, %p272
      %p274 = scmp.ne.s32.totalorder %s266, %s268
      %p275 = scmp.eq.s32.totalorder %s27, 3
      %p276 = por %p274, %p275
      %p277 = scmp.ne.s32.totalorder %s268, %s269
      %p278 = scmp.eq.s32.totalorder %s27, 0
      %p279 = por %p277, %p278
      %p280 = scmp.ne.s32.totalorder %s268, %s269
      %p281 = scmp.eq.s32.totalorder %s28, 3
      %p282 = por %p280, %p281
      %p284 = scmp.ne.s32.totalorder %s269, %s283
      %p285 = scmp.eq.s32.totalorder %s28, 0
      %p286 = por %p284, %p285
      %s287 = ssub.s32 %s22, %s29
      %p288 = scmp.eq.s32.totalorder %s287, 0
      %s290 = sadd.s32 %s289, 1
      %s291 = scalar_select %p288, %s289, %s290
      %p294 = pneg %p288
      %p295 = scmp.eq.s32.totalorder %s22, 3
      %p296 = por %p294, %p295
      %p297 = scmp.ne.s32.totalorder %s289, %s292
      %p298 = scmp.eq.s32.totalorder %s22, 0
      %p299 = por %p297, %p298
      %p300 = scmp.ne.s32.totalorder %s289, %s292
      %p301 = scmp.eq.s32.totalorder %s27, 3
      %p302 = por %p300, %p301
      %p303 = scmp.ne.s32.totalorder %s292, %s293
      %p304 = scmp.eq.s32.totalorder %s27, 0
      %p305 = por %p303, %p304
      %p306 = scmp.ne.s32.totalorder %s292, %s293
      %p307 = scmp.eq.s32.totalorder %s28, 3
      %p308 = por %p306, %p307
      %p310 = scmp.ne.s32.totalorder %s293, %s309
      %p311 = scmp.eq.s32.totalorder %s28, 0
      %p312 = por %p310, %p311
      %p313 = scmp.le.s32.totalorder 1, %s22
      %p314 = scmp.lt.s32.totalorder %s22, 5
      %p315 = pnand %p313, %p314
      %p316 = pneg %p315
      // Predicated region
      $region9: #{_lsm_sequence_forward.1} parent=5 // pred_check
        _
      $region10: #{_lsm_sequence_forward.1} parent=5 // pred_check_branch
        %318 = sbr.rel (%p315) target = $region12
      $region11: #{_lsm_sequence_forward.1} parent=5 // pred_region
        %s319 = ssub.s32 %s22, 1
        // Predicated region
        $region13: #{_lsm_sequence_forward.1} parent=11 // pred_check
          %p320 = pneg %p69
        $region14: #{_lsm_sequence_forward.1} parent=11 // pred_check_branch
          %322 = sbr.rel (%p320) target = $region16
        $region15: #{_lsm_sequence_forward.1} parent=11 // pred_region
          _
        $region16: #{_lsm_sequence_forward.1} parent=11 // pred_fallthru
          _
        // Predicated region
        $region17: #{_lsm_sequence_forward.1} parent=11 // pred_check
          %p323 = pneg %p90
        $region18: #{_lsm_sequence_forward.1} parent=11 // pred_check_branch
          %325 = sbr.rel (%p323) target = $region20
        $region19: #{_lsm_sequence_forward.1} parent=11 // pred_region
          _
        $region20: #{_lsm_sequence_forward.1} parent=11 // pred_fallthru
          _
        // Predicated region
        $region21: #{_lsm_sequence_forward.1} parent=11 // pred_check
          %p326 = pneg %p111
        $region22: #{_lsm_sequence_forward.1} parent=11 // pred_check_branch
          %328 = sbr.rel (%p326) target = $region24
        $region23: #{_lsm_sequence_forward.1} parent=11 // pred_region
          %s330 = ssub.s32 2048, 2048
          %331 = vsyncadd [#allocation3], %s330
          %s332 = sshll.u32 [#allocation2], 4
          %s333 = int_to_ptr.vmem [resolvable:$true] %s332
          %338 = dma.hbm_to_vmem [thread:$0]  %s3, 2048, %s333, [#allocation3], 128, 128, 8
        $region24: #{_lsm_sequence_forward.1} parent=11 // pred_fallthru
          _
        // Predicated region
        $region25: #{_lsm_sequence_forward.1} parent=11 // pred_check
          %p339 = pneg %p132
        $region26: #{_lsm_sequence_forward.1} parent=11 // pred_check_branch
          %341 = sbr.rel (%p339) target = $region28
        $region27: #{_lsm_sequence_forward.1} parent=11 // pred_region
          %s343 = ssub.s32 2048, 2048
          %344 = vsyncadd [#allocation5], %s343
          %s345 = sshll.u32 [#allocation4], 4
          %s346 = int_to_ptr.vmem [resolvable:$true] %s345
          %351 = dma.hbm_to_vmem [thread:$0]  %s4, 2048, %s346, [#allocation5], 128, 128, 8
        $region28: #{_lsm_sequence_forward.1} parent=11 // pred_fallthru
          _
        // Predicated region
        $region29: #{_lsm_sequence_forward.1} parent=11 // pred_check
          %p352 = pneg %p153
        $region30: #{_lsm_sequence_forward.1} parent=11 // pred_check_branch
          %354 = sbr.rel (%p352) target = $region32
        $region31: #{_lsm_sequence_forward.1} parent=11 // pred_region
          %s356 = ssub.s32 2048, 2048
          %357 = vsyncadd [#allocation5], %s356
          %s358 = sshll.u32 [#allocation6], 4
          %s359 = int_to_ptr.vmem [resolvable:$true] %s358
          %364 = dma.hbm_to_vmem [thread:$0]  %s5, 2048, %s359, [#allocation5], 128, 128, 8
        $region32: #{_lsm_sequence_forward.1} parent=11 // pred_fallthru
          _
        // Predicated region
        $region33: #{_lsm_sequence_forward.1} parent=11 // pred_check
          %p365 = pneg %p174
        $region34: #{_lsm_sequence_forward.1} parent=11 // pred_check_branch
          %367 = sbr.rel (%p365) target = $region36
        $region35: #{_lsm_sequence_forward.1} parent=11 // pred_region
          %s369 = ssub.s32 2048, 2048
          %370 = vsyncadd [#allocation8], %s369
          %s371 = sshll.u32 [#allocation7], 4
          %s372 = int_to_ptr.vmem [resolvable:$true] %s371
          %377 = dma.hbm_to_vmem [thread:$0]  %s6, 2048, %s372, [#allocation8], 128, 128, 8
        $region36: #{_lsm_sequence_forward.1} parent=11 // pred_fallthru
          _
        // Predicated region
        $region37: #{_lsm_sequence_forward.1} parent=11 // pred_check
          %p378 = pneg %p195
        $region38: #{_lsm_sequence_forward.1} parent=11 // pred_check_branch
          %380 = sbr.rel (%p378) target = $region40
        $region39: #{_lsm_sequence_forward.1} parent=11 // pred_region
          _
        $region40: #{_lsm_sequence_forward.1} parent=11 // pred_fallthru
          _
        // Predicated region
        $region41: #{_lsm_sequence_forward.1} parent=11 // pred_check
          %p381 = pneg %p216
        $region42: #{_lsm_sequence_forward.1} parent=11 // pred_check_branch
          %383 = sbr.rel (%p381) target = $region44
        $region43: #{_lsm_sequence_forward.1} parent=11 // pred_region
          _
        $region44: #{_lsm_sequence_forward.1} parent=11 // pred_fallthru
          _
        // Predicated region
        $region45: #{_lsm_sequence_forward.1} parent=11 // pred_check
          %p384 = pneg %p237
        $region46: #{_lsm_sequence_forward.1} parent=11 // pred_check_branch
          %386 = sbr.rel (%p384) target = $region48
        $region47: #{_lsm_sequence_forward.1} parent=11 // pred_region
          %s388 = ssub.s32 2048, 2048
          %389 = vsyncadd [#allocation8], %s388
          %s390 = sshll.u32 [#allocation9], 4
          %s391 = int_to_ptr.vmem [resolvable:$true] %s390
          %396 = dma.hbm_to_vmem [thread:$0]  %s9, 2048, %s391, [#allocation8], 128, 128, 8
        $region48: #{_lsm_sequence_forward.1} parent=11 // pred_fallthru
          _
      $region12: #{_lsm_sequence_forward.1} parent=5 // pred_fallthru
        _
      %p397 = scmp.lt.s32.totalorder %s22, 4
      // Predicated region
      $region49: #{_lsm_sequence_forward.1} parent=5 // pred_check
        %p398 = pneg %p397
      $region50: #{_lsm_sequence_forward.1} parent=5 // pred_check_branch
        %400 = sbr.rel (%p398) target = $region52
      $region51: #{_lsm_sequence_forward.1} parent=5 // pred_region
        // Predicated region
        $region53: #{_lsm_sequence_forward.1} parent=51 // pred_check
          %p401 = pneg %p42
        $region54: #{_lsm_sequence_forward.1} parent=51 // pred_check_branch
          %403 = sbr.rel (%p401) target = $region56
        $region55: #{_lsm_sequence_forward.1} parent=51 // pred_region
          %p404 = scmp.lt.s32.totalorder %s22, 3
          %s405 = scalar_select %p404, %s22, 3
          %s406 = smul.addr %s405, 8
          %s407 = scalar_lea.vmem %s0, %s406
        $region56: #{_lsm_sequence_forward.1} parent=51 // pred_fallthru
          _
      $region52: #{_lsm_sequence_forward.1} parent=5 // pred_fallthru
        _
      %p408 = scmp.le.s32.totalorder 1, %s22
      %p409 = scmp.lt.s32.totalorder %s22, 5
      %p410 = pnand %p408, %p409
      %p411 = pneg %p410
      // Predicated region
      $region57: #{_lsm_sequence_forward.1} parent=5 // pred_check
        _
      $region58: #{_lsm_sequence_forward.1} parent=5 // pred_check_branch
        %413 = sbr.rel (%p410) target = $region60
      $region59: #{_lsm_sequence_forward.1} parent=5 // pred_region
        %s414 = ssub.s32 %s22, 1
        // Predicated region
        $region61: #{_lsm_sequence_forward.1} parent=59 // pred_check
          %p415 = pneg %p111
        $region62: #{_lsm_sequence_forward.1} parent=59 // pred_check_branch
          %417 = sbr.rel (%p415) target = $region64
        $region63: #{_lsm_sequence_forward.1} parent=59 // pred_region
          %418 = dma.done [#allocation3], 2048
        $region64: #{_lsm_sequence_forward.1} parent=59 // pred_fallthru
          _
        // Predicated region
        $region65: #{_lsm_sequence_forward.1} parent=59 // pred_check
          %p419 = pneg %p132
        $region66: #{_lsm_sequence_forward.1} parent=59 // pred_check_branch
          %421 = sbr.rel (%p419) target = $region68
        $region67: #{_lsm_sequence_forward.1} parent=59 // pred_region
          %422 = dma.done [#allocation5], 2048
        $region68: #{_lsm_sequence_forward.1} parent=59 // pred_fallthru
          _
        // Predicated region
        $region69: #{_lsm_sequence_forward.1} parent=59 // pred_check
          %p423 = pneg %p153
        $region70: #{_lsm_sequence_forward.1} parent=59 // pred_check_branch
          %425 = sbr.rel (%p423) target = $region72
        $region71: #{_lsm_sequence_forward.1} parent=59 // pred_region
          %426 = dma.done [#allocation5], 2048
        $region72: #{_lsm_sequence_forward.1} parent=59 // pred_fallthru
          _
        // Predicated region
        $region73: #{_lsm_sequence_forward.1} parent=59 // pred_check
          %p427 = pneg %p174
        $region74: #{_lsm_sequence_forward.1} parent=59 // pred_check_branch
          %429 = sbr.rel (%p427) target = $region76
        $region75: #{_lsm_sequence_forward.1} parent=59 // pred_region
          %430 = dma.done [#allocation8], 2048
        $region76: #{_lsm_sequence_forward.1} parent=59 // pred_fallthru
          _
        // Predicated region
        $region77: #{_lsm_sequence_forward.1} parent=59 // pred_check
          %p431 = pneg %p237
        $region78: #{_lsm_sequence_forward.1} parent=59 // pred_check_branch
          %433 = sbr.rel (%p431) target = $region80
        $region79: #{_lsm_sequence_forward.1} parent=59 // pred_region
          %434 = dma.done [#allocation8], 2048
        $region80: #{_lsm_sequence_forward.1} parent=59 // pred_fallthru
          _
        %p435 = scmp.lt.s32.totalorder %s27, 3
        %s436 = scalar_select %p435, %s27, 3
        %s437 = smul.addr %s436, 8
        %s438 = scalar_lea.vmem %s0, %s437
        %p439 = pneg %p48
        %p440 = pneg %p45
        %p441 = pneg %p69
        %p442 = pneg %p66
        %p443 = pneg %p90
        %p444 = pneg %p87
        %p445 = pneg %p111
        %p446 = pneg %p108
        %p447 = pneg %p132
        %p448 = pneg %p129
        %p449 = pneg %p153
        %p450 = pneg %p150
        %p451 = pneg %p174
        %p452 = pneg %p171
        %p453 = pneg %p195
        %p454 = pneg %p192
        %p455 = pneg %p216
        %p456 = pneg %p213
        %p457 = pneg %p237
        %p458 = pneg %p234
        %p459 = pneg %p258
        %p460 = pneg %p255
        %p461 = pneg %p279
        %p462 = pneg %p276
        %p463 = pneg %p305
        %p464 = pneg %p302
        %p465 = scmp.lt.s32.totalorder %s27, 3
        %s466 = scalar_select %p465, %s27, 3
        %s467 = smul.addr %s466, 8
        %s468 = scalar_lea.vmem %s12, %s467
        %p469 = scmp.lt.s32.totalorder %s27, 3
        %s470 = scalar_select %p469, %s27, 3
        %s471 = smul.addr %s470, 8
        %s472 = scalar_lea.vmem %s0, %s471
        %p473 = scmp.lt.s32.totalorder %s27, 3
        %s474 = scalar_select %p473, %s27, 3
        %s475 = smul.addr %s474, 8
        %s476 = scalar_lea.vmem %s12, %s475
        %p477 = scmp.eq.s32.totalorder %s27, 0
        // Predicated region
        $region81: #{_lsm_sequence_forward.1} parent=59 // pred_check
          %p478 = pneg %p477
        $region82: #{_lsm_sequence_forward.1} parent=59 // pred_check_branch
          %480 = sbr.rel (%p478) target = $region84
        $region83: #{_lsm_sequence_forward.1} parent=59 // pred_region
          %v481 = vld [vmem:[%s1] sm:$0xff]
          %482 = vst [vmem:[%s10] sm:$0xff] %v481
          %v483 = vld [vmem:[%s2] sm:$0xff]
          %484 = vst [vmem:[%s11] sm:$0xff] %v483
        $region84: #{_lsm_sequence_forward.1} parent=59 // pred_fallthru
          _
        %v485 = vld [vmem:[%s472] sm:$0xff]
        %v486 = vld [vmem:[#allocation2] sm:$0xff]
        %v487 = vld [vmem:[#allocation2 + $0x8] sm:$0xff]
        %v488 = vld [vmem:[#allocation2 + $0x10] sm:$0xff]
        %v489 = vld [vmem:[#allocation2 + $0x18] sm:$0xff]
        %v490 = vld [vmem:[#allocation2 + $0x20] sm:$0xff]
        %v491 = vld [vmem:[#allocation2 + $0x28] sm:$0xff]
        %v492 = vld [vmem:[#allocation2 + $0x30] sm:$0xff]
        %v493 = vld [vmem:[#allocation2 + $0x38] sm:$0xff]
        %v494 = vld [vmem:[#allocation2 + $0x40] sm:$0xff]
        %v495 = vld [vmem:[#allocation2 + $0x48] sm:$0xff]
        %v496 = vld [vmem:[#allocation2 + $0x50] sm:$0xff]
        %v497 = vld [vmem:[#allocation2 + $0x58] sm:$0xff]
        %v498 = vld [vmem:[#allocation2 + $0x60] sm:$0xff]
        %v499 = vld [vmem:[#allocation2 + $0x68] sm:$0xff]
        %v500 = vld [vmem:[#allocation2 + $0x70] sm:$0xff]
        %v501 = vld [vmem:[#allocation2 + $0x78] sm:$0xff]
        %v502 = vld [vmem:[%s10] sm:$0xff]
        %v503 = vld [vmem:[#allocation6] sm:$0xff]
        %v504 = vld [vmem:[#allocation6 + $0x8] sm:$0xff]
        %v505 = vld [vmem:[#allocation6 + $0x10] sm:$0xff]
        %v506 = vld [vmem:[#allocation6 + $0x18] sm:$0xff]
        %v507 = vld [vmem:[#allocation6 + $0x20] sm:$0xff]
        %v508 = vld [vmem:[#allocation6 + $0x28] sm:$0xff]
        %v509 = vld [vmem:[#allocation6 + $0x30] sm:$0xff]
        %v510 = vld [vmem:[#allocation6 + $0x38] sm:$0xff]
        %v511 = vld [vmem:[#allocation6 + $0x40] sm:$0xff]
        %v512 = vld [vmem:[#allocation6 + $0x48] sm:$0xff]
        %v513 = vld [vmem:[#allocation6 + $0x50] sm:$0xff]
        %v514 = vld [vmem:[#allocation6 + $0x58] sm:$0xff]
        %v515 = vld [vmem:[#allocation6 + $0x60] sm:$0xff]
        %v516 = vld [vmem:[#allocation6 + $0x68] sm:$0xff]
        %v517 = vld [vmem:[#allocation6 + $0x70] sm:$0xff]
        %v518 = vld [vmem:[#allocation6 + $0x78] sm:$0xff]
        %519 = vmatprep.subr.mxu0 0.0
        %v520 = vand.u32 %v503, 4294901760
        %521 = vmatpush1.msra.mxu0 %v520
        %522 = vmatprep.subr.mxu0 0.0
        %v523 = vand.u32 %v504, 4294901760
        %524 = vmatpush1.msra.mxu0 %v523
        %525 = vmatprep.subr.mxu0 0.0
        %v526 = vand.u32 %v505, 4294901760
        %527 = vmatpush1.msra.mxu0 %v526
        %528 = vmatprep.subr.mxu0 0.0
        %v529 = vand.u32 %v506, 4294901760
        %530 = vmatpush1.msra.mxu0 %v529
        %531 = vmatprep.subr.mxu0 0.0
        %v532 = vand.u32 %v507, 4294901760
        %533 = vmatpush1.msra.mxu0 %v532
        %534 = vmatprep.subr.mxu0 0.0
        %v535 = vand.u32 %v508, 4294901760
        %536 = vmatpush1.msra.mxu0 %v535
        %537 = vmatprep.subr.mxu0 0.0
        %v538 = vand.u32 %v509, 4294901760
        %539 = vmatpush1.msra.mxu0 %v538
        %540 = vmatprep.subr.mxu0 0.0
        %v541 = vand.u32 %v510, 4294901760
        %542 = vmatpush1.msra.mxu0 %v541
        %543 = vmatprep.subr.mxu0 0.0
        %v544 = vand.u32 %v511, 4294901760
        %545 = vmatpush1.msra.mxu0 %v544
        %546 = vmatprep.subr.mxu0 0.0
        %v547 = vand.u32 %v512, 4294901760
        %548 = vmatpush1.msra.mxu0 %v547
        %549 = vmatprep.subr.mxu0 0.0
        %v550 = vand.u32 %v513, 4294901760
        %551 = vmatpush1.msra.mxu0 %v550
        %552 = vmatprep.subr.mxu0 0.0
        %v553 = vand.u32 %v514, 4294901760
        %554 = vmatpush1.msra.mxu0 %v553
        %555 = vmatprep.subr.mxu0 0.0
        %v556 = vand.u32 %v515, 4294901760
        %557 = vmatpush1.msra.mxu0 %v556
        %558 = vmatprep.subr.mxu0 0.0
        %v559 = vand.u32 %v516, 4294901760
        %560 = vmatpush1.msra.mxu0 %v559
        %561 = vmatprep.subr.mxu0 0.0
        %v562 = vand.u32 %v517, 4294901760
        %563 = vmatpush1.msra.mxu0 %v562
        %564 = vmatprep.subr.mxu0 0.0
        %v565 = vand.u32 %v518, 4294901760
        %566 = vmatpush1.msra.mxu0 %v565
        %567 = vmatprep.subr.mxu0 0.0
        %568 = vmatpush1.msra.mxu0 0.0
        %569 = vmatprep.subr.mxu0 0.0
        %570 = vmatpush1.msra.mxu0 0.0
        %571 = vmatprep.subr.mxu0 0.0
        %572 = vmatpush1.msra.mxu0 0.0
        %573 = vmatprep.subr.mxu0 0.0
        %574 = vmatpush1.msra.mxu0 0.0
        %575 = vmatprep.subr.mxu0 0.0
        %576 = vmatpush1.msra.mxu0 0.0
        %577 = vmatprep.subr.mxu0 0.0
        %578 = vmatpush1.msra.mxu0 0.0
        %579 = vmatprep.subr.mxu0 0.0
        %580 = vmatpush1.msra.mxu0 0.0
        %581 = vmatprep.subr.mxu0 0.0
        %582 = vmatpush1.msra.mxu0 0.0
        %583 = vmatprep.subr.mxu0 0.0
        %584 = vmatpush1.msra.mxu0 0.0
        %585 = vmatprep.subr.mxu0 0.0
        %586 = vmatpush1.msra.mxu0 0.0
        %587 = vmatprep.subr.mxu0 0.0
        %588 = vmatpush1.msra.mxu0 0.0
        %589 = vmatprep.subr.mxu0 0.0
        %590 = vmatpush1.msra.mxu0 0.0
        %591 = vmatprep.subr.mxu0 0.0
        %592 = vmatpush1.msra.mxu0 0.0
        %593 = vmatprep.subr.mxu0 0.0
        %594 = vmatpush1.msra.mxu0 0.0
        %595 = vmatprep.subr.mxu0 0.0
        %596 = vmatpush1.msra.mxu0 0.0
        %597 = vmatprep.subr.mxu0 0.0
        %598 = vmatpush1.msra.mxu0 0.0
        %599 = vmatprep.mubr.f32.mxu0 0.0
        %v600 = vand.u32 %v502, 4294901760
        %v601 = vsub.f32 %v502, %v600
        %v602 = vand.u32 %v601, 4294901760
        %v603 = vsub.f32 %v601, %v602
        %v604 = vand.u32 %v603, 4294901760
        %605 = vmatmul.mubr.f32.gmra.mrb[0].mxu0 %v604
        %v606 = vpop.f32.mrb[0].mxu0
        %v607 = vadd.f32 0.0, %v606
        %v608 = vpop.f32.mrb[0].mxu0
        %609 = vdwg.mxu0
        %610 = vmatprep.subr.mxu0 0.0
        %v611 = vand.u32 %v503, 4294901760
        %v612 = vsub.f32 %v503, %v611
        %v613 = vand.u32 %v612, 4294901760
        %v614 = vsub.f32 %v612, %v613
        %v615 = vand.u32 %v614, 4294901760
        %616 = vmatpush1.msra.mxu0 %v615
        %617 = vmatprep.subr.mxu0 0.0
        %v618 = vand.u32 %v504, 4294901760
        %v619 = vsub.f32 %v504, %v618
        %v620 = vand.u32 %v619, 4294901760
        %v621 = vsub.f32 %v619, %v620
        %v622 = vand.u32 %v621, 4294901760
        %623 = vmatpush1.msra.mxu0 %v622
        %624 = vmatprep.subr.mxu0 0.0
        %v625 = vand.u32 %v505, 4294901760
        %v626 = vsub.f32 %v505, %v625
        %v627 = vand.u32 %v626, 4294901760
        %v628 = vsub.f32 %v626, %v627
        %v629 = vand.u32 %v628, 4294901760
        %630 = vmatpush1.msra.mxu0 %v629
        %631 = vmatprep.subr.mxu0 0.0
        %v632 = vand.u32 %v506, 4294901760
        %v633 = vsub.f32 %v506, %v632
        %v634 = vand.u32 %v633, 4294901760
        %v635 = vsub.f32 %v633, %v634
        %v636 = vand.u32 %v635, 4294901760
        %637 = vmatpush1.msra.mxu0 %v636
        %638 = vmatprep.subr.mxu0 0.0
        %v639 = vand.u32 %v507, 4294901760
        %v640 = vsub.f32 %v507, %v639
        %v641 = vand.u32 %v640, 4294901760
        %v642 = vsub.f32 %v640, %v641
        %v643 = vand.u32 %v642, 4294901760
        %644 = vmatpush1.msra.mxu0 %v643
        %645 = vmatprep.subr.mxu0 0.0
        %v646 = vand.u32 %v508, 4294901760
        %v647 = vsub.f32 %v508, %v646
        %v648 = vand.u32 %v647, 4294901760
        %v649 = vsub.f32 %v647, %v648
        %v650 = vand.u32 %v649, 4294901760
        %651 = vmatpush1.msra.mxu0 %v650
        %652 = vmatprep.subr.mxu0 0.0
        %v653 = vand.u32 %v509, 4294901760
        %v654 = vsub.f32 %v509, %v653
        %v655 = vand.u32 %v654, 4294901760
        %v656 = vsub.f32 %v654, %v655
        %v657 = vand.u32 %v656, 4294901760
        %658 = vmatpush1.msra.mxu0 %v657
        %659 = vmatprep.subr.mxu0 0.0
        %v660 = vand.u32 %v510, 4294901760
        %v661 = vsub.f32 %v510, %v660
        %v662 = vand.u32 %v661, 4294901760
        %v663 = vsub.f32 %v661, %v662
        %v664 = vand.u32 %v663, 4294901760
        %665 = vmatpush1.msra.mxu0 %v664
        %666 = vmatprep.subr.mxu0 0.0
        %v667 = vand.u32 %v511, 4294901760
        %v668 = vsub.f32 %v511, %v667
        %v669 = vand.u32 %v668, 4294901760
        %v670 = vsub.f32 %v668, %v669
        %v671 = vand.u32 %v670, 4294901760
        %672 = vmatpush1.msra.mxu0 %v671
        %673 = vmatprep.subr.mxu0 0.0
        %v674 = vand.u32 %v512, 4294901760
        %v675 = vsub.f32 %v512, %v674
        %v676 = vand.u32 %v675, 4294901760
        %v677 = vsub.f32 %v675, %v676
        %v678 = vand.u32 %v677, 4294901760
        %679 = vmatpush1.msra.mxu0 %v678
        %680 = vmatprep.subr.mxu0 0.0
        %v681 = vand.u32 %v513, 4294901760
        %v682 = vsub.f32 %v513, %v681
        %v683 = vand.u32 %v682, 4294901760
        %v684 = vsub.f32 %v682, %v683
        %v685 = vand.u32 %v684, 4294901760
        %686 = vmatpush1.msra.mxu0 %v685
        %687 = vmatprep.subr.mxu0 0.0
        %v688 = vand.u32 %v514, 4294901760
        %v689 = vsub.f32 %v514, %v688
        %v690 = vand.u32 %v689, 4294901760
        %v691 = vsub.f32 %v689, %v690
        %v692 = vand.u32 %v691, 4294901760
        %693 = vmatpush1.msra.mxu0 %v692
        %694 = vmatprep.subr.mxu0 0.0
        %v695 = vand.u32 %v515, 4294901760
        %v696 = vsub.f32 %v515, %v695
        %v697 = vand.u32 %v696, 4294901760
        %v698 = vsub.f32 %v696, %v697
        %v699 = vand.u32 %v698, 4294901760
        %700 = vmatpush1.msra.mxu0 %v699
        %701 = vmatprep.subr.mxu0 0.0
        %v702 = vand.u32 %v516, 4294901760
        %v703 = vsub.f32 %v516, %v702
        %v704 = vand.u32 %v703, 4294901760
        %v705 = vsub.f32 %v703, %v704
        %v706 = vand.u32 %v705, 4294901760
        %707 = vmatpush1.msra.mxu0 %v706
        %708 = vmatprep.subr.mxu0 0.0
        %v709 = vand.u32 %v517, 4294901760
        %v710 = vsub.f32 %v517, %v709
        %v711 = vand.u32 %v710, 4294901760
        %v712 = vsub.f32 %v710, %v711
        %v713 = vand.u32 %v712, 4294901760
        %714 = vmatpush1.msra.mxu0 %v713
        %715 = vmatprep.subr.mxu0 0.0
        %v716 = vand.u32 %v518, 4294901760
        %v717 = vsub.f32 %v518, %v716
        %v718 = vand.u32 %v717, 4294901760
        %v719 = vsub.f32 %v717, %v718
        %v720 = vand.u32 %v719, 4294901760
        %721 = vmatpush1.msra.mxu0 %v720
        %722 = vmatprep.subr.mxu0 0.0
        %723 = vmatpush1.msra.mxu0 0.0
        %724 = vmatprep.subr.mxu0 0.0
        %725 = vmatpush1.msra.mxu0 0.0
        %726 = vmatprep.subr.mxu0 0.0
        %727 = vmatpush1.msra.mxu0 0.0
        %728 = vmatprep.subr.mxu0 0.0
        %729 = vmatpush1.msra.mxu0 0.0
        %730 = vmatprep.subr.mxu0 0.0
        %731 = vmatpush1.msra.mxu0 0.0
        %732 = vmatprep.subr.mxu0 0.0
        %733 = vmatpush1.msra.mxu0 0.0
        %734 = vmatprep.subr.mxu0 0.0
        %735 = vmatpush1.msra.mxu0 0.0
        %736 = vmatprep.subr.mxu0 0.0
        %737 = vmatpush1.msra.mxu0 0.0
        %738 = vmatprep.subr.mxu0 0.0
        %739 = vmatpush1.msra.mxu0 0.0
        %740 = vmatprep.subr.mxu0 0.0
        %741 = vmatpush1.msra.mxu0 0.0
        %742 = vmatprep.subr.mxu0 0.0
        %743 = vmatpush1.msra.mxu0 0.0
        %744 = vmatprep.subr.mxu0 0.0
        %745 = vmatpush1.msra.mxu0 0.0
        %746 = vmatprep.subr.mxu0 0.0
        %747 = vmatpush1.msra.mxu0 0.0
        %748 = vmatprep.subr.mxu0 0.0
        %749 = vmatpush1.msra.mxu0 0.0
        %750 = vmatprep.subr.mxu0 0.0
        %751 = vmatpush1.msra.mxu0 0.0
        %752 = vmatprep.subr.mxu0 0.0
        %753 = vmatpush1.msra.mxu0 0.0
        %754 = vmatprep.mubr.f32.mxu0 0.0
        %v755 = vand.u32 %v502, 4294901760
        %756 = vmatmul.mubr.f32.gmra.mrb[0].mxu0 %v755
        %v757 = vpop.f32.mrb[0].mxu0
        %v758 = vadd.f32 %v607, %v757
        %v759 = vpop.f32.mrb[0].mxu0
        %760 = vdwg.mxu0
        %761 = vmatprep.subr.mxu0 0.0
        %v762 = vand.u32 %v503, 4294901760
        %v763 = vsub.f32 %v503, %v762
        %764 = vmatpush1.msra.mxu0 %v763
        %765 = vmatprep.subr.mxu0 0.0
        %v766 = vand.u32 %v504, 4294901760
        %v767 = vsub.f32 %v504, %v766
        %768 = vmatpush1.msra.mxu0 %v767
        %769 = vmatprep.subr.mxu0 0.0
        %v770 = vand.u32 %v505, 4294901760
        %v771 = vsub.f32 %v505, %v770
        %772 = vmatpush1.msra.mxu0 %v771
        %773 = vmatprep.subr.mxu0 0.0
        %v774 = vand.u32 %v506, 4294901760
        %v775 = vsub.f32 %v506, %v774
        %776 = vmatpush1.msra.mxu0 %v775
        %777 = vmatprep.subr.mxu0 0.0
        %v778 = vand.u32 %v507, 4294901760
        %v779 = vsub.f32 %v507, %v778
        %780 = vmatpush1.msra.mxu0 %v779
        %781 = vmatprep.subr.mxu0 0.0
        %v782 = vand.u32 %v508, 4294901760
        %v783 = vsub.f32 %v508, %v782
        %784 = vmatpush1.msra.mxu0 %v783
        %785 = vmatprep.subr.mxu0 0.0
        %v786 = vand.u32 %v509, 4294901760
        %v787 = vsub.f32 %v509, %v786
        %788 = vmatpush1.msra.mxu0 %v787
        %789 = vmatprep.subr.mxu0 0.0
        %v790 = vand.u32 %v510, 4294901760
        %v791 = vsub.f32 %v510, %v790
        %792 = vmatpush1.msra.mxu0 %v791
        %793 = vmatprep.subr.mxu0 0.0
        %v794 = vand.u32 %v511, 4294901760
        %v795 = vsub.f32 %v511, %v794
        %796 = vmatpush1.msra.mxu0 %v795
        %797 = vmatprep.subr.mxu0 0.0
        %v798 = vand.u32 %v512, 4294901760
        %v799 = vsub.f32 %v512, %v798
        %800 = vmatpush1.msra.mxu0 %v799
        %801 = vmatprep.subr.mxu0 0.0
        %v802 = vand.u32 %v513, 4294901760
        %v803 = vsub.f32 %v513, %v802
        %804 = vmatpush1.msra.mxu0 %v803
        %805 = vmatprep.subr.mxu0 0.0
        %v806 = vand.u32 %v514, 4294901760
        %v807 = vsub.f32 %v514, %v806
        %808 = vmatpush1.msra.mxu0 %v807
        %809 = vmatprep.subr.mxu0 0.0
        %v810 = vand.u32 %v515, 4294901760
        %v811 = vsub.f32 %v515, %v810
        %812 = vmatpush1.msra.mxu0 %v811
        %813 = vmatprep.subr.mxu0 0.0
        %v814 = vand.u32 %v516, 4294901760
        %v815 = vsub.f32 %v516, %v814
        %816 = vmatpush1.msra.mxu0 %v815
        %817 = vmatprep.subr.mxu0 0.0
        %v818 = vand.u32 %v517, 4294901760
        %v819 = vsub.f32 %v517, %v818
        %820 = vmatpush1.msra.mxu0 %v819
        %821 = vmatprep.subr.mxu0 0.0
        %v822 = vand.u32 %v518, 4294901760
        %v823 = vsub.f32 %v518, %v822
        %824 = vmatpush1.msra.mxu0 %v823
        %825 = vmatprep.subr.mxu0 0.0
        %826 = vmatpush1.msra.mxu0 0.0
        %827 = vmatprep.subr.mxu0 0.0
        %828 = vmatpush1.msra.mxu0 0.0
        %829 = vmatprep.subr.mxu0 0.0
        %830 = vmatpush1.msra.mxu0 0.0
        %831 = vmatprep.subr.mxu0 0.0
        %832 = vmatpush1.msra.mxu0 0.0
        %833 = vmatprep.subr.mxu0 0.0
        %834 = vmatpush1.msra.mxu0 0.0
        %835 = vmatprep.subr.mxu0 0.0
        %836 = vmatpush1.msra.mxu0 0.0
        %837 = vmatprep.subr.mxu0 0.0
        %838 = vmatpush1.msra.mxu0 0.0
        %839 = vmatprep.subr.mxu0 0.0
        %840 = vmatpush1.msra.mxu0 0.0
        %841 = vmatprep.subr.mxu0 0.0
        %842 = vmatpush1.msra.mxu0 0.0
        %843 = vmatprep.subr.mxu0 0.0
        %844 = vmatpush1.msra.mxu0 0.0
        %845 = vmatprep.subr.mxu0 0.0
        %846 = vmatpush1.msra.mxu0 0.0
        %847 = vmatprep.subr.mxu0 0.0
        %848 = vmatpush1.msra.mxu0 0.0
        %849 = vmatprep.subr.mxu0 0.0
        %850 = vmatpush1.msra.mxu0 0.0
        %851 = vmatprep.subr.mxu0 0.0
        %852 = vmatpush1.msra.mxu0 0.0
        %853 = vmatprep.subr.mxu0 0.0
        %854 = vmatpush1.msra.mxu0 0.0
        %855 = vmatprep.subr.mxu0 0.0
        %856 = vmatpush1.msra.mxu0 0.0
        %857 = vmatprep.mubr.f32.mxu0 0.0
        %v858 = vand.u32 %v502, 4294901760
        %v859 = vsub.f32 %v502, %v858
        %860 = vmatmul.mubr.f32.gmra.mrb[0].mxu0 %v859
        %v861 = vpop.f32.mrb[0].mxu0
        %v862 = vadd.f32 %v758, %v861
        %v863 = vpop.f32.mrb[0].mxu0
        %864 = vdwg.mxu0
        %865 = vmatprep.subr.mxu0 0.0
        %v866 = vand.u32 %v503, 4294901760
        %867 = vmatpush1.msra.mxu0 %v866
        %868 = vmatprep.subr.mxu0 0.0
        %v869 = vand.u32 %v504, 4294901760
        %870 = vmatpush1.msra.mxu0 %v869
        %871 = vmatprep.subr.mxu0 0.0
        %v872 = vand.u32 %v505, 4294901760
        %873 = vmatpush1.msra.mxu0 %v872
        %874 = vmatprep.subr.mxu0 0.0
        %v875 = vand.u32 %v506, 4294901760
        %876 = vmatpush1.msra.mxu0 %v875
        %877 = vmatprep.subr.mxu0 0.0
        %v878 = vand.u32 %v507, 4294901760
        %879 = vmatpush1.msra.mxu0 %v878
        %880 = vmatprep.subr.mxu0 0.0
        %v881 = vand.u32 %v508, 4294901760
        %882 = vmatpush1.msra.mxu0 %v881
        %883 = vmatprep.subr.mxu0 0.0
        %v884 = vand.u32 %v509, 4294901760
        %885 = vmatpush1.msra.mxu0 %v884
        %886 = vmatprep.subr.mxu0 0.0
        %v887 = vand.u32 %v510, 4294901760
        %888 = vmatpush1.msra.mxu0 %v887
        %889 = vmatprep.subr.mxu0 0.0
        %v890 = vand.u32 %v511, 4294901760
        %891 = vmatpush1.msra.mxu0 %v890
        %892 = vmatprep.subr.mxu0 0.0
        %v893 = vand.u32 %v512, 4294901760
        %894 = vmatpush1.msra.mxu0 %v893
        %895 = vmatprep.subr.mxu0 0.0
        %v896 = vand.u32 %v513, 4294901760
        %897 = vmatpush1.msra.mxu0 %v896
        %898 = vmatprep.subr.mxu0 0.0
        %v899 = vand.u32 %v514, 4294901760
        %900 = vmatpush1.msra.mxu0 %v899
        %901 = vmatprep.subr.mxu0 0.0
        %v902 = vand.u32 %v515, 4294901760
        %903 = vmatpush1.msra.mxu0 %v902
        %904 = vmatprep.subr.mxu0 0.0
        %v905 = vand.u32 %v516, 4294901760
        %906 = vmatpush1.msra.mxu0 %v905
        %907 = vmatprep.subr.mxu0 0.0
        %v908 = vand.u32 %v517, 4294901760
        %909 = vmatpush1.msra.mxu0 %v908
        %910 = vmatprep.subr.mxu0 0.0
        %v911 = vand.u32 %v518, 4294901760
        %912 = vmatpush1.msra.mxu0 %v911
        %913 = vmatprep.subr.mxu0 0.0
        %914 = vmatpush1.msra.mxu0 0.0
        %915 = vmatprep.subr.mxu0 0.0
        %916 = vmatpush1.msra.mxu0 0.0
        %917 = vmatprep.subr.mxu0 0.0
        %918 = vmatpush1.msra.mxu0 0.0
        %919 = vmatprep.subr.mxu0 0.0
        %920 = vmatpush1.msra.mxu0 0.0
        %921 = vmatprep.subr.mxu0 0.0
        %922 = vmatpush1.msra.mxu0 0.0
        %923 = vmatprep.subr.mxu0 0.0
        %924 = vmatpush1.msra.mxu0 0.0
        %925 = vmatprep.subr.mxu0 0.0
        %926 = vmatpush1.msra.mxu0 0.0
        %927 = vmatprep.subr.mxu0 0.0
        %928 = vmatpush1.msra.mxu0 0.0
        %929 = vmatprep.subr.mxu0 0.0
        %930 = vmatpush1.msra.mxu0 0.0
        %931 = vmatprep.subr.mxu0 0.0
        %932 = vmatpush1.msra.mxu0 0.0
        %933 = vmatprep.subr.mxu0 0.0
        %934 = vmatpush1.msra.mxu0 0.0
        %935 = vmatprep.subr.mxu0 0.0
        %936 = vmatpush1.msra.mxu0 0.0
        %937 = vmatprep.subr.mxu0 0.0
        %938 = vmatpush1.msra.mxu0 0.0
        %939 = vmatprep.subr.mxu0 0.0
        %940 = vmatpush1.msra.mxu0 0.0
        %941 = vmatprep.subr.mxu0 0.0
        %942 = vmatpush1.msra.mxu0 0.0
        %943 = vmatprep.subr.mxu0 0.0
        %944 = vmatpush1.msra.mxu0 0.0
        %945 = vmatprep.mubr.f32.mxu0 0.0
        %v946 = vand.u32 %v502, 4294901760
        %v947 = vsub.f32 %v502, %v946
        %v948 = vand.u32 %v947, 4294901760
        %949 = vmatmul.mubr.f32.gmra.mrb[0].mxu0 %v948
        %v950 = vpop.f32.mrb[0].mxu0
        %v951 = vadd.f32 %v862, %v950
        %v952 = vpop.f32.mrb[0].mxu0
        %953 = vdwg.mxu0
        %954 = vmatprep.subr.mxu0 0.0
        %v955 = vand.u32 %v503, 4294901760
        %v956 = vsub.f32 %v503, %v955
        %v957 = vand.u32 %v956, 4294901760
        %958 = vmatpush1.msra.mxu0 %v957
        %959 = vmatprep.subr.mxu0 0.0
        %v960 = vand.u32 %v504, 4294901760
        %v961 = vsub.f32 %v504, %v960
        %v962 = vand.u32 %v961, 4294901760
        %963 = vmatpush1.msra.mxu0 %v962
        %964 = vmatprep.subr.mxu0 0.0
        %v965 = vand.u32 %v505, 4294901760
        %v966 = vsub.f32 %v505, %v965
        %v967 = vand.u32 %v966, 4294901760
        %968 = vmatpush1.msra.mxu0 %v967
        %969 = vmatprep.subr.mxu0 0.0
        %v970 = vand.u32 %v506, 4294901760
        %v971 = vsub.f32 %v506, %v970
        %v972 = vand.u32 %v971, 4294901760
        %973 = vmatpush1.msra.mxu0 %v972
        %974 = vmatprep.subr.mxu0 0.0
        %v975 = vand.u32 %v507, 4294901760
        %v976 = vsub.f32 %v507, %v975
        %v977 = vand.u32 %v976, 4294901760
        %978 = vmatpush1.msra.mxu0 %v977
        %979 = vmatprep.subr.mxu0 0.0
        %v980 = vand.u32 %v508, 4294901760
        %v981 = vsub.f32 %v508, %v980
        %v982 = vand.u32 %v981, 4294901760
        %983 = vmatpush1.msra.mxu0 %v982
        %984 = vmatprep.subr.mxu0 0.0
        %v985 = vand.u32 %v509, 4294901760
        %v986 = vsub.f32 %v509, %v985
        %v987 = vand.u32 %v986, 4294901760
        %988 = vmatpush1.msra.mxu0 %v987
        %989 = vmatprep.subr.mxu0 0.0
        %v990 = vand.u32 %v510, 4294901760
        %v991 = vsub.f32 %v510, %v990
        %v992 = vand.u32 %v991, 4294901760
        %993 = vmatpush1.msra.mxu0 %v992
        %994 = vmatprep.subr.mxu0 0.0
        %v995 = vand.u32 %v511, 4294901760
        %v996 = vsub.f32 %v511, %v995
        %v997 = vand.u32 %v996, 4294901760
        %998 = vmatpush1.msra.mxu0 %v997
        %999 = vmatprep.subr.mxu0 0.0
        %v1000 = vand.u32 %v512, 4294901760
        %v1001 = vsub.f32 %v512, %v1000
        %v1002 = vand.u32 %v1001, 4294901760
        %1003 = vmatpush1.msra.mxu0 %v1002
        %1004 = vmatprep.subr.mxu0 0.0
        %v1005 = vand.u32 %v513, 4294901760
        %v1006 = vsub.f32 %v513, %v1005
        %v1007 = vand.u32 %v1006, 4294901760
        %1008 = vmatpush1.msra.mxu0 %v1007
        %1009 = vmatprep.subr.mxu0 0.0
        %v1010 = vand.u32 %v514, 4294901760
        %v1011 = vsub.f32 %v514, %v1010
        %v1012 = vand.u32 %v1011, 4294901760
        %1013 = vmatpush1.msra.mxu0 %v1012
        %1014 = vmatprep.subr.mxu0 0.0
        %v1015 = vand.u32 %v515, 4294901760
        %v1016 = vsub.f32 %v515, %v1015
        %v1017 = vand.u32 %v1016, 4294901760
        %1018 = vmatpush1.msra.mxu0 %v1017
        %1019 = vmatprep.subr.mxu0 0.0
        %v1020 = vand.u32 %v516, 4294901760
        %v1021 = vsub.f32 %v516, %v1020
        %v1022 = vand.u32 %v1021, 4294901760
        %1023 = vmatpush1.msra.mxu0 %v1022
        %1024 = vmatprep.subr.mxu0 0.0
        %v1025 = vand.u32 %v517, 4294901760
        %v1026 = vsub.f32 %v517, %v1025
        %v1027 = vand.u32 %v1026, 4294901760
        %1028 = vmatpush1.msra.mxu0 %v1027
        %1029 = vmatprep.subr.mxu0 0.0
        %v1030 = vand.u32 %v518, 4294901760
        %v1031 = vsub.f32 %v518, %v1030
        %v1032 = vand.u32 %v1031, 4294901760
        %1033 = vmatpush1.msra.mxu0 %v1032
        %1034 = vmatprep.subr.mxu0 0.0
        %1035 = vmatpush1.msra.mxu0 0.0
        %1036 = vmatprep.subr.mxu0 0.0
        %1037 = vmatpush1.msra.mxu0 0.0
        %1038 = vmatprep.subr.mxu0 0.0
        %1039 = vmatpush1.msra.mxu0 0.0
        %1040 = vmatprep.subr.mxu0 0.0
        %1041 = vmatpush1.msra.mxu0 0.0
        %1042 = vmatprep.subr.mxu0 0.0
        %1043 = vmatpush1.msra.mxu0 0.0
        %1044 = vmatprep.subr.mxu0 0.0
        %1045 = vmatpush1.msra.mxu0 0.0
        %1046 = vmatprep.subr.mxu0 0.0
        %1047 = vmatpush1.msra.mxu0 0.0
        %1048 = vmatprep.subr.mxu0 0.0
        %1049 = vmatpush1.msra.mxu0 0.0
        %1050 = vmatprep.subr.mxu0 0.0
        %1051 = vmatpush1.msra.mxu0 0.0
        %1052 = vmatprep.subr.mxu0 0.0
        %1053 = vmatpush1.msra.mxu0 0.0
        %1054 = vmatprep.subr.mxu0 0.0
        %1055 = vmatpush1.msra.mxu0 0.0
        %1056 = vmatprep.subr.mxu0 0.0
        %1057 = vmatpush1.msra.mxu0 0.0
        %1058 = vmatprep.subr.mxu0 0.0
        %1059 = vmatpush1.msra.mxu0 0.0
        %1060 = vmatprep.subr.mxu0 0.0
        %1061 = vmatpush1.msra.mxu0 0.0
        %1062 = vmatprep.subr.mxu0 0.0
        %1063 = vmatpush1.msra.mxu0 0.0
        %1064 = vmatprep.subr.mxu0 0.0
        %1065 = vmatpush1.msra.mxu0 0.0
        %1066 = vmatprep.mubr.f32.mxu0 0.0
        %v1067 = vand.u32 %v502, 4294901760
        %1068 = vmatmul.mubr.f32.gmra.mrb[0].mxu0 %v1067
        %v1069 = vpop.f32.mrb[0].mxu0
        %v1070 = vadd.f32 %v951, %v1069
        %v1071 = vpop.f32.mrb[0].mxu0
        %1072 = vdwg.mxu0
        %1073 = vmatprep.subr.mxu0 0.0
        %v1074 = vand.u32 %v503, 4294901760
        %1075 = vmatpush1.msra.mxu0 %v1074
        %1076 = vmatprep.subr.mxu0 0.0
        %v1077 = vand.u32 %v504, 4294901760
        %1078 = vmatpush1.msra.mxu0 %v1077
        %1079 = vmatprep.subr.mxu0 0.0
        %v1080 = vand.u32 %v505, 4294901760
        %1081 = vmatpush1.msra.mxu0 %v1080
        %1082 = vmatprep.subr.mxu0 0.0
        %v1083 = vand.u32 %v506, 4294901760
        %1084 = vmatpush1.msra.mxu0 %v1083
        %1085 = vmatprep.subr.mxu0 0.0
        %v1086 = vand.u32 %v507, 4294901760
        %1087 = vmatpush1.msra.mxu0 %v1086
        %1088 = vmatprep.subr.mxu0 0.0
        %v1089 = vand.u32 %v508, 4294901760
        %1090 = vmatpush1.msra.mxu0 %v1089
        %1091 = vmatprep.subr.mxu0 0.0
        %v1092 = vand.u32 %v509, 4294901760
        %1093 = vmatpush1.msra.mxu0 %v1092
        %1094 = vmatprep.subr.mxu0 0.0
        %v1095 = vand.u32 %v510, 4294901760
        %1096 = vmatpush1.msra.mxu0 %v1095
        %1097 = vmatprep.subr.mxu0 0.0
        %v1098 = vand.u32 %v511, 4294901760
        %1099 = vmatpush1.msra.mxu0 %v1098
        %1100 = vmatprep.subr.mxu0 0.0
        %v1101 = vand.u32 %v512, 4294901760
        %1102 = vmatpush1.msra.mxu0 %v1101
        %1103 = vmatprep.subr.mxu0 0.0
        %v1104 = vand.u32 %v513, 4294901760
        %1105 = vmatpush1.msra.mxu0 %v1104
        %1106 = vmatprep.subr.mxu0 0.0
        %v1107 = vand.u32 %v514, 4294901760
        %1108 = vmatpush1.msra.mxu0 %v1107
        %1109 = vmatprep.subr.mxu0 0.0
        %v1110 = vand.u32 %v515, 4294901760
        %1111 = vmatpush1.msra.mxu0 %v1110
        %1112 = vmatprep.subr.mxu0 0.0
        %v1113 = vand.u32 %v516, 4294901760
        %1114 = vmatpush1.msra.mxu0 %v1113
        %1115 = vmatprep.subr.mxu0 0.0
        %v1116 = vand.u32 %v517, 4294901760
        %1117 = vmatpush1.msra.mxu0 %v1116
        %1118 = vmatprep.subr.mxu0 0.0
        %v1119 = vand.u32 %v518, 4294901760
        %1120 = vmatpush1.msra.mxu0 %v1119
        %1121 = vmatprep.subr.mxu0 0.0
        %1122 = vmatpush1.msra.mxu0 0.0
        %1123 = vmatprep.subr.mxu0 0.0
        %1124 = vmatpush1.msra.mxu0 0.0
        %1125 = vmatprep.subr.mxu0 0.0
        %1126 = vmatpush1.msra.mxu0 0.0
        %1127 = vmatprep.subr.mxu0 0.0
        %1128 = vmatpush1.msra.mxu0 0.0
        %1129 = vmatprep.subr.mxu0 0.0
        %1130 = vmatpush1.msra.mxu0 0.0
        %1131 = vmatprep.subr.mxu0 0.0
        %1132 = vmatpush1.msra.mxu0 0.0
        %1133 = vmatprep.subr.mxu0 0.0
        %1134 = vmatpush1.msra.mxu0 0.0
        %1135 = vmatprep.subr.mxu0 0.0
        %1136 = vmatpush1.msra.mxu0 0.0
        %1137 = vmatprep.subr.mxu0 0.0
        %1138 = vmatpush1.msra.mxu0 0.0
        %1139 = vmatprep.subr.mxu0 0.0
        %1140 = vmatpush1.msra.mxu0 0.0
        %1141 = vmatprep.subr.mxu0 0.0
        %1142 = vmatpush1.msra.mxu0 0.0
        %1143 = vmatprep.subr.mxu0 0.0
        %1144 = vmatpush1.msra.mxu0 0.0
        %1145 = vmatprep.subr.mxu0 0.0
        %1146 = vmatpush1.msra.mxu0 0.0
        %1147 = vmatprep.subr.mxu0 0.0
        %1148 = vmatpush1.msra.mxu0 0.0
        %1149 = vmatprep.subr.mxu0 0.0
        %1150 = vmatpush1.msra.mxu0 0.0
        %1151 = vmatprep.subr.mxu0 0.0
        %1152 = vmatpush1.msra.mxu0 0.0
        %1153 = vmatprep.mubr.f32.mxu0 0.0
        %v1154 = vand.u32 %v502, 4294901760
        %1155 = vmatmul.mubr.f32.gmra.mrb[0].mxu0 %v1154
        %v1156 = vpop.f32.mrb[0].mxu0
        %v1157 = vadd.f32 %v1070, %v1156
        %v1158 = vpop.f32.mrb[0].mxu0
        %1159 = vdwg.mxu0
        %1160 = vmatprep.subr.mxu0 0.0
        %v1161 = vand.u32 %v486, 4294901760
        %1162 = vmatpush1.msra.mxu0 %v1161
        %1163 = vmatprep.subr.mxu0 0.0
        %v1164 = vand.u32 %v487, 4294901760
        %1165 = vmatpush1.msra.mxu0 %v1164
        %1166 = vmatprep.subr.mxu0 0.0
        %v1167 = vand.u32 %v488, 4294901760
        %1168 = vmatpush1.msra.mxu0 %v1167
        %1169 = vmatprep.subr.mxu0 0.0
        %v1170 = vand.u32 %v489, 4294901760
        %1171 = vmatpush1.msra.mxu0 %v1170
        %1172 = vmatprep.subr.mxu0 0.0
        %v1173 = vand.u32 %v490, 4294901760
        %1174 = vmatpush1.msra.mxu0 %v1173
        %1175 = vmatprep.subr.mxu0 0.0
        %v1176 = vand.u32 %v491, 4294901760
        %1177 = vmatpush1.msra.mxu0 %v1176
        %1178 = vmatprep.subr.mxu0 0.0
        %v1179 = vand.u32 %v492, 4294901760
        %1180 = vmatpush1.msra.mxu0 %v1179
        %1181 = vmatprep.subr.mxu0 0.0
        %v1182 = vand.u32 %v493, 4294901760
        %1183 = vmatpush1.msra.mxu0 %v1182
        %1184 = vmatprep.subr.mxu0 0.0
        %v1185 = vand.u32 %v494, 4294901760
        %1186 = vmatpush1.msra.mxu0 %v1185
        %1187 = vmatprep.subr.mxu0 0.0
        %v1188 = vand.u32 %v495, 4294901760
        %1189 = vmatpush1.msra.mxu0 %v1188
        %1190 = vmatprep.subr.mxu0 0.0
        %v1191 = vand.u32 %v496, 4294901760
        %1192 = vmatpush1.msra.mxu0 %v1191
        %1193 = vmatprep.subr.mxu0 0.0
        %v1194 = vand.u32 %v497, 4294901760
        %1195 = vmatpush1.msra.mxu0 %v1194
        %1196 = vmatprep.subr.mxu0 0.0
        %v1197 = vand.u32 %v498, 4294901760
        %1198 = vmatpush1.msra.mxu0 %v1197
        %1199 = vmatprep.subr.mxu0 0.0
        %v1200 = vand.u32 %v499, 4294901760
        %1201 = vmatpush1.msra.mxu0 %v1200
        %1202 = vmatprep.subr.mxu0 0.0
        %v1203 = vand.u32 %v500, 4294901760
        %1204 = vmatpush1.msra.mxu0 %v1203
        %1205 = vmatprep.subr.mxu0 0.0
        %v1206 = vand.u32 %v501, 4294901760
        %1207 = vmatpush1.msra.mxu0 %v1206
        %1208 = vmatprep.subr.mxu0 0.0
        %1209 = vmatpush1.msra.mxu0 0.0
        %1210 = vmatprep.subr.mxu0 0.0
        %1211 = vmatpush1.msra.mxu0 0.0
        %1212 = vmatprep.subr.mxu0 0.0
        %1213 = vmatpush1.msra.mxu0 0.0
        %1214 = vmatprep.subr.mxu0 0.0
        %1215 = vmatpush1.msra.mxu0 0.0
        %1216 = vmatprep.subr.mxu0 0.0
        %1217 = vmatpush1.msra.mxu0 0.0
        %1218 = vmatprep.subr.mxu0 0.0
        %1219 = vmatpush1.msra.mxu0 0.0
        %1220 = vmatprep.subr.mxu0 0.0
        %1221 = vmatpush1.msra.mxu0 0.0
        %1222 = vmatprep.subr.mxu0 0.0
        %1223 = vmatpush1.msra.mxu0 0.0
        %1224 = vmatprep.subr.mxu0 0.0
        %1225 = vmatpush1.msra.mxu0 0.0
        %1226 = vmatprep.subr.mxu0 0.0
        %1227 = vmatpush1.msra.mxu0 0.0
        %1228 = vmatprep.subr.mxu0 0.0
        %1229 = vmatpush1.msra.mxu0 0.0
        %1230 = vmatprep.subr.mxu0 0.0
        %1231 = vmatpush1.msra.mxu0 0.0
        %1232 = vmatprep.subr.mxu0 0.0
        %1233 = vmatpush1.msra.mxu0 0.0
        %1234 = vmatprep.subr.mxu0 0.0
        %1235 = vmatpush1.msra.mxu0 0.0
        %1236 = vmatprep.subr.mxu0 0.0
        %1237 = vmatpush1.msra.mxu0 0.0
        %1238 = vmatprep.subr.mxu0 0.0
        %1239 = vmatpush1.msra.mxu0 0.0
        %1240 = vmatprep.mubr.f32.mxu0 0.0
        %v1241 = vand.u32 %v485, 4294901760
        %v1242 = vsub.f32 %v485, %v1241
        %v1243 = vand.u32 %v1242, 4294901760
        %v1244 = vsub.f32 %v1242, %v1243
        %v1245 = vand.u32 %v1244, 4294901760
        %1246 = vmatmul.mubr.f32.gmra.mrb[0].mxu0 %v1245
        %v1247 = vpop.f32.mrb[0].mxu0
        %v1248 = vadd.f32 %v1157, %v1247
        %v1249 = vpop.f32.mrb[0].mxu0
        %1250 = vdwg.mxu0
        %1251 = vmatprep.subr.mxu0 0.0
        %v1252 = vand.u32 %v486, 4294901760
        %v1253 = vsub.f32 %v486, %v1252
        %v1254 = vand.u32 %v1253, 4294901760
        %v1255 = vsub.f32 %v1253, %v1254
        %v1256 = vand.u32 %v1255, 4294901760
        %1257 = vmatpush1.msra.mxu0 %v1256
        %1258 = vmatprep.subr.mxu0 0.0
        %v1259 = vand.u32 %v487, 4294901760
        %v1260 = vsub.f32 %v487, %v1259
        %v1261 = vand.u32 %v1260, 4294901760
        %v1262 = vsub.f32 %v1260, %v1261
        %v1263 = vand.u32 %v1262, 4294901760
        %1264 = vmatpush1.msra.mxu0 %v1263
        %1265 = vmatprep.subr.mxu0 0.0
        %v1266 = vand.u32 %v488, 4294901760
        %v1267 = vsub.f32 %v488, %v1266
        %v1268 = vand.u32 %v1267, 4294901760
        %v1269 = vsub.f32 %v1267, %v1268
        %v1270 = vand.u32 %v1269, 4294901760
        %1271 = vmatpush1.msra.mxu0 %v1270
        %1272 = vmatprep.subr.mxu0 0.0
        %v1273 = vand.u32 %v489, 4294901760
        %v1274 = vsub.f32 %v489, %v1273
        %v1275 = vand.u32 %v1274, 4294901760
        %v1276 = vsub.f32 %v1274, %v1275
        %v1277 = vand.u32 %v1276, 4294901760
        %1278 = vmatpush1.msra.mxu0 %v1277
        %1279 = vmatprep.subr.mxu0 0.0
        %v1280 = vand.u32 %v490, 4294901760
        %v1281 = vsub.f32 %v490, %v1280
        %v1282 = vand.u32 %v1281, 4294901760
        %v1283 = vsub.f32 %v1281, %v1282
        %v1284 = vand.u32 %v1283, 4294901760
        %1285 = vmatpush1.msra.mxu0 %v1284
        %1286 = vmatprep.subr.mxu0 0.0
        %v1287 = vand.u32 %v491, 4294901760
        %v1288 = vsub.f32 %v491, %v1287
        %v1289 = vand.u32 %v1288, 4294901760
        %v1290 = vsub.f32 %v1288, %v1289
        %v1291 = vand.u32 %v1290, 4294901760
        %1292 = vmatpush1.msra.mxu0 %v1291
        %1293 = vmatprep.subr.mxu0 0.0
        %v1294 = vand.u32 %v492, 4294901760
        %v1295 = vsub.f32 %v492, %v1294
        %v1296 = vand.u32 %v1295, 4294901760
        %v1297 = vsub.f32 %v1295, %v1296
        %v1298 = vand.u32 %v1297, 4294901760
        %1299 = vmatpush1.msra.mxu0 %v1298
        %1300 = vmatprep.subr.mxu0 0.0
        %v1301 = vand.u32 %v493, 4294901760
        %v1302 = vsub.f32 %v493, %v1301
        %v1303 = vand.u32 %v1302, 4294901760
        %v1304 = vsub.f32 %v1302, %v1303
        %v1305 = vand.u32 %v1304, 4294901760
        %1306 = vmatpush1.msra.mxu0 %v1305
        %1307 = vmatprep.subr.mxu0 0.0
        %v1308 = vand.u32 %v494, 4294901760
        %v1309 = vsub.f32 %v494, %v1308
        %v1310 = vand.u32 %v1309, 4294901760
        %v1311 = vsub.f32 %v1309, %v1310
        %v1312 = vand.u32 %v1311, 4294901760
        %1313 = vmatpush1.msra.mxu0 %v1312
        %1314 = vmatprep.subr.mxu0 0.0
        %v1315 = vand.u32 %v495, 4294901760
        %v1316 = vsub.f32 %v495, %v1315
        %v1317 = vand.u32 %v1316, 4294901760
        %v1318 = vsub.f32 %v1316, %v1317
        %v1319 = vand.u32 %v1318, 4294901760
        %1320 = vmatpush1.msra.mxu0 %v1319
        %1321 = vmatprep.subr.mxu0 0.0
        %v1322 = vand.u32 %v496, 4294901760
        %v1323 = vsub.f32 %v496, %v1322
        %v1324 = vand.u32 %v1323, 4294901760
        %v1325 = vsub.f32 %v1323, %v1324
        %v1326 = vand.u32 %v1325, 4294901760
        %1327 = vmatpush1.msra.mxu0 %v1326
        %1328 = vmatprep.subr.mxu0 0.0
        %v1329 = vand.u32 %v497, 4294901760
        %v1330 = vsub.f32 %v497, %v1329
        %v1331 = vand.u32 %v1330, 4294901760
        %v1332 = vsub.f32 %v1330, %v1331
        %v1333 = vand.u32 %v1332, 4294901760
        %1334 = vmatpush1.msra.mxu0 %v1333
        %1335 = vmatprep.subr.mxu0 0.0
        %v1336 = vand.u32 %v498, 4294901760
        %v1337 = vsub.f32 %v498, %v1336
        %v1338 = vand.u32 %v1337, 4294901760
        %v1339 = vsub.f32 %v1337, %v1338
        %v1340 = vand.u32 %v1339, 4294901760
        %1341 = vmatpush1.msra.mxu0 %v1340
        %1342 = vmatprep.subr.mxu0 0.0
        %v1343 = vand.u32 %v499, 4294901760
        %v1344 = vsub.f32 %v499, %v1343
        %v1345 = vand.u32 %v1344, 4294901760
        %v1346 = vsub.f32 %v1344, %v1345
        %v1347 = vand.u32 %v1346, 4294901760
        %1348 = vmatpush1.msra.mxu0 %v1347
        %1349 = vmatprep.subr.mxu0 0.0
        %v1350 = vand.u32 %v500, 4294901760
        %v1351 = vsub.f32 %v500, %v1350
        %v1352 = vand.u32 %v1351, 4294901760
        %v1353 = vsub.f32 %v1351, %v1352
        %v1354 = vand.u32 %v1353, 4294901760
        %1355 = vmatpush1.msra.mxu0 %v1354
        %1356 = vmatprep.subr.mxu0 0.0
        %v1357 = vand.u32 %v501, 4294901760
        %v1358 = vsub.f32 %v501, %v1357
        %v1359 = vand.u32 %v1358, 4294901760
        %v1360 = vsub.f32 %v1358, %v1359
        %v1361 = vand.u32 %v1360, 4294901760
        %1362 = vmatpush1.msra.mxu0 %v1361
        %1363 = vmatprep.subr.mxu0 0.0
        %1364 = vmatpush1.msra.mxu0 0.0
        %1365 = vmatprep.subr.mxu0 0.0
        %1366 = vmatpush1.msra.mxu0 0.0
        %1367 = vmatprep.subr.mxu0 0.0
        %1368 = vmatpush1.msra.mxu0 0.0
        %1369 = vmatprep.subr.mxu0 0.0
        %1370 = vmatpush1.msra.mxu0 0.0
        %1371 = vmatprep.subr.mxu0 0.0
        %1372 = vmatpush1.msra.mxu0 0.0
        %1373 = vmatprep.subr.mxu0 0.0
        %1374 = vmatpush1.msra.mxu0 0.0
        %1375 = vmatprep.subr.mxu0 0.0
        %1376 = vmatpush1.msra.mxu0 0.0
        %1377 = vmatprep.subr.mxu0 0.0
        %1378 = vmatpush1.msra.mxu0 0.0
        %1379 = vmatprep.subr.mxu0 0.0
        %1380 = vmatpush1.msra.mxu0 0.0
        %1381 = vmatprep.subr.mxu0 0.0
        %1382 = vmatpush1.msra.mxu0 0.0
        %1383 = vmatprep.subr.mxu0 0.0
        %1384 = vmatpush1.msra.mxu0 0.0
        %1385 = vmatprep.subr.mxu0 0.0
        %1386 = vmatpush1.msra.mxu0 0.0
        %1387 = vmatprep.subr.mxu0 0.0
        %1388 = vmatpush1.msra.mxu0 0.0
        %1389 = vmatprep.subr.mxu0 0.0
        %1390 = vmatpush1.msra.mxu0 0.0
        %1391 = vmatprep.subr.mxu0 0.0
        %1392 = vmatpush1.msra.mxu0 0.0
        %1393 = vmatprep.subr.mxu0 0.0
        %1394 = vmatpush1.msra.mxu0 0.0
        %1395 = vmatprep.mubr.f32.mxu0 0.0
        %v1396 = vand.u32 %v485, 4294901760
        %1397 = vmatmul.mubr.f32.gmra.mrb[0].mxu0 %v1396
        %v1398 = vpop.f32.mrb[0].mxu0
        %v1399 = vadd.f32 %v1248, %v1398
        %v1400 = vpop.f32.mrb[0].mxu0
        %1401 = vdwg.mxu0
        %1402 = vmatprep.subr.mxu0 0.0
        %v1403 = vand.u32 %v486, 4294901760
        %v1404 = vsub.f32 %v486, %v1403
        %1405 = vmatpush1.msra.mxu0 %v1404
        %1406 = vmatprep.subr.mxu0 0.0
        %v1407 = vand.u32 %v487, 4294901760
        %v1408 = vsub.f32 %v487, %v1407
        %1409 = vmatpush1.msra.mxu0 %v1408
        %1410 = vmatprep.subr.mxu0 0.0
        %v1411 = vand.u32 %v488, 4294901760
        %v1412 = vsub.f32 %v488, %v1411
        %1413 = vmatpush1.msra.mxu0 %v1412
        %1414 = vmatprep.subr.mxu0 0.0
        %v1415 = vand.u32 %v489, 4294901760
        %v1416 = vsub.f32 %v489, %v1415
        %1417 = vmatpush1.msra.mxu0 %v1416
        %1418 = vmatprep.subr.mxu0 0.0
        %v1419 = vand.u32 %v490, 4294901760
        %v1420 = vsub.f32 %v490, %v1419
        %1421 = vmatpush1.msra.mxu0 %v1420
        %1422 = vmatprep.subr.mxu0 0.0
        %v1423 = vand.u32 %v491, 4294901760
        %v1424 = vsub.f32 %v491, %v1423
        %1425 = vmatpush1.msra.mxu0 %v1424
        %1426 = vmatprep.subr.mxu0 0.0
        %v1427 = vand.u32 %v492, 4294901760
        %v1428 = vsub.f32 %v492, %v1427
        %1429 = vmatpush1.msra.mxu0 %v1428
        %1430 = vmatprep.subr.mxu0 0.0
        %v1431 = vand.u32 %v493, 4294901760
        %v1432 = vsub.f32 %v493, %v1431
        %1433 = vmatpush1.msra.mxu0 %v1432
        %1434 = vmatprep.subr.mxu0 0.0
        %v1435 = vand.u32 %v494, 4294901760
        %v1436 = vsub.f32 %v494, %v1435
        %1437 = vmatpush1.msra.mxu0 %v1436
        %1438 = vmatprep.subr.mxu0 0.0
        %v1439 = vand.u32 %v495, 4294901760
        %v1440 = vsub.f32 %v495, %v1439
        %1441 = vmatpush1.msra.mxu0 %v1440
        %1442 = vmatprep.subr.mxu0 0.0
        %v1443 = vand.u32 %v496, 4294901760
        %v1444 = vsub.f32 %v496, %v1443
        %1445 = vmatpush1.msra.mxu0 %v1444
        %1446 = vmatprep.subr.mxu0 0.0
        %v1447 = vand.u32 %v497, 4294901760
        %v1448 = vsub.f32 %v497, %v1447
        %1449 = vmatpush1.msra.mxu0 %v1448
        %1450 = vmatprep.subr.mxu0 0.0
        %v1451 = vand.u32 %v498, 4294901760
        %v1452 = vsub.f32 %v498, %v1451
        %1453 = vmatpush1.msra.mxu0 %v1452
        %1454 = vmatprep.subr.mxu0 0.0
        %v1455 = vand.u32 %v499, 4294901760
        %v1456 = vsub.f32 %v499, %v1455
        %1457 = vmatpush1.msra.mxu0 %v1456
        %1458 = vmatprep.subr.mxu0 0.0
        %v1459 = vand.u32 %v500, 4294901760
        %v1460 = vsub.f32 %v500, %v1459
        %1461 = vmatpush1.msra.mxu0 %v1460
        %1462 = vmatprep.subr.mxu0 0.0
        %v1463 = vand.u32 %v501, 4294901760
        %v1464 = vsub.f32 %v501, %v1463
        %1465 = vmatpush1.msra.mxu0 %v1464
        %1466 = vmatprep.subr.mxu0 0.0
        %1467 = vmatpush1.msra.mxu0 0.0
        %1468 = vmatprep.subr.mxu0 0.0
        %1469 = vmatpush1.msra.mxu0 0.0
        %1470 = vmatprep.subr.mxu0 0.0
        %1471 = vmatpush1.msra.mxu0 0.0
        %1472 = vmatprep.subr.mxu0 0.0
        %1473 = vmatpush1.msra.mxu0 0.0
        %1474 = vmatprep.subr.mxu0 0.0
        %1475 = vmatpush1.msra.mxu0 0.0
        %1476 = vmatprep.subr.mxu0 0.0
        %1477 = vmatpush1.msra.mxu0 0.0
        %1478 = vmatprep.subr.mxu0 0.0
        %1479 = vmatpush1.msra.mxu0 0.0
        %1480 = vmatprep.subr.mxu0 0.0
        %1481 = vmatpush1.msra.mxu0 0.0
        %1482 = vmatprep.subr.mxu0 0.0
        %1483 = vmatpush1.msra.mxu0 0.0
        %1484 = vmatprep.subr.mxu0 0.0
        %1485 = vmatpush1.msra.mxu0 0.0
        %1486 = vmatprep.subr.mxu0 0.0
        %1487 = vmatpush1.msra.mxu0 0.0
        %1488 = vmatprep.subr.mxu0 0.0
        %1489 = vmatpush1.msra.mxu0 0.0
        %1490 = vmatprep.subr.mxu0 0.0
        %1491 = vmatpush1.msra.mxu0 0.0
        %1492 = vmatprep.subr.mxu0 0.0
        %1493 = vmatpush1.msra.mxu0 0.0
        %1494 = vmatprep.subr.mxu0 0.0
        %1495 = vmatpush1.msra.mxu0 0.0
        %1496 = vmatprep.subr.mxu0 0.0
        %1497 = vmatpush1.msra.mxu0 0.0
        %1498 = vmatprep.mubr.f32.mxu0 0.0
        %v1499 = vand.u32 %v485, 4294901760
        %v1500 = vsub.f32 %v485, %v1499
        %1501 = vmatmul.mubr.f32.gmra.mrb[0].mxu0 %v1500
        %v1502 = vpop.f32.mrb[0].mxu0
        %v1503 = vadd.f32 %v1399, %v1502
        %v1504 = vpop.f32.mrb[0].mxu0
        %1505 = vdwg.mxu0
        %1506 = vmatprep.subr.mxu0 0.0
        %v1507 = vand.u32 %v486, 4294901760
        %1508 = vmatpush1.msra.mxu0 %v1507
        %1509 = vmatprep.subr.mxu0 0.0
        %v1510 = vand.u32 %v487, 4294901760
        %1511 = vmatpush1.msra.mxu0 %v1510
        %1512 = vmatprep.subr.mxu0 0.0
        %v1513 = vand.u32 %v488, 4294901760
        %1514 = vmatpush1.msra.mxu0 %v1513
        %1515 = vmatprep.subr.mxu0 0.0
        %v1516 = vand.u32 %v489, 4294901760
        %1517 = vmatpush1.msra.mxu0 %v1516
        %1518 = vmatprep.subr.mxu0 0.0
        %v1519 = vand.u32 %v490, 4294901760
        %1520 = vmatpush1.msra.mxu0 %v1519
        %1521 = vmatprep.subr.mxu0 0.0
        %v1522 = vand.u32 %v491, 4294901760
        %1523 = vmatpush1.msra.mxu0 %v1522
        %1524 = vmatprep.subr.mxu0 0.0
        %v1525 = vand.u32 %v492, 4294901760
        %1526 = vmatpush1.msra.mxu0 %v1525
        %1527 = vmatprep.subr.mxu0 0.0
        %v1528 = vand.u32 %v493, 4294901760
        %1529 = vmatpush1.msra.mxu0 %v1528
        %1530 = vmatprep.subr.mxu0 0.0
        %v1531 = vand.u32 %v494, 4294901760
        %1532 = vmatpush1.msra.mxu0 %v1531
        %1533 = vmatprep.subr.mxu0 0.0
        %v1534 = vand.u32 %v495, 4294901760
        %1535 = vmatpush1.msra.mxu0 %v1534
        %1536 = vmatprep.subr.mxu0 0.0
        %v1537 = vand.u32 %v496, 4294901760
        %1538 = vmatpush1.msra.mxu0 %v1537
        %1539 = vmatprep.subr.mxu0 0.0
        %v1540 = vand.u32 %v497, 4294901760
        %1541 = vmatpush1.msra.mxu0 %v1540
        %1542 = vmatprep.subr.mxu0 0.0
        %v1543 = vand.u32 %v498, 4294901760
        %1544 = vmatpush1.msra.mxu0 %v1543
        %1545 = vmatprep.subr.mxu0 0.0
        %v1546 = vand.u32 %v499, 4294901760
        %1547 = vmatpush1.msra.mxu0 %v1546
        %1548 = vmatprep.subr.mxu0 0.0
        %v1549 = vand.u32 %v500, 4294901760
        %1550 = vmatpush1.msra.mxu0 %v1549
        %1551 = vmatprep.subr.mxu0 0.0
        %v1552 = vand.u32 %v501, 4294901760
        %1553 = vmatpush1.msra.mxu0 %v1552
        %1554 = vmatprep.subr.mxu0 0.0
        %1555 = vmatpush1.msra.mxu0 0.0
        %1556 = vmatprep.subr.mxu0 0.0
        %1557 = vmatpush1.msra.mxu0 0.0
        %1558 = vmatprep.subr.mxu0 0.0
        %1559 = vmatpush1.msra.mxu0 0.0
        %1560 = vmatprep.subr.mxu0 0.0
        %1561 = vmatpush1.msra.mxu0 0.0
        %1562 = vmatprep.subr.mxu0 0.0
        %1563 = vmatpush1.msra.mxu0 0.0
        %1564 = vmatprep.subr.mxu0 0.0
        %1565 = vmatpush1.msra.mxu0 0.0
        %1566 = vmatprep.subr.mxu0 0.0
        %1567 = vmatpush1.msra.mxu0 0.0
        %1568 = vmatprep.subr.mxu0 0.0
        %1569 = vmatpush1.msra.mxu0 0.0
        %1570 = vmatprep.subr.mxu0 0.0
        %1571 = vmatpush1.msra.mxu0 0.0
        %1572 = vmatprep.subr.mxu0 0.0
        %1573 = vmatpush1.msra.mxu0 0.0
        %1574 = vmatprep.subr.mxu0 0.0
        %1575 = vmatpush1.msra.mxu0 0.0
        %1576 = vmatprep.subr.mxu0 0.0
        %1577 = vmatpush1.msra.mxu0 0.0
        %1578 = vmatprep.subr.mxu0 0.0
        %1579 = vmatpush1.msra.mxu0 0.0
        %1580 = vmatprep.subr.mxu0 0.0
        %1581 = vmatpush1.msra.mxu0 0.0
        %1582 = vmatprep.subr.mxu0 0.0
        %1583 = vmatpush1.msra.mxu0 0.0
        %1584 = vmatprep.subr.mxu0 0.0
        %1585 = vmatpush1.msra.mxu0 0.0
        %1586 = vmatprep.mubr.f32.mxu0 0.0
        %v1587 = vand.u32 %v485, 4294901760
        %v1588 = vsub.f32 %v485, %v1587
        %v1589 = vand.u32 %v1588, 4294901760
        %1590 = vmatmul.mubr.f32.gmra.mrb[0].mxu0 %v1589
        %v1591 = vpop.f32.mrb[0].mxu0
        %v1592 = vadd.f32 %v1503, %v1591
        %v1593 = vpop.f32.mrb[0].mxu0
        %1594 = vdwg.mxu0
        %1595 = vmatprep.subr.mxu0 0.0
        %v1596 = vand.u32 %v486, 4294901760
        %v1597 = vsub.f32 %v486, %v1596
        %v1598 = vand.u32 %v1597, 4294901760
        %1599 = vmatpush1.msra.mxu0 %v1598
        %1600 = vmatprep.subr.mxu0 0.0
        %v1601 = vand.u32 %v487, 4294901760
        %v1602 = vsub.f32 %v487, %v1601
        %v1603 = vand.u32 %v1602, 4294901760
        %1604 = vmatpush1.msra.mxu0 %v1603
        %1605 = vmatprep.subr.mxu0 0.0
        %v1606 = vand.u32 %v488, 4294901760
        %v1607 = vsub.f32 %v488, %v1606
        %v1608 = vand.u32 %v1607, 4294901760
        %1609 = vmatpush1.msra.mxu0 %v1608
        %1610 = vmatprep.subr.mxu0 0.0
        %v1611 = vand.u32 %v489, 4294901760
        %v1612 = vsub.f32 %v489, %v1611
        %v1613 = vand.u32 %v1612, 4294901760
        %1614 = vmatpush1.msra.mxu0 %v1613
        %1615 = vmatprep.subr.mxu0 0.0
        %v1616 = vand.u32 %v490, 4294901760
        %v1617 = vsub.f32 %v490, %v1616
        %v1618 = vand.u32 %v1617, 4294901760
        %1619 = vmatpush1.msra.mxu0 %v1618
        %1620 = vmatprep.subr.mxu0 0.0
        %v1621 = vand.u32 %v491, 4294901760
        %v1622 = vsub.f32 %v491, %v1621
        %v1623 = vand.u32 %v1622, 4294901760
        %1624 = vmatpush1.msra.mxu0 %v1623
        %1625 = vmatprep.subr.mxu0 0.0
        %v1626 = vand.u32 %v492, 4294901760
        %v1627 = vsub.f32 %v492, %v1626
        %v1628 = vand.u32 %v1627, 4294901760
        %1629 = vmatpush1.msra.mxu0 %v1628
        %1630 = vmatprep.subr.mxu0 0.0
        %v1631 = vand.u32 %v493, 4294901760
        %v1632 = vsub.f32 %v493, %v1631
        %v1633 = vand.u32 %v1632, 4294901760
        %1634 = vmatpush1.msra.mxu0 %v1633
        %1635 = vmatprep.subr.mxu0 0.0
        %v1636 = vand.u32 %v494, 4294901760
        %v1637 = vsub.f32 %v494, %v1636
        %v1638 = vand.u32 %v1637, 4294901760
        %1639 = vmatpush1.msra.mxu0 %v1638
        %1640 = vmatprep.subr.mxu0 0.0
        %v1641 = vand.u32 %v495, 4294901760
        %v1642 = vsub.f32 %v495, %v1641
        %v1643 = vand.u32 %v1642, 4294901760
        %1644 = vmatpush1.msra.mxu0 %v1643
        %1645 = vmatprep.subr.mxu0 0.0
        %v1646 = vand.u32 %v496, 4294901760
        %v1647 = vsub.f32 %v496, %v1646
        %v1648 = vand.u32 %v1647, 4294901760
        %1649 = vmatpush1.msra.mxu0 %v1648
        %1650 = vmatprep.subr.mxu0 0.0
        %v1651 = vand.u32 %v497, 4294901760
        %v1652 = vsub.f32 %v497, %v1651
        %v1653 = vand.u32 %v1652, 4294901760
        %1654 = vmatpush1.msra.mxu0 %v1653
        %1655 = vmatprep.subr.mxu0 0.0
        %v1656 = vand.u32 %v498, 4294901760
        %v1657 = vsub.f32 %v498, %v1656
        %v1658 = vand.u32 %v1657, 4294901760
        %1659 = vmatpush1.msra.mxu0 %v1658
        %1660 = vmatprep.subr.mxu0 0.0
        %v1661 = vand.u32 %v499, 4294901760
        %v1662 = vsub.f32 %v499, %v1661
        %v1663 = vand.u32 %v1662, 4294901760
        %1664 = vmatpush1.msra.mxu0 %v1663
        %1665 = vmatprep.subr.mxu0 0.0
        %v1666 = vand.u32 %v500, 4294901760
        %v1667 = vsub.f32 %v500, %v1666
        %v1668 = vand.u32 %v1667, 4294901760
        %1669 = vmatpush1.msra.mxu0 %v1668
        %1670 = vmatprep.subr.mxu0 0.0
        %v1671 = vand.u32 %v501, 4294901760
        %v1672 = vsub.f32 %v501, %v1671
        %v1673 = vand.u32 %v1672, 4294901760
        %1674 = vmatpush1.msra.mxu0 %v1673
        %1675 = vmatprep.subr.mxu0 0.0
        %1676 = vmatpush1.msra.mxu0 0.0
        %1677 = vmatprep.subr.mxu0 0.0
        %1678 = vmatpush1.msra.mxu0 0.0
        %1679 = vmatprep.subr.mxu0 0.0
        %1680 = vmatpush1.msra.mxu0 0.0
        %1681 = vmatprep.subr.mxu0 0.0
        %1682 = vmatpush1.msra.mxu0 0.0
        %1683 = vmatprep.subr.mxu0 0.0
        %1684 = vmatpush1.msra.mxu0 0.0
        %1685 = vmatprep.subr.mxu0 0.0
        %1686 = vmatpush1.msra.mxu0 0.0
        %1687 = vmatprep.subr.mxu0 0.0
        %1688 = vmatpush1.msra.mxu0 0.0
        %1689 = vmatprep.subr.mxu0 0.0
        %1690 = vmatpush1.msra.mxu0 0.0
        %1691 = vmatprep.subr.mxu0 0.0
        %1692 = vmatpush1.msra.mxu0 0.0
        %1693 = vmatprep.subr.mxu0 0.0
        %1694 = vmatpush1.msra.mxu0 0.0
        %1695 = vmatprep.subr.mxu0 0.0
        %1696 = vmatpush1.msra.mxu0 0.0
        %1697 = vmatprep.subr.mxu0 0.0
        %1698 = vmatpush1.msra.mxu0 0.0
        %1699 = vmatprep.subr.mxu0 0.0
        %1700 = vmatpush1.msra.mxu0 0.0
        %1701 = vmatprep.subr.mxu0 0.0
        %1702 = vmatpush1.msra.mxu0 0.0
        %1703 = vmatprep.subr.mxu0 0.0
        %1704 = vmatpush1.msra.mxu0 0.0
        %1705 = vmatprep.subr.mxu0 0.0
        %1706 = vmatpush1.msra.mxu0 0.0
        %1707 = vmatprep.mubr.f32.mxu0 0.0
        %v1708 = vand.u32 %v485, 4294901760
        %1709 = vmatmul.mubr.f32.gmra.mrb[0].mxu0 %v1708
        %v1710 = vpop.f32.mrb[0].mxu0
        %v1711 = vadd.f32 %v1592, %v1710
        %v1712 = vpop.f32.mrb[0].mxu0
        %1713 = vdwg.mxu0
        %1714 = vmatprep.subr.mxu0 0.0
        %v1715 = vand.u32 %v486, 4294901760
        %1716 = vmatpush1.msra.mxu0 %v1715
        %1717 = vmatprep.subr.mxu0 0.0
        %v1718 = vand.u32 %v487, 4294901760
        %1719 = vmatpush1.msra.mxu0 %v1718
        %1720 = vmatprep.subr.mxu0 0.0
        %v1721 = vand.u32 %v488, 4294901760
        %1722 = vmatpush1.msra.mxu0 %v1721
        %1723 = vmatprep.subr.mxu0 0.0
        %v1724 = vand.u32 %v489, 4294901760
        %1725 = vmatpush1.msra.mxu0 %v1724
        %1726 = vmatprep.subr.mxu0 0.0
        %v1727 = vand.u32 %v490, 4294901760
        %1728 = vmatpush1.msra.mxu0 %v1727
        %1729 = vmatprep.subr.mxu0 0.0
        %v1730 = vand.u32 %v491, 4294901760
        %1731 = vmatpush1.msra.mxu0 %v1730
        %1732 = vmatprep.subr.mxu0 0.0
        %v1733 = vand.u32 %v492, 4294901760
        %1734 = vmatpush1.msra.mxu0 %v1733
        %1735 = vmatprep.subr.mxu0 0.0
        %v1736 = vand.u32 %v493, 4294901760
        %1737 = vmatpush1.msra.mxu0 %v1736
        %1738 = vmatprep.subr.mxu0 0.0
        %v1739 = vand.u32 %v494, 4294901760
        %1740 = vmatpush1.msra.mxu0 %v1739
        %1741 = vmatprep.subr.mxu0 0.0
        %v1742 = vand.u32 %v495, 4294901760
        %1743 = vmatpush1.msra.mxu0 %v1742
        %1744 = vmatprep.subr.mxu0 0.0
        %v1745 = vand.u32 %v496, 4294901760
        %1746 = vmatpush1.msra.mxu0 %v1745
        %1747 = vmatprep.subr.mxu0 0.0
        %v1748 = vand.u32 %v497, 4294901760
        %1749 = vmatpush1.msra.mxu0 %v1748
        %1750 = vmatprep.subr.mxu0 0.0
        %v1751 = vand.u32 %v498, 4294901760
        %1752 = vmatpush1.msra.mxu0 %v1751
        %1753 = vmatprep.subr.mxu0 0.0
        %v1754 = vand.u32 %v499, 4294901760
        %1755 = vmatpush1.msra.mxu0 %v1754
        %1756 = vmatprep.subr.mxu0 0.0
        %v1757 = vand.u32 %v500, 4294901760
        %1758 = vmatpush1.msra.mxu0 %v1757
        %1759 = vmatprep.subr.mxu0 0.0
        %v1760 = vand.u32 %v501, 4294901760
        %1761 = vmatpush1.msra.mxu0 %v1760
        %1762 = vmatprep.subr.mxu0 0.0
        %1763 = vmatpush1.msra.mxu0 0.0
        %1764 = vmatprep.subr.mxu0 0.0
        %1765 = vmatpush1.msra.mxu0 0.0
        %1766 = vmatprep.subr.mxu0 0.0
        %1767 = vmatpush1.msra.mxu0 0.0
        %1768 = vmatprep.subr.mxu0 0.0
        %1769 = vmatpush1.msra.mxu0 0.0
        %1770 = vmatprep.subr.mxu0 0.0
        %1771 = vmatpush1.msra.mxu0 0.0
        %1772 = vmatprep.subr.mxu0 0.0
        %1773 = vmatpush1.msra.mxu0 0.0
        %1774 = vmatprep.subr.mxu0 0.0
        %1775 = vmatpush1.msra.mxu0 0.0
        %1776 = vmatprep.subr.mxu0 0.0
        %1777 = vmatpush1.msra.mxu0 0.0
        %1778 = vmatprep.subr.mxu0 0.0
        %1779 = vmatpush1.msra.mxu0 0.0
        %1780 = vmatprep.subr.mxu0 0.0
        %1781 = vmatpush1.msra.mxu0 0.0
        %1782 = vmatprep.subr.mxu0 0.0
        %1783 = vmatpush1.msra.mxu0 0.0
        %1784 = vmatprep.subr.mxu0 0.0
        %1785 = vmatpush1.msra.mxu0 0.0
        %1786 = vmatprep.subr.mxu0 0.0
        %1787 = vmatpush1.msra.mxu0 0.0
        %1788 = vmatprep.subr.mxu0 0.0
        %1789 = vmatpush1.msra.mxu0 0.0
        %1790 = vmatprep.subr.mxu0 0.0
        %1791 = vmatpush1.msra.mxu0 0.0
        %1792 = vmatprep.subr.mxu0 0.0
        %1793 = vmatpush1.msra.mxu0 0.0
        %1794 = vmatprep.mubr.f32.mxu0 0.0
        %v1795 = vand.u32 %v485, 4294901760
        %1796 = vmatmul.mubr.f32.gmra.mrb[0].mxu0 %v1795
        %v1797 = vpop.f32.mrb[0].mxu0
        %v1798 = vadd.f32 %v1711, %v1797
        %v1799 = vpop.f32.mrb[0].mxu0
        %1800 = vdwg.mxu0
        %v1801 = vld [vmem:[%s7] sm:$0xff]
        %v1802 = vadd.f32 %v1798, %v1801
        %v1803 = vtanh.pop %v1802
        %1804 = vst [vmem:[%s10] sm:$0xff] %v1803
        %v1805 = vld [vmem:[#allocation4] sm:$0xff]
        %v1806 = vld [vmem:[#allocation4 + $0x8] sm:$0xff]
        %v1807 = vld [vmem:[#allocation4 + $0x10] sm:$0xff]
        %v1808 = vld [vmem:[#allocation4 + $0x18] sm:$0xff]
        %v1809 = vld [vmem:[#allocation4 + $0x20] sm:$0xff]
        %v1810 = vld [vmem:[#allocation4 + $0x28] sm:$0xff]
        %v1811 = vld [vmem:[#allocation4 + $0x30] sm:$0xff]
        %v1812 = vld [vmem:[#allocation4 + $0x38] sm:$0xff]
        %v1813 = vld [vmem:[#allocation4 + $0x40] sm:$0xff]
        %v1814 = vld [vmem:[#allocation4 + $0x48] sm:$0xff]
        %v1815 = vld [vmem:[#allocation4 + $0x50] sm:$0xff]
        %v1816 = vld [vmem:[#allocation4 + $0x58] sm:$0xff]
        %v1817 = vld [vmem:[#allocation4 + $0x60] sm:$0xff]
        %v1818 = vld [vmem:[#allocation4 + $0x68] sm:$0xff]
        %v1819 = vld [vmem:[#allocation4 + $0x70] sm:$0xff]
        %v1820 = vld [vmem:[#allocation4 + $0x78] sm:$0xff]
        %v1821 = vld [vmem:[%s11] sm:$0xff]
        %v1822 = vld [vmem:[#allocation7] sm:$0xff]
        %v1823 = vld [vmem:[#allocation7 + $0x8] sm:$0xff]
        %v1824 = vld [vmem:[#allocation7 + $0x10] sm:$0xff]
        %v1825 = vld [vmem:[#allocation7 + $0x18] sm:$0xff]
        %v1826 = vld [vmem:[#allocation7 + $0x20] sm:$0xff]
        %v1827 = vld [vmem:[#allocation7 + $0x28] sm:$0xff]
        %v1828 = vld [vmem:[#allocation7 + $0x30] sm:$0xff]
        %v1829 = vld [vmem:[#allocation7 + $0x38] sm:$0xff]
        %v1830 = vld [vmem:[#allocation7 + $0x40] sm:$0xff]
        %v1831 = vld [vmem:[#allocation7 + $0x48] sm:$0xff]
        %v1832 = vld [vmem:[#allocation7 + $0x50] sm:$0xff]
        %v1833 = vld [vmem:[#allocation7 + $0x58] sm:$0xff]
        %v1834 = vld [vmem:[#allocation7 + $0x60] sm:$0xff]
        %v1835 = vld [vmem:[#allocation7 + $0x68] sm:$0xff]
        %v1836 = vld [vmem:[#allocation7 + $0x70] sm:$0xff]
        %v1837 = vld [vmem:[#allocation7 + $0x78] sm:$0xff]
        %1838 = vmatprep.subr.mxu0 0.0
        %v1839 = vand.u32 %v1822, 4294901760
        %1840 = vmatpush1.msra.mxu0 %v1839
        %1841 = vmatprep.subr.mxu0 0.0
        %v1842 = vand.u32 %v1823, 4294901760
        %1843 = vmatpush1.msra.mxu0 %v1842
        %1844 = vmatprep.subr.mxu0 0.0
        %v1845 = vand.u32 %v1824, 4294901760
        %1846 = vmatpush1.msra.mxu0 %v1845
        %1847 = vmatprep.subr.mxu0 0.0
        %v1848 = vand.u32 %v1825, 4294901760
        %1849 = vmatpush1.msra.mxu0 %v1848
        %1850 = vmatprep.subr.mxu0 0.0
        %v1851 = vand.u32 %v1826, 4294901760
        %1852 = vmatpush1.msra.mxu0 %v1851
        %1853 = vmatprep.subr.mxu0 0.0
        %v1854 = vand.u32 %v1827, 4294901760
        %1855 = vmatpush1.msra.mxu0 %v1854
        %1856 = vmatprep.subr.mxu0 0.0
        %v1857 = vand.u32 %v1828, 4294901760
        %1858 = vmatpush1.msra.mxu0 %v1857
        %1859 = vmatprep.subr.mxu0 0.0
        %v1860 = vand.u32 %v1829, 4294901760
        %1861 = vmatpush1.msra.mxu0 %v1860
        %1862 = vmatprep.subr.mxu0 0.0
        %v1863 = vand.u32 %v1830, 4294901760
        %1864 = vmatpush1.msra.mxu0 %v1863
        %1865 = vmatprep.subr.mxu0 0.0
        %v1866 = vand.u32 %v1831, 4294901760
        %1867 = vmatpush1.msra.mxu0 %v1866
        %1868 = vmatprep.subr.mxu0 0.0
        %v1869 = vand.u32 %v1832, 4294901760
        %1870 = vmatpush1.msra.mxu0 %v1869
        %1871 = vmatprep.subr.mxu0 0.0
        %v1872 = vand.u32 %v1833, 4294901760
        %1873 = vmatpush1.msra.mxu0 %v1872
        %1874 = vmatprep.subr.mxu0 0.0
        %v1875 = vand.u32 %v1834, 4294901760
        %1876 = vmatpush1.msra.mxu0 %v1875
        %1877 = vmatprep.subr.mxu0 0.0
        %v1878 = vand.u32 %v1835, 4294901760
        %1879 = vmatpush1.msra.mxu0 %v1878
        %1880 = vmatprep.subr.mxu0 0.0
        %v1881 = vand.u32 %v1836, 4294901760
        %1882 = vmatpush1.msra.mxu0 %v1881
        %1883 = vmatprep.subr.mxu0 0.0
        %v1884 = vand.u32 %v1837, 4294901760
        %1885 = vmatpush1.msra.mxu0 %v1884
        %1886 = vmatprep.subr.mxu0 0.0
        %1887 = vmatpush1.msra.mxu0 0.0
        %1888 = vmatprep.subr.mxu0 0.0
        %1889 = vmatpush1.msra.mxu0 0.0
        %1890 = vmatprep.subr.mxu0 0.0
        %1891 = vmatpush1.msra.mxu0 0.0
        %1892 = vmatprep.subr.mxu0 0.0
        %1893 = vmatpush1.msra.mxu0 0.0
        %1894 = vmatprep.subr.mxu0 0.0
        %1895 = vmatpush1.msra.mxu0 0.0
        %1896 = vmatprep.subr.mxu0 0.0
        %1897 = vmatpush1.msra.mxu0 0.0
        %1898 = vmatprep.subr.mxu0 0.0
        %1899 = vmatpush1.msra.mxu0 0.0
        %1900 = vmatprep.subr.mxu0 0.0
        %1901 = vmatpush1.msra.mxu0 0.0
        %1902 = vmatprep.subr.mxu0 0.0
        %1903 = vmatpush1.msra.mxu0 0.0
        %1904 = vmatprep.subr.mxu0 0.0
        %1905 = vmatpush1.msra.mxu0 0.0
        %1906 = vmatprep.subr.mxu0 0.0
        %1907 = vmatpush1.msra.mxu0 0.0
        %1908 = vmatprep.subr.mxu0 0.0
        %1909 = vmatpush1.msra.mxu0 0.0
        %1910 = vmatprep.subr.mxu0 0.0
        %1911 = vmatpush1.msra.mxu0 0.0
        %1912 = vmatprep.subr.mxu0 0.0
        %1913 = vmatpush1.msra.mxu0 0.0
        %1914 = vmatprep.subr.mxu0 0.0
        %1915 = vmatpush1.msra.mxu0 0.0
        %1916 = vmatprep.subr.mxu0 0.0
        %1917 = vmatpush1.msra.mxu0 0.0
        %1918 = vmatprep.mubr.f32.mxu0 0.0
        %v1919 = vand.u32 %v1821, 4294901760
        %v1920 = vsub.f32 %v1821, %v1919
        %v1921 = vand.u32 %v1920, 4294901760
        %v1922 = vsub.f32 %v1920, %v1921
        %v1923 = vand.u32 %v1922, 4294901760
        %1924 = vmatmul.mubr.f32.gmra.mrb[0].mxu0 %v1923
        %v1925 = vpop.f32.mrb[0].mxu0
        %v1926 = vadd.f32 0.0, %v1925
        %v1927 = vpop.f32.mrb[0].mxu0
        %1928 = vdwg.mxu0
        %1929 = vmatprep.subr.mxu0 0.0
        %v1930 = vand.u32 %v1822, 4294901760
        %v1931 = vsub.f32 %v1822, %v1930
        %v1932 = vand.u32 %v1931, 4294901760
        %v1933 = vsub.f32 %v1931, %v1932
        %v1934 = vand.u32 %v1933, 4294901760
        %1935 = vmatpush1.msra.mxu0 %v1934
        %1936 = vmatprep.subr.mxu0 0.0
        %v1937 = vand.u32 %v1823, 4294901760
        %v1938 = vsub.f32 %v1823, %v1937
        %v1939 = vand.u32 %v1938, 4294901760
        %v1940 = vsub.f32 %v1938, %v1939
        %v1941 = vand.u32 %v1940, 4294901760
        %1942 = vmatpush1.msra.mxu0 %v1941
        %1943 = vmatprep.subr.mxu0 0.0
        %v1944 = vand.u32 %v1824, 4294901760
        %v1945 = vsub.f32 %v1824, %v1944
        %v1946 = vand.u32 %v1945, 4294901760
        %v1947 = vsub.f32 %v1945, %v1946
        %v1948 = vand.u32 %v1947, 4294901760
        %1949 = vmatpush1.msra.mxu0 %v1948
        %1950 = vmatprep.subr.mxu0 0.0
        %v1951 = vand.u32 %v1825, 4294901760
        %v1952 = vsub.f32 %v1825, %v1951
        %v1953 = vand.u32 %v1952, 4294901760
        %v1954 = vsub.f32 %v1952, %v1953
        %v1955 = vand.u32 %v1954, 4294901760
        %1956 = vmatpush1.msra.mxu0 %v1955
        %1957 = vmatprep.subr.mxu0 0.0
        %v1958 = vand.u32 %v1826, 4294901760
        %v1959 = vsub.f32 %v1826, %v1958
        %v1960 = vand.u32 %v1959, 4294901760
        %v1961 = vsub.f32 %v1959, %v1960
        %v1962 = vand.u32 %v1961, 4294901760
        %1963 = vmatpush1.msra.mxu0 %v1962
        %1964 = vmatprep.subr.mxu0 0.0
        %v1965 = vand.u32 %v1827, 4294901760
        %v1966 = vsub.f32 %v1827, %v1965
        %v1967 = vand.u32 %v1966, 4294901760
        %v1968 = vsub.f32 %v1966, %v1967
        %v1969 = vand.u32 %v1968, 4294901760
        %1970 = vmatpush1.msra.mxu0 %v1969
        %1971 = vmatprep.subr.mxu0 0.0
        %v1972 = vand.u32 %v1828, 4294901760
        %v1973 = vsub.f32 %v1828, %v1972
        %v1974 = vand.u32 %v1973, 4294901760
        %v1975 = vsub.f32 %v1973, %v1974
        %v1976 = vand.u32 %v1975, 4294901760
        %1977 = vmatpush1.msra.mxu0 %v1976
        %1978 = vmatprep.subr.mxu0 0.0
        %v1979 = vand.u32 %v1829, 4294901760
        %v1980 = vsub.f32 %v1829, %v1979
        %v1981 = vand.u32 %v1980, 4294901760
        %v1982 = vsub.f32 %v1980, %v1981
        %v1983 = vand.u32 %v1982, 4294901760
        %1984 = vmatpush1.msra.mxu0 %v1983
        %1985 = vmatprep.subr.mxu0 0.0
        %v1986 = vand.u32 %v1830, 4294901760
        %v1987 = vsub.f32 %v1830, %v1986
        %v1988 = vand.u32 %v1987, 4294901760
        %v1989 = vsub.f32 %v1987, %v1988
        %v1990 = vand.u32 %v1989, 4294901760
        %1991 = vmatpush1.msra.mxu0 %v1990
        %1992 = vmatprep.subr.mxu0 0.0
        %v1993 = vand.u32 %v1831, 4294901760
        %v1994 = vsub.f32 %v1831, %v1993
        %v1995 = vand.u32 %v1994, 4294901760
        %v1996 = vsub.f32 %v1994, %v1995
        %v1997 = vand.u32 %v1996, 4294901760
        %1998 = vmatpush1.msra.mxu0 %v1997
        %1999 = vmatprep.subr.mxu0 0.0
        %v2000 = vand.u32 %v1832, 4294901760
        %v2001 = vsub.f32 %v1832, %v2000
        %v2002 = vand.u32 %v2001, 4294901760
        %v2003 = vsub.f32 %v2001, %v2002
        %v2004 = vand.u32 %v2003, 4294901760
        %2005 = vmatpush1.msra.mxu0 %v2004
        %2006 = vmatprep.subr.mxu0 0.0
        %v2007 = vand.u32 %v1833, 4294901760
        %v2008 = vsub.f32 %v1833, %v2007
        %v2009 = vand.u32 %v2008, 4294901760
        %v2010 = vsub.f32 %v2008, %v2009
        %v2011 = vand.u32 %v2010, 4294901760
        %2012 = vmatpush1.msra.mxu0 %v2011
        %2013 = vmatprep.subr.mxu0 0.0
        %v2014 = vand.u32 %v1834, 4294901760
        %v2015 = vsub.f32 %v1834, %v2014
        %v2016 = vand.u32 %v2015, 4294901760
        %v2017 = vsub.f32 %v2015, %v2016
        %v2018 = vand.u32 %v2017, 4294901760
        %2019 = vmatpush1.msra.mxu0 %v2018
        %2020 = vmatprep.subr.mxu0 0.0
        %v2021 = vand.u32 %v1835, 4294901760
        %v2022 = vsub.f32 %v1835, %v2021
        %v2023 = vand.u32 %v2022, 4294901760
        %v2024 = vsub.f32 %v2022, %v2023
        %v2025 = vand.u32 %v2024, 4294901760
        %2026 = vmatpush1.msra.mxu0 %v2025
        %2027 = vmatprep.subr.mxu0 0.0
        %v2028 = vand.u32 %v1836, 4294901760
        %v2029 = vsub.f32 %v1836, %v2028
        %v2030 = vand.u32 %v2029, 4294901760
        %v2031 = vsub.f32 %v2029, %v2030
        %v2032 = vand.u32 %v2031, 4294901760
        %2033 = vmatpush1.msra.mxu0 %v2032
        %2034 = vmatprep.subr.mxu0 0.0
        %v2035 = vand.u32 %v1837, 4294901760
        %v2036 = vsub.f32 %v1837, %v2035
        %v2037 = vand.u32 %v2036, 4294901760
        %v2038 = vsub.f32 %v2036, %v2037
        %v2039 = vand.u32 %v2038, 4294901760
        %2040 = vmatpush1.msra.mxu0 %v2039
        %2041 = vmatprep.subr.mxu0 0.0
        %2042 = vmatpush1.msra.mxu0 0.0
        %2043 = vmatprep.subr.mxu0 0.0
        %2044 = vmatpush1.msra.mxu0 0.0
        %2045 = vmatprep.subr.mxu0 0.0
        %2046 = vmatpush1.msra.mxu0 0.0
        %2047 = vmatprep.subr.mxu0 0.0
        %2048 = vmatpush1.msra.mxu0 0.0
        %2049 = vmatprep.subr.mxu0 0.0
        %2050 = vmatpush1.msra.mxu0 0.0
        %2051 = vmatprep.subr.mxu0 0.0
        %2052 = vmatpush1.msra.mxu0 0.0
        %2053 = vmatprep.subr.mxu0 0.0
        %2054 = vmatpush1.msra.mxu0 0.0
        %2055 = vmatprep.subr.mxu0 0.0
        %2056 = vmatpush1.msra.mxu0 0.0
        %2057 = vmatprep.subr.mxu0 0.0
        %2058 = vmatpush1.msra.mxu0 0.0
        %2059 = vmatprep.subr.mxu0 0.0
        %2060 = vmatpush1.msra.mxu0 0.0
        %2061 = vmatprep.subr.mxu0 0.0
        %2062 = vmatpush1.msra.mxu0 0.0
        %2063 = vmatprep.subr.mxu0 0.0
        %2064 = vmatpush1.msra.mxu0 0.0
        %2065 = vmatprep.subr.mxu0 0.0
        %2066 = vmatpush1.msra.mxu0 0.0
        %2067 = vmatprep.subr.mxu0 0.0
        %2068 = vmatpush1.msra.mxu0 0.0
        %2069 = vmatprep.subr.mxu0 0.0
        %2070 = vmatpush1.msra.mxu0 0.0
        %2071 = vmatprep.subr.mxu0 0.0
        %2072 = vmatpush1.msra.mxu0 0.0
        %2073 = vmatprep.mubr.f32.mxu0 0.0
        %v2074 = vand.u32 %v1821, 4294901760
        %2075 = vmatmul.mubr.f32.gmra.mrb[0].mxu0 %v2074
        %v2076 = vpop.f32.mrb[0].mxu0
        %v2077 = vadd.f32 %v1926, %v2076
        %v2078 = vpop.f32.mrb[0].mxu0
        %2079 = vdwg.mxu0
        %2080 = vmatprep.subr.mxu0 0.0
        %v2081 = vand.u32 %v1822, 4294901760
        %v2082 = vsub.f32 %v1822, %v2081
        %2083 = vmatpush1.msra.mxu0 %v2082
        %2084 = vmatprep.subr.mxu0 0.0
        %v2085 = vand.u32 %v1823, 4294901760
        %v2086 = vsub.f32 %v1823, %v2085
        %2087 = vmatpush1.msra.mxu0 %v2086
        %2088 = vmatprep.subr.mxu0 0.0
        %v2089 = vand.u32 %v1824, 4294901760
        %v2090 = vsub.f32 %v1824, %v2089
        %2091 = vmatpush1.msra.mxu0 %v2090
        %2092 = vmatprep.subr.mxu0 0.0
        %v2093 = vand.u32 %v1825, 4294901760
        %v2094 = vsub.f32 %v1825, %v2093
        %2095 = vmatpush1.msra.mxu0 %v2094
        %2096 = vmatprep.subr.mxu0 0.0
        %v2097 = vand.u32 %v1826, 4294901760
        %v2098 = vsub.f32 %v1826, %v2097
        %2099 = vmatpush1.msra.mxu0 %v2098
        %2100 = vmatprep.subr.mxu0 0.0
        %v2101 = vand.u32 %v1827, 4294901760
        %v2102 = vsub.f32 %v1827, %v2101
        %2103 = vmatpush1.msra.mxu0 %v2102
        %2104 = vmatprep.subr.mxu0 0.0
        %v2105 = vand.u32 %v1828, 4294901760
        %v2106 = vsub.f32 %v1828, %v2105
        %2107 = vmatpush1.msra.mxu0 %v2106
        %2108 = vmatprep.subr.mxu0 0.0
        %v2109 = vand.u32 %v1829, 4294901760
        %v2110 = vsub.f32 %v1829, %v2109
        %2111 = vmatpush1.msra.mxu0 %v2110
        %2112 = vmatprep.subr.mxu0 0.0
        %v2113 = vand.u32 %v1830, 4294901760
        %v2114 = vsub.f32 %v1830, %v2113
        %2115 = vmatpush1.msra.mxu0 %v2114
        %2116 = vmatprep.subr.mxu0 0.0
        %v2117 = vand.u32 %v1831, 4294901760
        %v2118 = vsub.f32 %v1831, %v2117
        %2119 = vmatpush1.msra.mxu0 %v2118
        %2120 = vmatprep.subr.mxu0 0.0
        %v2121 = vand.u32 %v1832, 4294901760
        %v2122 = vsub.f32 %v1832, %v2121
        %2123 = vmatpush1.msra.mxu0 %v2122
        %2124 = vmatprep.subr.mxu0 0.0
        %v2125 = vand.u32 %v1833, 4294901760
        %v2126 = vsub.f32 %v1833, %v2125
        %2127 = vmatpush1.msra.mxu0 %v2126
        %2128 = vmatprep.subr.mxu0 0.0
        %v2129 = vand.u32 %v1834, 4294901760
        %v2130 = vsub.f32 %v1834, %v2129
        %2131 = vmatpush1.msra.mxu0 %v2130
        %2132 = vmatprep.subr.mxu0 0.0
        %v2133 = vand.u32 %v1835, 4294901760
        %v2134 = vsub.f32 %v1835, %v2133
        %2135 = vmatpush1.msra.mxu0 %v2134
        %2136 = vmatprep.subr.mxu0 0.0
        %v2137 = vand.u32 %v1836, 4294901760
        %v2138 = vsub.f32 %v1836, %v2137
        %2139 = vmatpush1.msra.mxu0 %v2138
        %2140 = vmatprep.subr.mxu0 0.0
        %v2141 = vand.u32 %v1837, 4294901760
        %v2142 = vsub.f32 %v1837, %v2141
        %2143 = vmatpush1.msra.mxu0 %v2142
        %2144 = vmatprep.subr.mxu0 0.0
        %2145 = vmatpush1.msra.mxu0 0.0
        %2146 = vmatprep.subr.mxu0 0.0
        %2147 = vmatpush1.msra.mxu0 0.0
        %2148 = vmatprep.subr.mxu0 0.0
        %2149 = vmatpush1.msra.mxu0 0.0
        %2150 = vmatprep.subr.mxu0 0.0
        %2151 = vmatpush1.msra.mxu0 0.0
        %2152 = vmatprep.subr.mxu0 0.0
        %2153 = vmatpush1.msra.mxu0 0.0
        %2154 = vmatprep.subr.mxu0 0.0
        %2155 = vmatpush1.msra.mxu0 0.0
        %2156 = vmatprep.subr.mxu0 0.0
        %2157 = vmatpush1.msra.mxu0 0.0
        %2158 = vmatprep.subr.mxu0 0.0
        %2159 = vmatpush1.msra.mxu0 0.0
        %2160 = vmatprep.subr.mxu0 0.0
        %2161 = vmatpush1.msra.mxu0 0.0
        %2162 = vmatprep.subr.mxu0 0.0
        %2163 = vmatpush1.msra.mxu0 0.0
        %2164 = vmatprep.subr.mxu0 0.0
        %2165 = vmatpush1.msra.mxu0 0.0
        %2166 = vmatprep.subr.mxu0 0.0
        %2167 = vmatpush1.msra.mxu0 0.0
        %2168 = vmatprep.subr.mxu0 0.0
        %2169 = vmatpush1.msra.mxu0 0.0
        %2170 = vmatprep.subr.mxu0 0.0
        %2171 = vmatpush1.msra.mxu0 0.0
        %2172 = vmatprep.subr.mxu0 0.0
        %2173 = vmatpush1.msra.mxu0 0.0
        %2174 = vmatprep.subr.mxu0 0.0
        %2175 = vmatpush1.msra.mxu0 0.0
        %2176 = vmatprep.mubr.f32.mxu0 0.0
        %v2177 = vand.u32 %v1821, 4294901760
        %v2178 = vsub.f32 %v1821, %v2177
        %2179 = vmatmul.mubr.f32.gmra.mrb[0].mxu0 %v2178
        %v2180 = vpop.f32.mrb[0].mxu0
        %v2181 = vadd.f32 %v2077, %v2180
        %v2182 = vpop.f32.mrb[0].mxu0
        %2183 = vdwg.mxu0
        %2184 = vmatprep.subr.mxu0 0.0
        %v2185 = vand.u32 %v1822, 4294901760
        %2186 = vmatpush1.msra.mxu0 %v2185
        %2187 = vmatprep.subr.mxu0 0.0
        %v2188 = vand.u32 %v1823, 4294901760
        %2189 = vmatpush1.msra.mxu0 %v2188
        %2190 = vmatprep.subr.mxu0 0.0
        %v2191 = vand.u32 %v1824, 4294901760
        %2192 = vmatpush1.msra.mxu0 %v2191
        %2193 = vmatprep.subr.mxu0 0.0
        %v2194 = vand.u32 %v1825, 4294901760
        %2195 = vmatpush1.msra.mxu0 %v2194
        %2196 = vmatprep.subr.mxu0 0.0
        %v2197 = vand.u32 %v1826, 4294901760
        %2198 = vmatpush1.msra.mxu0 %v2197
        %2199 = vmatprep.subr.mxu0 0.0
        %v2200 = vand.u32 %v1827, 4294901760
        %2201 = vmatpush1.msra.mxu0 %v2200
        %2202 = vmatprep.subr.mxu0 0.0
        %v2203 = vand.u32 %v1828, 4294901760
        %2204 = vmatpush1.msra.mxu0 %v2203
        %2205 = vmatprep.subr.mxu0 0.0
        %v2206 = vand.u32 %v1829, 4294901760
        %2207 = vmatpush1.msra.mxu0 %v2206
        %2208 = vmatprep.subr.mxu0 0.0
        %v2209 = vand.u32 %v1830, 4294901760
        %2210 = vmatpush1.msra.mxu0 %v2209
        %2211 = vmatprep.subr.mxu0 0.0
        %v2212 = vand.u32 %v1831, 4294901760
        %2213 = vmatpush1.msra.mxu0 %v2212
        %2214 = vmatprep.subr.mxu0 0.0
        %v2215 = vand.u32 %v1832, 4294901760
        %2216 = vmatpush1.msra.mxu0 %v2215
        %2217 = vmatprep.subr.mxu0 0.0
        %v2218 = vand.u32 %v1833, 4294901760
        %2219 = vmatpush1.msra.mxu0 %v2218
        %2220 = vmatprep.subr.mxu0 0.0
        %v2221 = vand.u32 %v1834, 4294901760
        %2222 = vmatpush1.msra.mxu0 %v2221
        %2223 = vmatprep.subr.mxu0 0.0
        %v2224 = vand.u32 %v1835, 4294901760
        %2225 = vmatpush1.msra.mxu0 %v2224
        %2226 = vmatprep.subr.mxu0 0.0
        %v2227 = vand.u32 %v1836, 4294901760
        %2228 = vmatpush1.msra.mxu0 %v2227
        %2229 = vmatprep.subr.mxu0 0.0
        %v2230 = vand.u32 %v1837, 4294901760
        %2231 = vmatpush1.msra.mxu0 %v2230
        %2232 = vmatprep.subr.mxu0 0.0
        %2233 = vmatpush1.msra.mxu0 0.0
        %2234 = vmatprep.subr.mxu0 0.0
        %2235 = vmatpush1.msra.mxu0 0.0
        %2236 = vmatprep.subr.mxu0 0.0
        %2237 = vmatpush1.msra.mxu0 0.0
        %2238 = vmatprep.subr.mxu0 0.0
        %2239 = vmatpush1.msra.mxu0 0.0
        %2240 = vmatprep.subr.mxu0 0.0
        %2241 = vmatpush1.msra.mxu0 0.0
        %2242 = vmatprep.subr.mxu0 0.0
        %2243 = vmatpush1.msra.mxu0 0.0
        %2244 = vmatprep.subr.mxu0 0.0
        %2245 = vmatpush1.msra.mxu0 0.0
        %2246 = vmatprep.subr.mxu0 0.0
        %2247 = vmatpush1.msra.mxu0 0.0
        %2248 = vmatprep.subr.mxu0 0.0
        %2249 = vmatpush1.msra.mxu0 0.0
        %2250 = vmatprep.subr.mxu0 0.0
        %2251 = vmatpush1.msra.mxu0 0.0
        %2252 = vmatprep.subr.mxu0 0.0
        %2253 = vmatpush1.msra.mxu0 0.0
        %2254 = vmatprep.subr.mxu0 0.0
        %2255 = vmatpush1.msra.mxu0 0.0
        %2256 = vmatprep.subr.mxu0 0.0
        %2257 = vmatpush1.msra.mxu0 0.0
        %2258 = vmatprep.subr.mxu0 0.0
        %2259 = vmatpush1.msra.mxu0 0.0
        %2260 = vmatprep.subr.mxu0 0.0
        %2261 = vmatpush1.msra.mxu0 0.0
        %2262 = vmatprep.subr.mxu0 0.0
        %2263 = vmatpush1.msra.mxu0 0.0
        %2264 = vmatprep.mubr.f32.mxu0 0.0
        %v2265 = vand.u32 %v1821, 4294901760
        %v2266 = vsub.f32 %v1821, %v2265
        %v2267 = vand.u32 %v2266, 4294901760
        %2268 = vmatmul.mubr.f32.gmra.mrb[0].mxu0 %v2267
        %v2269 = vpop.f32.mrb[0].mxu0
        %v2270 = vadd.f32 %v2181, %v2269
        %v2271 = vpop.f32.mrb[0].mxu0
        %2272 = vdwg.mxu0
        %2273 = vmatprep.subr.mxu0 0.0
        %v2274 = vand.u32 %v1822, 4294901760
        %v2275 = vsub.f32 %v1822, %v2274
        %v2276 = vand.u32 %v2275, 4294901760
        %2277 = vmatpush1.msra.mxu0 %v2276
        %2278 = vmatprep.subr.mxu0 0.0
        %v2279 = vand.u32 %v1823, 4294901760
        %v2280 = vsub.f32 %v1823, %v2279
        %v2281 = vand.u32 %v2280, 4294901760
        %2282 = vmatpush1.msra.mxu0 %v2281
        %2283 = vmatprep.subr.mxu0 0.0
        %v2284 = vand.u32 %v1824, 4294901760
        %v2285 = vsub.f32 %v1824, %v2284
        %v2286 = vand.u32 %v2285, 4294901760
        %2287 = vmatpush1.msra.mxu0 %v2286
        %2288 = vmatprep.subr.mxu0 0.0
        %v2289 = vand.u32 %v1825, 4294901760
        %v2290 = vsub.f32 %v1825, %v2289
        %v2291 = vand.u32 %v2290, 4294901760
        %2292 = vmatpush1.msra.mxu0 %v2291
        %2293 = vmatprep.subr.mxu0 0.0
        %v2294 = vand.u32 %v1826, 4294901760
        %v2295 = vsub.f32 %v1826, %v2294
        %v2296 = vand.u32 %v2295, 4294901760
        %2297 = vmatpush1.msra.mxu0 %v2296
        %2298 = vmatprep.subr.mxu0 0.0
        %v2299 = vand.u32 %v1827, 4294901760
        %v2300 = vsub.f32 %v1827, %v2299
        %v2301 = vand.u32 %v2300, 4294901760
        %2302 = vmatpush1.msra.mxu0 %v2301
        %2303 = vmatprep.subr.mxu0 0.0
        %v2304 = vand.u32 %v1828, 4294901760
        %v2305 = vsub.f32 %v1828, %v2304
        %v2306 = vand.u32 %v2305, 4294901760
        %2307 = vmatpush1.msra.mxu0 %v2306
        %2308 = vmatprep.subr.mxu0 0.0
        %v2309 = vand.u32 %v1829, 4294901760
        %v2310 = vsub.f32 %v1829, %v2309
        %v2311 = vand.u32 %v2310, 4294901760
        %2312 = vmatpush1.msra.mxu0 %v2311
        %2313 = vmatprep.subr.mxu0 0.0
        %v2314 = vand.u32 %v1830, 4294901760
        %v2315 = vsub.f32 %v1830, %v2314
        %v2316 = vand.u32 %v2315, 4294901760
        %2317 = vmatpush1.msra.mxu0 %v2316
        %2318 = vmatprep.subr.mxu0 0.0
        %v2319 = vand.u32 %v1831, 4294901760
        %v2320 = vsub.f32 %v1831, %v2319
        %v2321 = vand.u32 %v2320, 4294901760
        %2322 = vmatpush1.msra.mxu0 %v2321
        %2323 = vmatprep.subr.mxu0 0.0
        %v2324 = vand.u32 %v1832, 4294901760
        %v2325 = vsub.f32 %v1832, %v2324
        %v2326 = vand.u32 %v2325, 4294901760
        %2327 = vmatpush1.msra.mxu0 %v2326
        %2328 = vmatprep.subr.mxu0 0.0
        %v2329 = vand.u32 %v1833, 4294901760
        %v2330 = vsub.f32 %v1833, %v2329
        %v2331 = vand.u32 %v2330, 4294901760
        %2332 = vmatpush1.msra.mxu0 %v2331
        %2333 = vmatprep.subr.mxu0 0.0
        %v2334 = vand.u32 %v1834, 4294901760
        %v2335 = vsub.f32 %v1834, %v2334
        %v2336 = vand.u32 %v2335, 4294901760
        %2337 = vmatpush1.msra.mxu0 %v2336
        %2338 = vmatprep.subr.mxu0 0.0
        %v2339 = vand.u32 %v1835, 4294901760
        %v2340 = vsub.f32 %v1835, %v2339
        %v2341 = vand.u32 %v2340, 4294901760
        %2342 = vmatpush1.msra.mxu0 %v2341
        %2343 = vmatprep.subr.mxu0 0.0
        %v2344 = vand.u32 %v1836, 4294901760
        %v2345 = vsub.f32 %v1836, %v2344
        %v2346 = vand.u32 %v2345, 4294901760
        %2347 = vmatpush1.msra.mxu0 %v2346
        %2348 = vmatprep.subr.mxu0 0.0
        %v2349 = vand.u32 %v1837, 4294901760
        %v2350 = vsub.f32 %v1837, %v2349
        %v2351 = vand.u32 %v2350, 4294901760
        %2352 = vmatpush1.msra.mxu0 %v2351
        %2353 = vmatprep.subr.mxu0 0.0
        %2354 = vmatpush1.msra.mxu0 0.0
        %2355 = vmatprep.subr.mxu0 0.0
        %2356 = vmatpush1.msra.mxu0 0.0
        %2357 = vmatprep.subr.mxu0 0.0
        %2358 = vmatpush1.msra.mxu0 0.0
        %2359 = vmatprep.subr.mxu0 0.0
        %2360 = vmatpush1.msra.mxu0 0.0
        %2361 = vmatprep.subr.mxu0 0.0
        %2362 = vmatpush1.msra.mxu0 0.0
        %2363 = vmatprep.subr.mxu0 0.0
        %2364 = vmatpush1.msra.mxu0 0.0
        %2365 = vmatprep.subr.mxu0 0.0
        %2366 = vmatpush1.msra.mxu0 0.0
        %2367 = vmatprep.subr.mxu0 0.0
        %2368 = vmatpush1.msra.mxu0 0.0
        %2369 = vmatprep.subr.mxu0 0.0
        %2370 = vmatpush1.msra.mxu0 0.0
        %2371 = vmatprep.subr.mxu0 0.0
        %2372 = vmatpush1.msra.mxu0 0.0
        %2373 = vmatprep.subr.mxu0 0.0
        %2374 = vmatpush1.msra.mxu0 0.0
        %2375 = vmatprep.subr.mxu0 0.0
        %2376 = vmatpush1.msra.mxu0 0.0
        %2377 = vmatprep.subr.mxu0 0.0
        %2378 = vmatpush1.msra.mxu0 0.0
        %2379 = vmatprep.subr.mxu0 0.0
        %2380 = vmatpush1.msra.mxu0 0.0
        %2381 = vmatprep.subr.mxu0 0.0
        %2382 = vmatpush1.msra.mxu0 0.0
        %2383 = vmatprep.subr.mxu0 0.0
        %2384 = vmatpush1.msra.mxu0 0.0
        %2385 = vmatprep.mubr.f32.mxu0 0.0
        %v2386 = vand.u32 %v1821, 4294901760
        %2387 = vmatmul.mubr.f32.gmra.mrb[0].mxu0 %v2386
        %v2388 = vpop.f32.mrb[0].mxu0
        %v2389 = vadd.f32 %v2270, %v2388
        %v2390 = vpop.f32.mrb[0].mxu0
        %2391 = vdwg.mxu0
        %2392 = vmatprep.subr.mxu0 0.0
        %v2393 = vand.u32 %v1822, 4294901760
        %2394 = vmatpush1.msra.mxu0 %v2393
        %2395 = vmatprep.subr.mxu0 0.0
        %v2396 = vand.u32 %v1823, 4294901760
        %2397 = vmatpush1.msra.mxu0 %v2396
        %2398 = vmatprep.subr.mxu0 0.0
        %v2399 = vand.u32 %v1824, 4294901760
        %2400 = vmatpush1.msra.mxu0 %v2399
        %2401 = vmatprep.subr.mxu0 0.0
        %v2402 = vand.u32 %v1825, 4294901760
        %2403 = vmatpush1.msra.mxu0 %v2402
        %2404 = vmatprep.subr.mxu0 0.0
        %v2405 = vand.u32 %v1826, 4294901760
        %2406 = vmatpush1.msra.mxu0 %v2405
        %2407 = vmatprep.subr.mxu0 0.0
        %v2408 = vand.u32 %v1827, 4294901760
        %2409 = vmatpush1.msra.mxu0 %v2408
        %2410 = vmatprep.subr.mxu0 0.0
        %v2411 = vand.u32 %v1828, 4294901760
        %2412 = vmatpush1.msra.mxu0 %v2411
        %2413 = vmatprep.subr.mxu0 0.0
        %v2414 = vand.u32 %v1829, 4294901760
        %2415 = vmatpush1.msra.mxu0 %v2414
        %2416 = vmatprep.subr.mxu0 0.0
        %v2417 = vand.u32 %v1830, 4294901760
        %2418 = vmatpush1.msra.mxu0 %v2417
        %2419 = vmatprep.subr.mxu0 0.0
        %v2420 = vand.u32 %v1831, 4294901760
        %2421 = vmatpush1.msra.mxu0 %v2420
        %2422 = vmatprep.subr.mxu0 0.0
        %v2423 = vand.u32 %v1832, 4294901760
        %2424 = vmatpush1.msra.mxu0 %v2423
        %2425 = vmatprep.subr.mxu0 0.0
        %v2426 = vand.u32 %v1833, 4294901760
        %2427 = vmatpush1.msra.mxu0 %v2426
        %2428 = vmatprep.subr.mxu0 0.0
        %v2429 = vand.u32 %v1834, 4294901760
        %2430 = vmatpush1.msra.mxu0 %v2429
        %2431 = vmatprep.subr.mxu0 0.0
        %v2432 = vand.u32 %v1835, 4294901760
        %2433 = vmatpush1.msra.mxu0 %v2432
        %2434 = vmatprep.subr.mxu0 0.0
        %v2435 = vand.u32 %v1836, 4294901760
        %2436 = vmatpush1.msra.mxu0 %v2435
        %2437 = vmatprep.subr.mxu0 0.0
        %v2438 = vand.u32 %v1837, 4294901760
        %2439 = vmatpush1.msra.mxu0 %v2438
        %2440 = vmatprep.subr.mxu0 0.0
        %2441 = vmatpush1.msra.mxu0 0.0
        %2442 = vmatprep.subr.mxu0 0.0
        %2443 = vmatpush1.msra.mxu0 0.0
        %2444 = vmatprep.subr.mxu0 0.0
        %2445 = vmatpush1.msra.mxu0 0.0
        %2446 = vmatprep.subr.mxu0 0.0
        %2447 = vmatpush1.msra.mxu0 0.0
        %2448 = vmatprep.subr.mxu0 0.0
        %2449 = vmatpush1.msra.mxu0 0.0
        %2450 = vmatprep.subr.mxu0 0.0
        %2451 = vmatpush1.msra.mxu0 0.0
        %2452 = vmatprep.subr.mxu0 0.0
        %2453 = vmatpush1.msra.mxu0 0.0
        %2454 = vmatprep.subr.mxu0 0.0
        %2455 = vmatpush1.msra.mxu0 0.0
        %2456 = vmatprep.subr.mxu0 0.0
        %2457 = vmatpush1.msra.mxu0 0.0
        %2458 = vmatprep.subr.mxu0 0.0
        %2459 = vmatpush1.msra.mxu0 0.0
        %2460 = vmatprep.subr.mxu0 0.0
        %2461 = vmatpush1.msra.mxu0 0.0
        %2462 = vmatprep.subr.mxu0 0.0
        %2463 = vmatpush1.msra.mxu0 0.0
        %2464 = vmatprep.subr.mxu0 0.0
        %2465 = vmatpush1.msra.mxu0 0.0
        %2466 = vmatprep.subr.mxu0 0.0
        %2467 = vmatpush1.msra.mxu0 0.0
        %2468 = vmatprep.subr.mxu0 0.0
        %2469 = vmatpush1.msra.mxu0 0.0
        %2470 = vmatprep.subr.mxu0 0.0
        %2471 = vmatpush1.msra.mxu0 0.0
        %2472 = vmatprep.mubr.f32.mxu0 0.0
        %v2473 = vand.u32 %v1821, 4294901760
        %2474 = vmatmul.mubr.f32.gmra.mrb[0].mxu0 %v2473
        %v2475 = vpop.f32.mrb[0].mxu0
        %v2476 = vadd.f32 %v2389, %v2475
        %v2477 = vpop.f32.mrb[0].mxu0
        %2478 = vdwg.mxu0
        %2479 = vmatprep.subr.mxu0 0.0
        %v2480 = vand.u32 %v1805, 4294901760
        %2481 = vmatpush1.msra.mxu0 %v2480
        %2482 = vmatprep.subr.mxu0 0.0
        %v2483 = vand.u32 %v1806, 4294901760
        %2484 = vmatpush1.msra.mxu0 %v2483
        %2485 = vmatprep.subr.mxu0 0.0
        %v2486 = vand.u32 %v1807, 4294901760
        %2487 = vmatpush1.msra.mxu0 %v2486
        %2488 = vmatprep.subr.mxu0 0.0
        %v2489 = vand.u32 %v1808, 4294901760
        %2490 = vmatpush1.msra.mxu0 %v2489
        %2491 = vmatprep.subr.mxu0 0.0
        %v2492 = vand.u32 %v1809, 4294901760
        %2493 = vmatpush1.msra.mxu0 %v2492
        %2494 = vmatprep.subr.mxu0 0.0
        %v2495 = vand.u32 %v1810, 4294901760
        %2496 = vmatpush1.msra.mxu0 %v2495
        %2497 = vmatprep.subr.mxu0 0.0
        %v2498 = vand.u32 %v1811, 4294901760
        %2499 = vmatpush1.msra.mxu0 %v2498
        %2500 = vmatprep.subr.mxu0 0.0
        %v2501 = vand.u32 %v1812, 4294901760
        %2502 = vmatpush1.msra.mxu0 %v2501
        %2503 = vmatprep.subr.mxu0 0.0
        %v2504 = vand.u32 %v1813, 4294901760
        %2505 = vmatpush1.msra.mxu0 %v2504
        %2506 = vmatprep.subr.mxu0 0.0
        %v2507 = vand.u32 %v1814, 4294901760
        %2508 = vmatpush1.msra.mxu0 %v2507
        %2509 = vmatprep.subr.mxu0 0.0
        %v2510 = vand.u32 %v1815, 4294901760
        %2511 = vmatpush1.msra.mxu0 %v2510
        %2512 = vmatprep.subr.mxu0 0.0
        %v2513 = vand.u32 %v1816, 4294901760
        %2514 = vmatpush1.msra.mxu0 %v2513
        %2515 = vmatprep.subr.mxu0 0.0
        %v2516 = vand.u32 %v1817, 4294901760
        %2517 = vmatpush1.msra.mxu0 %v2516
        %2518 = vmatprep.subr.mxu0 0.0
        %v2519 = vand.u32 %v1818, 4294901760
        %2520 = vmatpush1.msra.mxu0 %v2519
        %2521 = vmatprep.subr.mxu0 0.0
        %v2522 = vand.u32 %v1819, 4294901760
        %2523 = vmatpush1.msra.mxu0 %v2522
        %2524 = vmatprep.subr.mxu0 0.0
        %v2525 = vand.u32 %v1820, 4294901760
        %2526 = vmatpush1.msra.mxu0 %v2525
        %2527 = vmatprep.subr.mxu0 0.0
        %2528 = vmatpush1.msra.mxu0 0.0
        %2529 = vmatprep.subr.mxu0 0.0
        %2530 = vmatpush1.msra.mxu0 0.0
        %2531 = vmatprep.subr.mxu0 0.0
        %2532 = vmatpush1.msra.mxu0 0.0
        %2533 = vmatprep.subr.mxu0 0.0
        %2534 = vmatpush1.msra.mxu0 0.0
        %2535 = vmatprep.subr.mxu0 0.0
        %2536 = vmatpush1.msra.mxu0 0.0
        %2537 = vmatprep.subr.mxu0 0.0
        %2538 = vmatpush1.msra.mxu0 0.0
        %2539 = vmatprep.subr.mxu0 0.0
        %2540 = vmatpush1.msra.mxu0 0.0
        %2541 = vmatprep.subr.mxu0 0.0
        %2542 = vmatpush1.msra.mxu0 0.0
        %2543 = vmatprep.subr.mxu0 0.0
        %2544 = vmatpush1.msra.mxu0 0.0
        %2545 = vmatprep.subr.mxu0 0.0
        %2546 = vmatpush1.msra.mxu0 0.0
        %2547 = vmatprep.subr.mxu0 0.0
        %2548 = vmatpush1.msra.mxu0 0.0
        %2549 = vmatprep.subr.mxu0 0.0
        %2550 = vmatpush1.msra.mxu0 0.0
        %2551 = vmatprep.subr.mxu0 0.0
        %2552 = vmatpush1.msra.mxu0 0.0
        %2553 = vmatprep.subr.mxu0 0.0
        %2554 = vmatpush1.msra.mxu0 0.0
        %2555 = vmatprep.subr.mxu0 0.0
        %2556 = vmatpush1.msra.mxu0 0.0
        %2557 = vmatprep.subr.mxu0 0.0
        %2558 = vmatpush1.msra.mxu0 0.0
        %2559 = vmatprep.mubr.f32.mxu0 0.0
        %v2560 = vand.u32 %v1803, 4294901760
        %v2561 = vsub.f32 %v1803, %v2560
        %v2562 = vand.u32 %v2561, 4294901760
        %v2563 = vsub.f32 %v2561, %v2562
        %v2564 = vand.u32 %v2563, 4294901760
        %2565 = vmatmul.mubr.f32.gmra.mrb[0].mxu0 %v2564
        %v2566 = vpop.f32.mrb[0].mxu0
        %v2567 = vadd.f32 %v2476, %v2566
        %v2568 = vpop.f32.mrb[0].mxu0
        %2569 = vdwg.mxu0
        %2570 = vmatprep.subr.mxu0 0.0
        %v2571 = vand.u32 %v1805, 4294901760
        %v2572 = vsub.f32 %v1805, %v2571
        %v2573 = vand.u32 %v2572, 4294901760
        %v2574 = vsub.f32 %v2572, %v2573
        %v2575 = vand.u32 %v2574, 4294901760
        %2576 = vmatpush1.msra.mxu0 %v2575
        %2577 = vmatprep.subr.mxu0 0.0
        %v2578 = vand.u32 %v1806, 4294901760
        %v2579 = vsub.f32 %v1806, %v2578
        %v2580 = vand.u32 %v2579, 4294901760
        %v2581 = vsub.f32 %v2579, %v2580
        %v2582 = vand.u32 %v2581, 4294901760
        %2583 = vmatpush1.msra.mxu0 %v2582
        %2584 = vmatprep.subr.mxu0 0.0
        %v2585 = vand.u32 %v1807, 4294901760
        %v2586 = vsub.f32 %v1807, %v2585
        %v2587 = vand.u32 %v2586, 4294901760
        %v2588 = vsub.f32 %v2586, %v2587
        %v2589 = vand.u32 %v2588, 4294901760
        %2590 = vmatpush1.msra.mxu0 %v2589
        %2591 = vmatprep.subr.mxu0 0.0
        %v2592 = vand.u32 %v1808, 4294901760
        %v2593 = vsub.f32 %v1808, %v2592
        %v2594 = vand.u32 %v2593, 4294901760
        %v2595 = vsub.f32 %v2593, %v2594
        %v2596 = vand.u32 %v2595, 4294901760
        %2597 = vmatpush1.msra.mxu0 %v2596
        %2598 = vmatprep.subr.mxu0 0.0
        %v2599 = vand.u32 %v1809, 4294901760
        %v2600 = vsub.f32 %v1809, %v2599
        %v2601 = vand.u32 %v2600, 4294901760
        %v2602 = vsub.f32 %v2600, %v2601
        %v2603 = vand.u32 %v2602, 4294901760
        %2604 = vmatpush1.msra.mxu0 %v2603
        %2605 = vmatprep.subr.mxu0 0.0
        %v2606 = vand.u32 %v1810, 4294901760
        %v2607 = vsub.f32 %v1810, %v2606
        %v2608 = vand.u32 %v2607, 4294901760
        %v2609 = vsub.f32 %v2607, %v2608
        %v2610 = vand.u32 %v2609, 4294901760
        %2611 = vmatpush1.msra.mxu0 %v2610
        %2612 = vmatprep.subr.mxu0 0.0
        %v2613 = vand.u32 %v1811, 4294901760
        %v2614 = vsub.f32 %v1811, %v2613
        %v2615 = vand.u32 %v2614, 4294901760
        %v2616 = vsub.f32 %v2614, %v2615
        %v2617 = vand.u32 %v2616, 4294901760
        %2618 = vmatpush1.msra.mxu0 %v2617
        %2619 = vmatprep.subr.mxu0 0.0
        %v2620 = vand.u32 %v1812, 4294901760
        %v2621 = vsub.f32 %v1812, %v2620
        %v2622 = vand.u32 %v2621, 4294901760
        %v2623 = vsub.f32 %v2621, %v2622
        %v2624 = vand.u32 %v2623, 4294901760
        %2625 = vmatpush1.msra.mxu0 %v2624
        %2626 = vmatprep.subr.mxu0 0.0
        %v2627 = vand.u32 %v1813, 4294901760
        %v2628 = vsub.f32 %v1813, %v2627
        %v2629 = vand.u32 %v2628, 4294901760
        %v2630 = vsub.f32 %v2628, %v2629
        %v2631 = vand.u32 %v2630, 4294901760
        %2632 = vmatpush1.msra.mxu0 %v2631
        %2633 = vmatprep.subr.mxu0 0.0
        %v2634 = vand.u32 %v1814, 4294901760
        %v2635 = vsub.f32 %v1814, %v2634
        %v2636 = vand.u32 %v2635, 4294901760
        %v2637 = vsub.f32 %v2635, %v2636
        %v2638 = vand.u32 %v2637, 4294901760
        %2639 = vmatpush1.msra.mxu0 %v2638
        %2640 = vmatprep.subr.mxu0 0.0
        %v2641 = vand.u32 %v1815, 4294901760
        %v2642 = vsub.f32 %v1815, %v2641
        %v2643 = vand.u32 %v2642, 4294901760
        %v2644 = vsub.f32 %v2642, %v2643
        %v2645 = vand.u32 %v2644, 4294901760
        %2646 = vmatpush1.msra.mxu0 %v2645
        %2647 = vmatprep.subr.mxu0 0.0
        %v2648 = vand.u32 %v1816, 4294901760
        %v2649 = vsub.f32 %v1816, %v2648
        %v2650 = vand.u32 %v2649, 4294901760
        %v2651 = vsub.f32 %v2649, %v2650
        %v2652 = vand.u32 %v2651, 4294901760
        %2653 = vmatpush1.msra.mxu0 %v2652
        %2654 = vmatprep.subr.mxu0 0.0
        %v2655 = vand.u32 %v1817, 4294901760
        %v2656 = vsub.f32 %v1817, %v2655
        %v2657 = vand.u32 %v2656, 4294901760
        %v2658 = vsub.f32 %v2656, %v2657
        %v2659 = vand.u32 %v2658, 4294901760
        %2660 = vmatpush1.msra.mxu0 %v2659
        %2661 = vmatprep.subr.mxu0 0.0
        %v2662 = vand.u32 %v1818, 4294901760
        %v2663 = vsub.f32 %v1818, %v2662
        %v2664 = vand.u32 %v2663, 4294901760
        %v2665 = vsub.f32 %v2663, %v2664
        %v2666 = vand.u32 %v2665, 4294901760
        %2667 = vmatpush1.msra.mxu0 %v2666
        %2668 = vmatprep.subr.mxu0 0.0
        %v2669 = vand.u32 %v1819, 4294901760
        %v2670 = vsub.f32 %v1819, %v2669
        %v2671 = vand.u32 %v2670, 4294901760
        %v2672 = vsub.f32 %v2670, %v2671
        %v2673 = vand.u32 %v2672, 4294901760
        %2674 = vmatpush1.msra.mxu0 %v2673
        %2675 = vmatprep.subr.mxu0 0.0
        %v2676 = vand.u32 %v1820, 4294901760
        %v2677 = vsub.f32 %v1820, %v2676
        %v2678 = vand.u32 %v2677, 4294901760
        %v2679 = vsub.f32 %v2677, %v2678
        %v2680 = vand.u32 %v2679, 4294901760
        %2681 = vmatpush1.msra.mxu0 %v2680
        %2682 = vmatprep.subr.mxu0 0.0
        %2683 = vmatpush1.msra.mxu0 0.0
        %2684 = vmatprep.subr.mxu0 0.0
        %2685 = vmatpush1.msra.mxu0 0.0
        %2686 = vmatprep.subr.mxu0 0.0
        %2687 = vmatpush1.msra.mxu0 0.0
        %2688 = vmatprep.subr.mxu0 0.0
        %2689 = vmatpush1.msra.mxu0 0.0
        %2690 = vmatprep.subr.mxu0 0.0
        %2691 = vmatpush1.msra.mxu0 0.0
        %2692 = vmatprep.subr.mxu0 0.0
        %2693 = vmatpush1.msra.mxu0 0.0
        %2694 = vmatprep.subr.mxu0 0.0
        %2695 = vmatpush1.msra.mxu0 0.0
        %2696 = vmatprep.subr.mxu0 0.0
        %2697 = vmatpush1.msra.mxu0 0.0
        %2698 = vmatprep.subr.mxu0 0.0
        %2699 = vmatpush1.msra.mxu0 0.0
        %2700 = vmatprep.subr.mxu0 0.0
        %2701 = vmatpush1.msra.mxu0 0.0
        %2702 = vmatprep.subr.mxu0 0.0
        %2703 = vmatpush1.msra.mxu0 0.0
        %2704 = vmatprep.subr.mxu0 0.0
        %2705 = vmatpush1.msra.mxu0 0.0
        %2706 = vmatprep.subr.mxu0 0.0
        %2707 = vmatpush1.msra.mxu0 0.0
        %2708 = vmatprep.subr.mxu0 0.0
        %2709 = vmatpush1.msra.mxu0 0.0
        %2710 = vmatprep.subr.mxu0 0.0
        %2711 = vmatpush1.msra.mxu0 0.0
        %2712 = vmatprep.subr.mxu0 0.0
        %2713 = vmatpush1.msra.mxu0 0.0
        %2714 = vmatprep.mubr.f32.mxu0 0.0
        %v2715 = vand.u32 %v1803, 4294901760
        %2716 = vmatmul.mubr.f32.gmra.mrb[0].mxu0 %v2715
        %v2717 = vpop.f32.mrb[0].mxu0
        %v2718 = vadd.f32 %v2567, %v2717
        %v2719 = vpop.f32.mrb[0].mxu0
        %2720 = vdwg.mxu0
        %2721 = vmatprep.subr.mxu0 0.0
        %v2722 = vand.u32 %v1805, 4294901760
        %v2723 = vsub.f32 %v1805, %v2722
        %2724 = vmatpush1.msra.mxu0 %v2723
        %2725 = vmatprep.subr.mxu0 0.0
        %v2726 = vand.u32 %v1806, 4294901760
        %v2727 = vsub.f32 %v1806, %v2726
        %2728 = vmatpush1.msra.mxu0 %v2727
        %2729 = vmatprep.subr.mxu0 0.0
        %v2730 = vand.u32 %v1807, 4294901760
        %v2731 = vsub.f32 %v1807, %v2730
        %2732 = vmatpush1.msra.mxu0 %v2731
        %2733 = vmatprep.subr.mxu0 0.0
        %v2734 = vand.u32 %v1808, 4294901760
        %v2735 = vsub.f32 %v1808, %v2734
        %2736 = vmatpush1.msra.mxu0 %v2735
        %2737 = vmatprep.subr.mxu0 0.0
        %v2738 = vand.u32 %v1809, 4294901760
        %v2739 = vsub.f32 %v1809, %v2738
        %2740 = vmatpush1.msra.mxu0 %v2739
        %2741 = vmatprep.subr.mxu0 0.0
        %v2742 = vand.u32 %v1810, 4294901760
        %v2743 = vsub.f32 %v1810, %v2742
        %2744 = vmatpush1.msra.mxu0 %v2743
        %2745 = vmatprep.subr.mxu0 0.0
        %v2746 = vand.u32 %v1811, 4294901760
        %v2747 = vsub.f32 %v1811, %v2746
        %2748 = vmatpush1.msra.mxu0 %v2747
        %2749 = vmatprep.subr.mxu0 0.0
        %v2750 = vand.u32 %v1812, 4294901760
        %v2751 = vsub.f32 %v1812, %v2750
        %2752 = vmatpush1.msra.mxu0 %v2751
        %2753 = vmatprep.subr.mxu0 0.0
        %v2754 = vand.u32 %v1813, 4294901760
        %v2755 = vsub.f32 %v1813, %v2754
        %2756 = vmatpush1.msra.mxu0 %v2755
        %2757 = vmatprep.subr.mxu0 0.0
        %v2758 = vand.u32 %v1814, 4294901760
        %v2759 = vsub.f32 %v1814, %v2758
        %2760 = vmatpush1.msra.mxu0 %v2759
        %2761 = vmatprep.subr.mxu0 0.0
        %v2762 = vand.u32 %v1815, 4294901760
        %v2763 = vsub.f32 %v1815, %v2762
        %2764 = vmatpush1.msra.mxu0 %v2763
        %2765 = vmatprep.subr.mxu0 0.0
        %v2766 = vand.u32 %v1816, 4294901760
        %v2767 = vsub.f32 %v1816, %v2766
        %2768 = vmatpush1.msra.mxu0 %v2767
        %2769 = vmatprep.subr.mxu0 0.0
        %v2770 = vand.u32 %v1817, 4294901760
        %v2771 = vsub.f32 %v1817, %v2770
        %2772 = vmatpush1.msra.mxu0 %v2771
        %2773 = vmatprep.subr.mxu0 0.0
        %v2774 = vand.u32 %v1818, 4294901760
        %v2775 = vsub.f32 %v1818, %v2774
        %2776 = vmatpush1.msra.mxu0 %v2775
        %2777 = vmatprep.subr.mxu0 0.0
        %v2778 = vand.u32 %v1819, 4294901760
        %v2779 = vsub.f32 %v1819, %v2778
        %2780 = vmatpush1.msra.mxu0 %v2779
        %2781 = vmatprep.subr.mxu0 0.0
        %v2782 = vand.u32 %v1820, 4294901760
        %v2783 = vsub.f32 %v1820, %v2782
        %2784 = vmatpush1.msra.mxu0 %v2783
        %2785 = vmatprep.subr.mxu0 0.0
        %2786 = vmatpush1.msra.mxu0 0.0
        %2787 = vmatprep.subr.mxu0 0.0
        %2788 = vmatpush1.msra.mxu0 0.0
        %2789 = vmatprep.subr.mxu0 0.0
        %2790 = vmatpush1.msra.mxu0 0.0
        %2791 = vmatprep.subr.mxu0 0.0
        %2792 = vmatpush1.msra.mxu0 0.0
        %2793 = vmatprep.subr.mxu0 0.0
        %2794 = vmatpush1.msra.mxu0 0.0
        %2795 = vmatprep.subr.mxu0 0.0
        %2796 = vmatpush1.msra.mxu0 0.0
        %2797 = vmatprep.subr.mxu0 0.0
        %2798 = vmatpush1.msra.mxu0 0.0
        %2799 = vmatprep.subr.mxu0 0.0
        %2800 = vmatpush1.msra.mxu0 0.0
        %2801 = vmatprep.subr.mxu0 0.0
        %2802 = vmatpush1.msra.mxu0 0.0
        %2803 = vmatprep.subr.mxu0 0.0
        %2804 = vmatpush1.msra.mxu0 0.0
        %2805 = vmatprep.subr.mxu0 0.0
        %2806 = vmatpush1.msra.mxu0 0.0
        %2807 = vmatprep.subr.mxu0 0.0
        %2808 = vmatpush1.msra.mxu0 0.0
        %2809 = vmatprep.subr.mxu0 0.0
        %2810 = vmatpush1.msra.mxu0 0.0
        %2811 = vmatprep.subr.mxu0 0.0
        %2812 = vmatpush1.msra.mxu0 0.0
        %2813 = vmatprep.subr.mxu0 0.0
        %2814 = vmatpush1.msra.mxu0 0.0
        %2815 = vmatprep.subr.mxu0 0.0
        %2816 = vmatpush1.msra.mxu0 0.0
        %2817 = vmatprep.mubr.f32.mxu0 0.0
        %v2818 = vand.u32 %v1803, 4294901760
        %v2819 = vsub.f32 %v1803, %v2818
        %2820 = vmatmul.mubr.f32.gmra.mrb[0].mxu0 %v2819
        %v2821 = vpop.f32.mrb[0].mxu0
        %v2822 = vadd.f32 %v2718, %v2821
        %v2823 = vpop.f32.mrb[0].mxu0
        %2824 = vdwg.mxu0
        %2825 = vmatprep.subr.mxu0 0.0
        %v2826 = vand.u32 %v1805, 4294901760
        %2827 = vmatpush1.msra.mxu0 %v2826
        %2828 = vmatprep.subr.mxu0 0.0
        %v2829 = vand.u32 %v1806, 4294901760
        %2830 = vmatpush1.msra.mxu0 %v2829
        %2831 = vmatprep.subr.mxu0 0.0
        %v2832 = vand.u32 %v1807, 4294901760
        %2833 = vmatpush1.msra.mxu0 %v2832
        %2834 = vmatprep.subr.mxu0 0.0
        %v2835 = vand.u32 %v1808, 4294901760
        %2836 = vmatpush1.msra.mxu0 %v2835
        %2837 = vmatprep.subr.mxu0 0.0
        %v2838 = vand.u32 %v1809, 4294901760
        %2839 = vmatpush1.msra.mxu0 %v2838
        %2840 = vmatprep.subr.mxu0 0.0
        %v2841 = vand.u32 %v1810, 4294901760
        %2842 = vmatpush1.msra.mxu0 %v2841
        %2843 = vmatprep.subr.mxu0 0.0
        %v2844 = vand.u32 %v1811, 4294901760
        %2845 = vmatpush1.msra.mxu0 %v2844
        %2846 = vmatprep.subr.mxu0 0.0
        %v2847 = vand.u32 %v1812, 4294901760
        %2848 = vmatpush1.msra.mxu0 %v2847
        %2849 = vmatprep.subr.mxu0 0.0
        %v2850 = vand.u32 %v1813, 4294901760
        %2851 = vmatpush1.msra.mxu0 %v2850
        %2852 = vmatprep.subr.mxu0 0.0
        %v2853 = vand.u32 %v1814, 4294901760
        %2854 = vmatpush1.msra.mxu0 %v2853
        %2855 = vmatprep.subr.mxu0 0.0
        %v2856 = vand.u32 %v1815, 4294901760
        %2857 = vmatpush1.msra.mxu0 %v2856
        %2858 = vmatprep.subr.mxu0 0.0
        %v2859 = vand.u32 %v1816, 4294901760
        %2860 = vmatpush1.msra.mxu0 %v2859
        %2861 = vmatprep.subr.mxu0 0.0
        %v2862 = vand.u32 %v1817, 4294901760
        %2863 = vmatpush1.msra.mxu0 %v2862
        %2864 = vmatprep.subr.mxu0 0.0
        %v2865 = vand.u32 %v1818, 4294901760
        %2866 = vmatpush1.msra.mxu0 %v2865
        %2867 = vmatprep.subr.mxu0 0.0
        %v2868 = vand.u32 %v1819, 4294901760
        %2869 = vmatpush1.msra.mxu0 %v2868
        %2870 = vmatprep.subr.mxu0 0.0
        %v2871 = vand.u32 %v1820, 4294901760
        %2872 = vmatpush1.msra.mxu0 %v2871
        %2873 = vmatprep.subr.mxu0 0.0
        %2874 = vmatpush1.msra.mxu0 0.0
        %2875 = vmatprep.subr.mxu0 0.0
        %2876 = vmatpush1.msra.mxu0 0.0
        %2877 = vmatprep.subr.mxu0 0.0
        %2878 = vmatpush1.msra.mxu0 0.0
        %2879 = vmatprep.subr.mxu0 0.0
        %2880 = vmatpush1.msra.mxu0 0.0
        %2881 = vmatprep.subr.mxu0 0.0
        %2882 = vmatpush1.msra.mxu0 0.0
        %2883 = vmatprep.subr.mxu0 0.0
        %2884 = vmatpush1.msra.mxu0 0.0
        %2885 = vmatprep.subr.mxu0 0.0
        %2886 = vmatpush1.msra.mxu0 0.0
        %2887 = vmatprep.subr.mxu0 0.0
        %2888 = vmatpush1.msra.mxu0 0.0
        %2889 = vmatprep.subr.mxu0 0.0
        %2890 = vmatpush1.msra.mxu0 0.0
        %2891 = vmatprep.subr.mxu0 0.0
        %2892 = vmatpush1.msra.mxu0 0.0
        %2893 = vmatprep.subr.mxu0 0.0
        %2894 = vmatpush1.msra.mxu0 0.0
        %2895 = vmatprep.subr.mxu0 0.0
        %2896 = vmatpush1.msra.mxu0 0.0
        %2897 = vmatprep.subr.mxu0 0.0
        %2898 = vmatpush1.msra.mxu0 0.0
        %2899 = vmatprep.subr.mxu0 0.0
        %2900 = vmatpush1.msra.mxu0 0.0
        %2901 = vmatprep.subr.mxu0 0.0
        %2902 = vmatpush1.msra.mxu0 0.0
        %2903 = vmatprep.subr.mxu0 0.0
        %2904 = vmatpush1.msra.mxu0 0.0
        %2905 = vmatprep.mubr.f32.mxu0 0.0
        %v2906 = vand.u32 %v1803, 4294901760
        %v2907 = vsub.f32 %v1803, %v2906
        %v2908 = vand.u32 %v2907, 4294901760
        %2909 = vmatmul.mubr.f32.gmra.mrb[0].mxu0 %v2908
        %v2910 = vpop.f32.mrb[0].mxu0
        %v2911 = vadd.f32 %v2822, %v2910
        %v2912 = vpop.f32.mrb[0].mxu0
        %2913 = vdwg.mxu0
        %2914 = vmatprep.subr.mxu0 0.0
        %v2915 = vand.u32 %v1805, 4294901760
        %v2916 = vsub.f32 %v1805, %v2915
        %v2917 = vand.u32 %v2916, 4294901760
        %2918 = vmatpush1.msra.mxu0 %v2917
        %2919 = vmatprep.subr.mxu0 0.0
        %v2920 = vand.u32 %v1806, 4294901760
        %v2921 = vsub.f32 %v1806, %v2920
        %v2922 = vand.u32 %v2921, 4294901760
        %2923 = vmatpush1.msra.mxu0 %v2922
        %2924 = vmatprep.subr.mxu0 0.0
        %v2925 = vand.u32 %v1807, 4294901760
        %v2926 = vsub.f32 %v1807, %v2925
        %v2927 = vand.u32 %v2926, 4294901760
        %2928 = vmatpush1.msra.mxu0 %v2927
        %2929 = vmatprep.subr.mxu0 0.0
        %v2930 = vand.u32 %v1808, 4294901760
        %v2931 = vsub.f32 %v1808, %v2930
        %v2932 = vand.u32 %v2931, 4294901760
        %2933 = vmatpush1.msra.mxu0 %v2932
        %2934 = vmatprep.subr.mxu0 0.0
        %v2935 = vand.u32 %v1809, 4294901760
        %v2936 = vsub.f32 %v1809, %v2935
        %v2937 = vand.u32 %v2936, 4294901760
        %2938 = vmatpush1.msra.mxu0 %v2937
        %2939 = vmatprep.subr.mxu0 0.0
        %v2940 = vand.u32 %v1810, 4294901760
        %v2941 = vsub.f32 %v1810, %v2940
        %v2942 = vand.u32 %v2941, 4294901760
        %2943 = vmatpush1.msra.mxu0 %v2942
        %2944 = vmatprep.subr.mxu0 0.0
        %v2945 = vand.u32 %v1811, 4294901760
        %v2946 = vsub.f32 %v1811, %v2945
        %v2947 = vand.u32 %v2946, 4294901760
        %2948 = vmatpush1.msra.mxu0 %v2947
        %2949 = vmatprep.subr.mxu0 0.0
        %v2950 = vand.u32 %v1812, 4294901760
        %v2951 = vsub.f32 %v1812, %v2950
        %v2952 = vand.u32 %v2951, 4294901760
        %2953 = vmatpush1.msra.mxu0 %v2952
        %2954 = vmatprep.subr.mxu0 0.0
        %v2955 = vand.u32 %v1813, 4294901760
        %v2956 = vsub.f32 %v1813, %v2955
        %v2957 = vand.u32 %v2956, 4294901760
        %2958 = vmatpush1.msra.mxu0 %v2957
        %2959 = vmatprep.subr.mxu0 0.0
        %v2960 = vand.u32 %v1814, 4294901760
        %v2961 = vsub.f32 %v1814, %v2960
        %v2962 = vand.u32 %v2961, 4294901760
        %2963 = vmatpush1.msra.mxu0 %v2962
        %2964 = vmatprep.subr.mxu0 0.0
        %v2965 = vand.u32 %v1815, 4294901760
        %v2966 = vsub.f32 %v1815, %v2965
        %v2967 = vand.u32 %v2966, 4294901760
        %2968 = vmatpush1.msra.mxu0 %v2967
        %2969 = vmatprep.subr.mxu0 0.0
        %v2970 = vand.u32 %v1816, 4294901760
        %v2971 = vsub.f32 %v1816, %v2970
        %v2972 = vand.u32 %v2971, 4294901760
        %2973 = vmatpush1.msra.mxu0 %v2972
        %2974 = vmatprep.subr.mxu0 0.0
        %v2975 = vand.u32 %v1817, 4294901760
        %v2976 = vsub.f32 %v1817, %v2975
        %v2977 = vand.u32 %v2976, 4294901760
        %2978 = vmatpush1.msra.mxu0 %v2977
        %2979 = vmatprep.subr.mxu0 0.0
        %v2980 = vand.u32 %v1818, 4294901760
        %v2981 = vsub.f32 %v1818, %v2980
        %v2982 = vand.u32 %v2981, 4294901760
        %2983 = vmatpush1.msra.mxu0 %v2982
        %2984 = vmatprep.subr.mxu0 0.0
        %v2985 = vand.u32 %v1819, 4294901760
        %v2986 = vsub.f32 %v1819, %v2985
        %v2987 = vand.u32 %v2986, 4294901760
        %2988 = vmatpush1.msra.mxu0 %v2987
        %2989 = vmatprep.subr.mxu0 0.0
        %v2990 = vand.u32 %v1820, 4294901760
        %v2991 = vsub.f32 %v1820, %v2990
        %v2992 = vand.u32 %v2991, 4294901760
        %2993 = vmatpush1.msra.mxu0 %v2992
        %2994 = vmatprep.subr.mxu0 0.0
        %2995 = vmatpush1.msra.mxu0 0.0
        %2996 = vmatprep.subr.mxu0 0.0
        %2997 = vmatpush1.msra.mxu0 0.0
        %2998 = vmatprep.subr.mxu0 0.0
        %2999 = vmatpush1.msra.mxu0 0.0
        %3000 = vmatprep.subr.mxu0 0.0
        %3001 = vmatpush1.msra.mxu0 0.0
        %3002 = vmatprep.subr.mxu0 0.0
        %3003 = vmatpush1.msra.mxu0 0.0
        %3004 = vmatprep.subr.mxu0 0.0
        %3005 = vmatpush1.msra.mxu0 0.0
        %3006 = vmatprep.subr.mxu0 0.0
        %3007 = vmatpush1.msra.mxu0 0.0
        %3008 = vmatprep.subr.mxu0 0.0
        %3009 = vmatpush1.msra.mxu0 0.0
        %3010 = vmatprep.subr.mxu0 0.0
        %3011 = vmatpush1.msra.mxu0 0.0
        %3012 = vmatprep.subr.mxu0 0.0
        %3013 = vmatpush1.msra.mxu0 0.0
        %3014 = vmatprep.subr.mxu0 0.0
        %3015 = vmatpush1.msra.mxu0 0.0
        %3016 = vmatprep.subr.mxu0 0.0
        %3017 = vmatpush1.msra.mxu0 0.0
        %3018 = vmatprep.subr.mxu0 0.0
        %3019 = vmatpush1.msra.mxu0 0.0
        %3020 = vmatprep.subr.mxu0 0.0
        %3021 = vmatpush1.msra.mxu0 0.0
        %3022 = vmatprep.subr.mxu0 0.0
        %3023 = vmatpush1.msra.mxu0 0.0
        %3024 = vmatprep.subr.mxu0 0.0
        %3025 = vmatpush1.msra.mxu0 0.0
        %3026 = vmatprep.mubr.f32.mxu0 0.0
        %v3027 = vand.u32 %v1803, 4294901760
        %3028 = vmatmul.mubr.f32.gmra.mrb[0].mxu0 %v3027
        %v3029 = vpop.f32.mrb[0].mxu0
        %v3030 = vadd.f32 %v2911, %v3029
        %v3031 = vpop.f32.mrb[0].mxu0
        %3032 = vdwg.mxu0
        %3033 = vmatprep.subr.mxu0 0.0
        %v3034 = vand.u32 %v1805, 4294901760
        %3035 = vmatpush1.msra.mxu0 %v3034
        %3036 = vmatprep.subr.mxu0 0.0
        %v3037 = vand.u32 %v1806, 4294901760
        %3038 = vmatpush1.msra.mxu0 %v3037
        %3039 = vmatprep.subr.mxu0 0.0
        %v3040 = vand.u32 %v1807, 4294901760
        %3041 = vmatpush1.msra.mxu0 %v3040
        %3042 = vmatprep.subr.mxu0 0.0
        %v3043 = vand.u32 %v1808, 4294901760
        %3044 = vmatpush1.msra.mxu0 %v3043
        %3045 = vmatprep.subr.mxu0 0.0
        %v3046 = vand.u32 %v1809, 4294901760
        %3047 = vmatpush1.msra.mxu0 %v3046
        %3048 = vmatprep.subr.mxu0 0.0
        %v3049 = vand.u32 %v1810, 4294901760
        %3050 = vmatpush1.msra.mxu0 %v3049
        %3051 = vmatprep.subr.mxu0 0.0
        %v3052 = vand.u32 %v1811, 4294901760
        %3053 = vmatpush1.msra.mxu0 %v3052
        %3054 = vmatprep.subr.mxu0 0.0
        %v3055 = vand.u32 %v1812, 4294901760
        %3056 = vmatpush1.msra.mxu0 %v3055
        %3057 = vmatprep.subr.mxu0 0.0
        %v3058 = vand.u32 %v1813, 4294901760
        %3059 = vmatpush1.msra.mxu0 %v3058
        %3060 = vmatprep.subr.mxu0 0.0
        %v3061 = vand.u32 %v1814, 4294901760
        %3062 = vmatpush1.msra.mxu0 %v3061
        %3063 = vmatprep.subr.mxu0 0.0
        %v3064 = vand.u32 %v1815, 4294901760
        %3065 = vmatpush1.msra.mxu0 %v3064
        %3066 = vmatprep.subr.mxu0 0.0
        %v3067 = vand.u32 %v1816, 4294901760
        %3068 = vmatpush1.msra.mxu0 %v3067
        %3069 = vmatprep.subr.mxu0 0.0
        %v3070 = vand.u32 %v1817, 4294901760
        %3071 = vmatpush1.msra.mxu0 %v3070
        %3072 = vmatprep.subr.mxu0 0.0
        %v3073 = vand.u32 %v1818, 4294901760
        %3074 = vmatpush1.msra.mxu0 %v3073
        %3075 = vmatprep.subr.mxu0 0.0
        %v3076 = vand.u32 %v1819, 4294901760
        %3077 = vmatpush1.msra.mxu0 %v3076
        %3078 = vmatprep.subr.mxu0 0.0
        %v3079 = vand.u32 %v1820, 4294901760
        %3080 = vmatpush1.msra.mxu0 %v3079
        %3081 = vmatprep.subr.mxu0 0.0
        %3082 = vmatpush1.msra.mxu0 0.0
        %3083 = vmatprep.subr.mxu0 0.0
        %3084 = vmatpush1.msra.mxu0 0.0
        %3085 = vmatprep.subr.mxu0 0.0
        %3086 = vmatpush1.msra.mxu0 0.0
        %3087 = vmatprep.subr.mxu0 0.0
        %3088 = vmatpush1.msra.mxu0 0.0
        %3089 = vmatprep.subr.mxu0 0.0
        %3090 = vmatpush1.msra.mxu0 0.0
        %3091 = vmatprep.subr.mxu0 0.0
        %3092 = vmatpush1.msra.mxu0 0.0
        %3093 = vmatprep.subr.mxu0 0.0
        %3094 = vmatpush1.msra.mxu0 0.0
        %3095 = vmatprep.subr.mxu0 0.0
        %3096 = vmatpush1.msra.mxu0 0.0
        %3097 = vmatprep.subr.mxu0 0.0
        %3098 = vmatpush1.msra.mxu0 0.0
        %3099 = vmatprep.subr.mxu0 0.0
        %3100 = vmatpush1.msra.mxu0 0.0
        %3101 = vmatprep.subr.mxu0 0.0
        %3102 = vmatpush1.msra.mxu0 0.0
        %3103 = vmatprep.subr.mxu0 0.0
        %3104 = vmatpush1.msra.mxu0 0.0
        %3105 = vmatprep.subr.mxu0 0.0
        %3106 = vmatpush1.msra.mxu0 0.0
        %3107 = vmatprep.subr.mxu0 0.0
        %3108 = vmatpush1.msra.mxu0 0.0
        %3109 = vmatprep.subr.mxu0 0.0
        %3110 = vmatpush1.msra.mxu0 0.0
        %3111 = vmatprep.subr.mxu0 0.0
        %3112 = vmatpush1.msra.mxu0 0.0
        %3113 = vmatprep.mubr.f32.mxu0 0.0
        %v3114 = vand.u32 %v1803, 4294901760
        %3115 = vmatmul.mubr.f32.gmra.mrb[0].mxu0 %v3114
        %v3116 = vpop.f32.mrb[0].mxu0
        %v3117 = vadd.f32 %v3030, %v3116
        %v3118 = vpop.f32.mrb[0].mxu0
        %3119 = vdwg.mxu0
        %v3120 = vld [vmem:[%s8] sm:$0xff]
        %v3121 = vadd.f32 %v3117, %v3120
        %v3122 = vtanh.pop %v3121
        %3123 = vst [vmem:[%s11] sm:$0xff] %v3122
        %v3124 = vld [vmem:[#allocation9] sm:$0xff]
        %v3125 = vld [vmem:[#allocation9 + $0x8] sm:$0xff]
        %v3126 = vld [vmem:[#allocation9 + $0x10] sm:$0xff]
        %v3127 = vld [vmem:[#allocation9 + $0x18] sm:$0xff]
        %v3128 = vld [vmem:[#allocation9 + $0x20] sm:$0xff]
        %v3129 = vld [vmem:[#allocation9 + $0x28] sm:$0xff]
        %v3130 = vld [vmem:[#allocation9 + $0x30] sm:$0xff]
        %v3131 = vld [vmem:[#allocation9 + $0x38] sm:$0xff]
        %v3132 = vld [vmem:[#allocation9 + $0x40] sm:$0xff]
        %v3133 = vld [vmem:[#allocation9 + $0x48] sm:$0xff]
        %v3134 = vld [vmem:[#allocation9 + $0x50] sm:$0xff]
        %v3135 = vld [vmem:[#allocation9 + $0x58] sm:$0xff]
        %v3136 = vld [vmem:[#allocation9 + $0x60] sm:$0xff]
        %v3137 = vld [vmem:[#allocation9 + $0x68] sm:$0xff]
        %v3138 = vld [vmem:[#allocation9 + $0x70] sm:$0xff]
        %v3139 = vld [vmem:[#allocation9 + $0x78] sm:$0xff]
        %3140 = vmatprep.subr.mxu0 0.0
        %v3141 = vand.u32 %v3124, 4294901760
        %3142 = vmatpush1.msra.mxu0 %v3141
        %3143 = vmatprep.subr.mxu0 0.0
        %v3144 = vand.u32 %v3125, 4294901760
        %3145 = vmatpush1.msra.mxu0 %v3144
        %3146 = vmatprep.subr.mxu0 0.0
        %v3147 = vand.u32 %v3126, 4294901760
        %3148 = vmatpush1.msra.mxu0 %v3147
        %3149 = vmatprep.subr.mxu0 0.0
        %v3150 = vand.u32 %v3127, 4294901760
        %3151 = vmatpush1.msra.mxu0 %v3150
        %3152 = vmatprep.subr.mxu0 0.0
        %v3153 = vand.u32 %v3128, 4294901760
        %3154 = vmatpush1.msra.mxu0 %v3153
        %3155 = vmatprep.subr.mxu0 0.0
        %v3156 = vand.u32 %v3129, 4294901760
        %3157 = vmatpush1.msra.mxu0 %v3156
        %3158 = vmatprep.subr.mxu0 0.0
        %v3159 = vand.u32 %v3130, 4294901760
        %3160 = vmatpush1.msra.mxu0 %v3159
        %3161 = vmatprep.subr.mxu0 0.0
        %v3162 = vand.u32 %v3131, 4294901760
        %3163 = vmatpush1.msra.mxu0 %v3162
        %3164 = vmatprep.subr.mxu0 0.0
        %v3165 = vand.u32 %v3132, 4294901760
        %3166 = vmatpush1.msra.mxu0 %v3165
        %3167 = vmatprep.subr.mxu0 0.0
        %v3168 = vand.u32 %v3133, 4294901760
        %3169 = vmatpush1.msra.mxu0 %v3168
        %3170 = vmatprep.subr.mxu0 0.0
        %v3171 = vand.u32 %v3134, 4294901760
        %3172 = vmatpush1.msra.mxu0 %v3171
        %3173 = vmatprep.subr.mxu0 0.0
        %v3174 = vand.u32 %v3135, 4294901760
        %3175 = vmatpush1.msra.mxu0 %v3174
        %3176 = vmatprep.subr.mxu0 0.0
        %v3177 = vand.u32 %v3136, 4294901760
        %3178 = vmatpush1.msra.mxu0 %v3177
        %3179 = vmatprep.subr.mxu0 0.0
        %v3180 = vand.u32 %v3137, 4294901760
        %3181 = vmatpush1.msra.mxu0 %v3180
        %3182 = vmatprep.subr.mxu0 0.0
        %v3183 = vand.u32 %v3138, 4294901760
        %3184 = vmatpush1.msra.mxu0 %v3183
        %3185 = vmatprep.subr.mxu0 0.0
        %v3186 = vand.u32 %v3139, 4294901760
        %3187 = vmatpush1.msra.mxu0 %v3186
        %3188 = vmatprep.subr.mxu0 0.0
        %3189 = vmatpush1.msra.mxu0 0.0
        %3190 = vmatprep.subr.mxu0 0.0
        %3191 = vmatpush1.msra.mxu0 0.0
        %3192 = vmatprep.subr.mxu0 0.0
        %3193 = vmatpush1.msra.mxu0 0.0
        %3194 = vmatprep.subr.mxu0 0.0
        %3195 = vmatpush1.msra.mxu0 0.0
        %3196 = vmatprep.subr.mxu0 0.0
        %3197 = vmatpush1.msra.mxu0 0.0
        %3198 = vmatprep.subr.mxu0 0.0
        %3199 = vmatpush1.msra.mxu0 0.0
        %3200 = vmatprep.subr.mxu0 0.0
        %3201 = vmatpush1.msra.mxu0 0.0
        %3202 = vmatprep.subr.mxu0 0.0
        %3203 = vmatpush1.msra.mxu0 0.0
        %3204 = vmatprep.subr.mxu0 0.0
        %3205 = vmatpush1.msra.mxu0 0.0
        %3206 = vmatprep.subr.mxu0 0.0
        %3207 = vmatpush1.msra.mxu0 0.0
        %3208 = vmatprep.subr.mxu0 0.0
        %3209 = vmatpush1.msra.mxu0 0.0
        %3210 = vmatprep.subr.mxu0 0.0
        %3211 = vmatpush1.msra.mxu0 0.0
        %3212 = vmatprep.subr.mxu0 0.0
        %3213 = vmatpush1.msra.mxu0 0.0
        %3214 = vmatprep.subr.mxu0 0.0
        %3215 = vmatpush1.msra.mxu0 0.0
        %3216 = vmatprep.subr.mxu0 0.0
        %3217 = vmatpush1.msra.mxu0 0.0
        %3218 = vmatprep.subr.mxu0 0.0
        %3219 = vmatpush1.msra.mxu0 0.0
        %3220 = vmatprep.mubr.f32.mxu0 0.0
        %v3221 = vand.u32 %v3122, 4294901760
        %v3222 = vsub.f32 %v3122, %v3221
        %v3223 = vand.u32 %v3222, 4294901760
        %v3224 = vsub.f32 %v3222, %v3223
        %v3225 = vand.u32 %v3224, 4294901760
        %3226 = vmatmul.mubr.f32.gmra.mrb[0].mxu0 %v3225
        %v3227 = vpop.f32.mrb[0].mxu0
        %v3228 = vadd.f32 0.0, %v3227
        %v3229 = vpop.f32.mrb[0].mxu0
        %3230 = vdwg.mxu0
        %3231 = vmatprep.subr.mxu0 0.0
        %v3232 = vand.u32 %v3124, 4294901760
        %v3233 = vsub.f32 %v3124, %v3232
        %v3234 = vand.u32 %v3233, 4294901760
        %v3235 = vsub.f32 %v3233, %v3234
        %v3236 = vand.u32 %v3235, 4294901760
        %3237 = vmatpush1.msra.mxu0 %v3236
        %3238 = vmatprep.subr.mxu0 0.0
        %v3239 = vand.u32 %v3125, 4294901760
        %v3240 = vsub.f32 %v3125, %v3239
        %v3241 = vand.u32 %v3240, 4294901760
        %v3242 = vsub.f32 %v3240, %v3241
        %v3243 = vand.u32 %v3242, 4294901760
        %3244 = vmatpush1.msra.mxu0 %v3243
        %3245 = vmatprep.subr.mxu0 0.0
        %v3246 = vand.u32 %v3126, 4294901760
        %v3247 = vsub.f32 %v3126, %v3246
        %v3248 = vand.u32 %v3247, 4294901760
        %v3249 = vsub.f32 %v3247, %v3248
        %v3250 = vand.u32 %v3249, 4294901760
        %3251 = vmatpush1.msra.mxu0 %v3250
        %3252 = vmatprep.subr.mxu0 0.0
        %v3253 = vand.u32 %v3127, 4294901760
        %v3254 = vsub.f32 %v3127, %v3253
        %v3255 = vand.u32 %v3254, 4294901760
        %v3256 = vsub.f32 %v3254, %v3255
        %v3257 = vand.u32 %v3256, 4294901760
        %3258 = vmatpush1.msra.mxu0 %v3257
        %3259 = vmatprep.subr.mxu0 0.0
        %v3260 = vand.u32 %v3128, 4294901760
        %v3261 = vsub.f32 %v3128, %v3260
        %v3262 = vand.u32 %v3261, 4294901760
        %v3263 = vsub.f32 %v3261, %v3262
        %v3264 = vand.u32 %v3263, 4294901760
        %3265 = vmatpush1.msra.mxu0 %v3264
        %3266 = vmatprep.subr.mxu0 0.0
        %v3267 = vand.u32 %v3129, 4294901760
        %v3268 = vsub.f32 %v3129, %v3267
        %v3269 = vand.u32 %v3268, 4294901760
        %v3270 = vsub.f32 %v3268, %v3269
        %v3271 = vand.u32 %v3270, 4294901760
        %3272 = vmatpush1.msra.mxu0 %v3271
        %3273 = vmatprep.subr.mxu0 0.0
        %v3274 = vand.u32 %v3130, 4294901760
        %v3275 = vsub.f32 %v3130, %v3274
        %v3276 = vand.u32 %v3275, 4294901760
        %v3277 = vsub.f32 %v3275, %v3276
        %v3278 = vand.u32 %v3277, 4294901760
        %3279 = vmatpush1.msra.mxu0 %v3278
        %3280 = vmatprep.subr.mxu0 0.0
        %v3281 = vand.u32 %v3131, 4294901760
        %v3282 = vsub.f32 %v3131, %v3281
        %v3283 = vand.u32 %v3282, 4294901760
        %v3284 = vsub.f32 %v3282, %v3283
        %v3285 = vand.u32 %v3284, 4294901760
        %3286 = vmatpush1.msra.mxu0 %v3285
        %3287 = vmatprep.subr.mxu0 0.0
        %v3288 = vand.u32 %v3132, 4294901760
        %v3289 = vsub.f32 %v3132, %v3288
        %v3290 = vand.u32 %v3289, 4294901760
        %v3291 = vsub.f32 %v3289, %v3290
        %v3292 = vand.u32 %v3291, 4294901760
        %3293 = vmatpush1.msra.mxu0 %v3292
        %3294 = vmatprep.subr.mxu0 0.0
        %v3295 = vand.u32 %v3133, 4294901760
        %v3296 = vsub.f32 %v3133, %v3295
        %v3297 = vand.u32 %v3296, 4294901760
        %v3298 = vsub.f32 %v3296, %v3297
        %v3299 = vand.u32 %v3298, 4294901760
        %3300 = vmatpush1.msra.mxu0 %v3299
        %3301 = vmatprep.subr.mxu0 0.0
        %v3302 = vand.u32 %v3134, 4294901760
        %v3303 = vsub.f32 %v3134, %v3302
        %v3304 = vand.u32 %v3303, 4294901760
        %v3305 = vsub.f32 %v3303, %v3304
        %v3306 = vand.u32 %v3305, 4294901760
        %3307 = vmatpush1.msra.mxu0 %v3306
        %3308 = vmatprep.subr.mxu0 0.0
        %v3309 = vand.u32 %v3135, 4294901760
        %v3310 = vsub.f32 %v3135, %v3309
        %v3311 = vand.u32 %v3310, 4294901760
        %v3312 = vsub.f32 %v3310, %v3311
        %v3313 = vand.u32 %v3312, 4294901760
        %3314 = vmatpush1.msra.mxu0 %v3313
        %3315 = vmatprep.subr.mxu0 0.0
        %v3316 = vand.u32 %v3136, 4294901760
        %v3317 = vsub.f32 %v3136, %v3316
        %v3318 = vand.u32 %v3317, 4294901760
        %v3319 = vsub.f32 %v3317, %v3318
        %v3320 = vand.u32 %v3319, 4294901760
        %3321 = vmatpush1.msra.mxu0 %v3320
        %3322 = vmatprep.subr.mxu0 0.0
        %v3323 = vand.u32 %v3137, 4294901760
        %v3324 = vsub.f32 %v3137, %v3323
        %v3325 = vand.u32 %v3324, 4294901760
        %v3326 = vsub.f32 %v3324, %v3325
        %v3327 = vand.u32 %v3326, 4294901760
        %3328 = vmatpush1.msra.mxu0 %v3327
        %3329 = vmatprep.subr.mxu0 0.0
        %v3330 = vand.u32 %v3138, 4294901760
        %v3331 = vsub.f32 %v3138, %v3330
        %v3332 = vand.u32 %v3331, 4294901760
        %v3333 = vsub.f32 %v3331, %v3332
        %v3334 = vand.u32 %v3333, 4294901760
        %3335 = vmatpush1.msra.mxu0 %v3334
        %3336 = vmatprep.subr.mxu0 0.0
        %v3337 = vand.u32 %v3139, 4294901760
        %v3338 = vsub.f32 %v3139, %v3337
        %v3339 = vand.u32 %v3338, 4294901760
        %v3340 = vsub.f32 %v3338, %v3339
        %v3341 = vand.u32 %v3340, 4294901760
        %3342 = vmatpush1.msra.mxu0 %v3341
        %3343 = vmatprep.subr.mxu0 0.0
        %3344 = vmatpush1.msra.mxu0 0.0
        %3345 = vmatprep.subr.mxu0 0.0
        %3346 = vmatpush1.msra.mxu0 0.0
        %3347 = vmatprep.subr.mxu0 0.0
        %3348 = vmatpush1.msra.mxu0 0.0
        %3349 = vmatprep.subr.mxu0 0.0
        %3350 = vmatpush1.msra.mxu0 0.0
        %3351 = vmatprep.subr.mxu0 0.0
        %3352 = vmatpush1.msra.mxu0 0.0
        %3353 = vmatprep.subr.mxu0 0.0
        %3354 = vmatpush1.msra.mxu0 0.0
        %3355 = vmatprep.subr.mxu0 0.0
        %3356 = vmatpush1.msra.mxu0 0.0
        %3357 = vmatprep.subr.mxu0 0.0
        %3358 = vmatpush1.msra.mxu0 0.0
        %3359 = vmatprep.subr.mxu0 0.0
        %3360 = vmatpush1.msra.mxu0 0.0
        %3361 = vmatprep.subr.mxu0 0.0
        %3362 = vmatpush1.msra.mxu0 0.0
        %3363 = vmatprep.subr.mxu0 0.0
        %3364 = vmatpush1.msra.mxu0 0.0
        %3365 = vmatprep.subr.mxu0 0.0
        %3366 = vmatpush1.msra.mxu0 0.0
        %3367 = vmatprep.subr.mxu0 0.0
        %3368 = vmatpush1.msra.mxu0 0.0
        %3369 = vmatprep.subr.mxu0 0.0
        %3370 = vmatpush1.msra.mxu0 0.0
        %3371 = vmatprep.subr.mxu0 0.0
        %3372 = vmatpush1.msra.mxu0 0.0
        %3373 = vmatprep.subr.mxu0 0.0
        %3374 = vmatpush1.msra.mxu0 0.0
        %3375 = vmatprep.mubr.f32.mxu0 0.0
        %v3376 = vand.u32 %v3122, 4294901760
        %3377 = vmatmul.mubr.f32.gmra.mrb[0].mxu0 %v3376
        %v3378 = vpop.f32.mrb[0].mxu0
        %v3379 = vadd.f32 %v3228, %v3378
        %v3380 = vpop.f32.mrb[0].mxu0
        %3381 = vdwg.mxu0
        %3382 = vmatprep.subr.mxu0 0.0
        %v3383 = vand.u32 %v3124, 4294901760
        %v3384 = vsub.f32 %v3124, %v3383
        %3385 = vmatpush1.msra.mxu0 %v3384
        %3386 = vmatprep.subr.mxu0 0.0
        %v3387 = vand.u32 %v3125, 4294901760
        %v3388 = vsub.f32 %v3125, %v3387
        %3389 = vmatpush1.msra.mxu0 %v3388
        %3390 = vmatprep.subr.mxu0 0.0
        %v3391 = vand.u32 %v3126, 4294901760
        %v3392 = vsub.f32 %v3126, %v3391
        %3393 = vmatpush1.msra.mxu0 %v3392
        %3394 = vmatprep.subr.mxu0 0.0
        %v3395 = vand.u32 %v3127, 4294901760
        %v3396 = vsub.f32 %v3127, %v3395
        %3397 = vmatpush1.msra.mxu0 %v3396
        %3398 = vmatprep.subr.mxu0 0.0
        %v3399 = vand.u32 %v3128, 4294901760
        %v3400 = vsub.f32 %v3128, %v3399
        %3401 = vmatpush1.msra.mxu0 %v3400
        %3402 = vmatprep.subr.mxu0 0.0
        %v3403 = vand.u32 %v3129, 4294901760
        %v3404 = vsub.f32 %v3129, %v3403
        %3405 = vmatpush1.msra.mxu0 %v3404
        %3406 = vmatprep.subr.mxu0 0.0
        %v3407 = vand.u32 %v3130, 4294901760
        %v3408 = vsub.f32 %v3130, %v3407
        %3409 = vmatpush1.msra.mxu0 %v3408
        %3410 = vmatprep.subr.mxu0 0.0
        %v3411 = vand.u32 %v3131, 4294901760
        %v3412 = vsub.f32 %v3131, %v3411
        %3413 = vmatpush1.msra.mxu0 %v3412
        %3414 = vmatprep.subr.mxu0 0.0
        %v3415 = vand.u32 %v3132, 4294901760
        %v3416 = vsub.f32 %v3132, %v3415
        %3417 = vmatpush1.msra.mxu0 %v3416
        %3418 = vmatprep.subr.mxu0 0.0
        %v3419 = vand.u32 %v3133, 4294901760
        %v3420 = vsub.f32 %v3133, %v3419
        %3421 = vmatpush1.msra.mxu0 %v3420
        %3422 = vmatprep.subr.mxu0 0.0
        %v3423 = vand.u32 %v3134, 4294901760
        %v3424 = vsub.f32 %v3134, %v3423
        %3425 = vmatpush1.msra.mxu0 %v3424
        %3426 = vmatprep.subr.mxu0 0.0
        %v3427 = vand.u32 %v3135, 4294901760
        %v3428 = vsub.f32 %v3135, %v3427
        %3429 = vmatpush1.msra.mxu0 %v3428
        %3430 = vmatprep.subr.mxu0 0.0
        %v3431 = vand.u32 %v3136, 4294901760
        %v3432 = vsub.f32 %v3136, %v3431
        %3433 = vmatpush1.msra.mxu0 %v3432
        %3434 = vmatprep.subr.mxu0 0.0
        %v3435 = vand.u32 %v3137, 4294901760
        %v3436 = vsub.f32 %v3137, %v3435
        %3437 = vmatpush1.msra.mxu0 %v3436
        %3438 = vmatprep.subr.mxu0 0.0
        %v3439 = vand.u32 %v3138, 4294901760
        %v3440 = vsub.f32 %v3138, %v3439
        %3441 = vmatpush1.msra.mxu0 %v3440
        %3442 = vmatprep.subr.mxu0 0.0
        %v3443 = vand.u32 %v3139, 4294901760
        %v3444 = vsub.f32 %v3139, %v3443
        %3445 = vmatpush1.msra.mxu0 %v3444
        %3446 = vmatprep.subr.mxu0 0.0
        %3447 = vmatpush1.msra.mxu0 0.0
        %3448 = vmatprep.subr.mxu0 0.0
        %3449 = vmatpush1.msra.mxu0 0.0
        %3450 = vmatprep.subr.mxu0 0.0
        %3451 = vmatpush1.msra.mxu0 0.0
        %3452 = vmatprep.subr.mxu0 0.0
        %3453 = vmatpush1.msra.mxu0 0.0
        %3454 = vmatprep.subr.mxu0 0.0
        %3455 = vmatpush1.msra.mxu0 0.0
        %3456 = vmatprep.subr.mxu0 0.0
        %3457 = vmatpush1.msra.mxu0 0.0
        %3458 = vmatprep.subr.mxu0 0.0
        %3459 = vmatpush1.msra.mxu0 0.0
        %3460 = vmatprep.subr.mxu0 0.0
        %3461 = vmatpush1.msra.mxu0 0.0
        %3462 = vmatprep.subr.mxu0 0.0
        %3463 = vmatpush1.msra.mxu0 0.0
        %3464 = vmatprep.subr.mxu0 0.0
        %3465 = vmatpush1.msra.mxu0 0.0
        %3466 = vmatprep.subr.mxu0 0.0
        %3467 = vmatpush1.msra.mxu0 0.0
        %3468 = vmatprep.subr.mxu0 0.0
        %3469 = vmatpush1.msra.mxu0 0.0
        %3470 = vmatprep.subr.mxu0 0.0
        %3471 = vmatpush1.msra.mxu0 0.0
        %3472 = vmatprep.subr.mxu0 0.0
        %3473 = vmatpush1.msra.mxu0 0.0
        %3474 = vmatprep.subr.mxu0 0.0
        %3475 = vmatpush1.msra.mxu0 0.0
        %3476 = vmatprep.subr.mxu0 0.0
        %3477 = vmatpush1.msra.mxu0 0.0
        %3478 = vmatprep.mubr.f32.mxu0 0.0
        %v3479 = vand.u32 %v3122, 4294901760
        %v3480 = vsub.f32 %v3122, %v3479
        %3481 = vmatmul.mubr.f32.gmra.mrb[0].mxu0 %v3480
        %v3482 = vpop.f32.mrb[0].mxu0
        %v3483 = vadd.f32 %v3379, %v3482
        %v3484 = vpop.f32.mrb[0].mxu0
        %3485 = vdwg.mxu0
        %3486 = vmatprep.subr.mxu0 0.0
        %v3487 = vand.u32 %v3124, 4294901760
        %3488 = vmatpush1.msra.mxu0 %v3487
        %3489 = vmatprep.subr.mxu0 0.0
        %v3490 = vand.u32 %v3125, 4294901760
        %3491 = vmatpush1.msra.mxu0 %v3490
        %3492 = vmatprep.subr.mxu0 0.0
        %v3493 = vand.u32 %v3126, 4294901760
        %3494 = vmatpush1.msra.mxu0 %v3493
        %3495 = vmatprep.subr.mxu0 0.0
        %v3496 = vand.u32 %v3127, 4294901760
        %3497 = vmatpush1.msra.mxu0 %v3496
        %3498 = vmatprep.subr.mxu0 0.0
        %v3499 = vand.u32 %v3128, 4294901760
        %3500 = vmatpush1.msra.mxu0 %v3499
        %3501 = vmatprep.subr.mxu0 0.0
        %v3502 = vand.u32 %v3129, 4294901760
        %3503 = vmatpush1.msra.mxu0 %v3502
        %3504 = vmatprep.subr.mxu0 0.0
        %v3505 = vand.u32 %v3130, 4294901760
        %3506 = vmatpush1.msra.mxu0 %v3505
        %3507 = vmatprep.subr.mxu0 0.0
        %v3508 = vand.u32 %v3131, 4294901760
        %3509 = vmatpush1.msra.mxu0 %v3508
        %3510 = vmatprep.subr.mxu0 0.0
        %v3511 = vand.u32 %v3132, 4294901760
        %3512 = vmatpush1.msra.mxu0 %v3511
        %3513 = vmatprep.subr.mxu0 0.0
        %v3514 = vand.u32 %v3133, 4294901760
        %3515 = vmatpush1.msra.mxu0 %v3514
        %3516 = vmatprep.subr.mxu0 0.0
        %v3517 = vand.u32 %v3134, 4294901760
        %3518 = vmatpush1.msra.mxu0 %v3517
        %3519 = vmatprep.subr.mxu0 0.0
        %v3520 = vand.u32 %v3135, 4294901760
        %3521 = vmatpush1.msra.mxu0 %v3520
        %3522 = vmatprep.subr.mxu0 0.0
        %v3523 = vand.u32 %v3136, 4294901760
        %3524 = vmatpush1.msra.mxu0 %v3523
        %3525 = vmatprep.subr.mxu0 0.0
        %v3526 = vand.u32 %v3137, 4294901760
        %3527 = vmatpush1.msra.mxu0 %v3526
        %3528 = vmatprep.subr.mxu0 0.0
        %v3529 = vand.u32 %v3138, 4294901760
        %3530 = vmatpush1.msra.mxu0 %v3529
        %3531 = vmatprep.subr.mxu0 0.0
        %v3532 = vand.u32 %v3139, 4294901760
        %3533 = vmatpush1.msra.mxu0 %v3532
        %3534 = vmatprep.subr.mxu0 0.0
        %3535 = vmatpush1.msra.mxu0 0.0
        %3536 = vmatprep.subr.mxu0 0.0
        %3537 = vmatpush1.msra.mxu0 0.0
        %3538 = vmatprep.subr.mxu0 0.0
        %3539 = vmatpush1.msra.mxu0 0.0
        %3540 = vmatprep.subr.mxu0 0.0
        %3541 = vmatpush1.msra.mxu0 0.0
        %3542 = vmatprep.subr.mxu0 0.0
        %3543 = vmatpush1.msra.mxu0 0.0
        %3544 = vmatprep.subr.mxu0 0.0
        %3545 = vmatpush1.msra.mxu0 0.0
        %3546 = vmatprep.subr.mxu0 0.0
        %3547 = vmatpush1.msra.mxu0 0.0
        %3548 = vmatprep.subr.mxu0 0.0
        %3549 = vmatpush1.msra.mxu0 0.0
        %3550 = vmatprep.subr.mxu0 0.0
        %3551 = vmatpush1.msra.mxu0 0.0
        %3552 = vmatprep.subr.mxu0 0.0
        %3553 = vmatpush1.msra.mxu0 0.0
        %3554 = vmatprep.subr.mxu0 0.0
        %3555 = vmatpush1.msra.mxu0 0.0
        %3556 = vmatprep.subr.mxu0 0.0
        %3557 = vmatpush1.msra.mxu0 0.0
        %3558 = vmatprep.subr.mxu0 0.0
        %3559 = vmatpush1.msra.mxu0 0.0
        %3560 = vmatprep.subr.mxu0 0.0
        %3561 = vmatpush1.msra.mxu0 0.0
        %3562 = vmatprep.subr.mxu0 0.0
        %3563 = vmatpush1.msra.mxu0 0.0
        %3564 = vmatprep.subr.mxu0 0.0
        %3565 = vmatpush1.msra.mxu0 0.0
        %3566 = vmatprep.mubr.f32.mxu0 0.0
        %v3567 = vand.u32 %v3122, 4294901760
        %v3568 = vsub.f32 %v3122, %v3567
        %v3569 = vand.u32 %v3568, 4294901760
        %3570 = vmatmul.mubr.f32.gmra.mrb[0].mxu0 %v3569
        %v3571 = vpop.f32.mrb[0].mxu0
        %v3572 = vadd.f32 %v3483, %v3571
        %v3573 = vpop.f32.mrb[0].mxu0
        %3574 = vdwg.mxu0
        %3575 = vmatprep.subr.mxu0 0.0
        %v3576 = vand.u32 %v3124, 4294901760
        %v3577 = vsub.f32 %v3124, %v3576
        %v3578 = vand.u32 %v3577, 4294901760
        %3579 = vmatpush1.msra.mxu0 %v3578
        %3580 = vmatprep.subr.mxu0 0.0
        %v3581 = vand.u32 %v3125, 4294901760
        %v3582 = vsub.f32 %v3125, %v3581
        %v3583 = vand.u32 %v3582, 4294901760
        %3584 = vmatpush1.msra.mxu0 %v3583
        %3585 = vmatprep.subr.mxu0 0.0
        %v3586 = vand.u32 %v3126, 4294901760
        %v3587 = vsub.f32 %v3126, %v3586
        %v3588 = vand.u32 %v3587, 4294901760
        %3589 = vmatpush1.msra.mxu0 %v3588
        %3590 = vmatprep.subr.mxu0 0.0
        %v3591 = vand.u32 %v3127, 4294901760
        %v3592 = vsub.f32 %v3127, %v3591
        %v3593 = vand.u32 %v3592, 4294901760
        %3594 = vmatpush1.msra.mxu0 %v3593
        %3595 = vmatprep.subr.mxu0 0.0
        %v3596 = vand.u32 %v3128, 4294901760
        %v3597 = vsub.f32 %v3128, %v3596
        %v3598 = vand.u32 %v3597, 4294901760
        %3599 = vmatpush1.msra.mxu0 %v3598
        %3600 = vmatprep.subr.mxu0 0.0
        %v3601 = vand.u32 %v3129, 4294901760
        %v3602 = vsub.f32 %v3129, %v3601
        %v3603 = vand.u32 %v3602, 4294901760
        %3604 = vmatpush1.msra.mxu0 %v3603
        %3605 = vmatprep.subr.mxu0 0.0
        %v3606 = vand.u32 %v3130, 4294901760
        %v3607 = vsub.f32 %v3130, %v3606
        %v3608 = vand.u32 %v3607, 4294901760
        %3609 = vmatpush1.msra.mxu0 %v3608
        %3610 = vmatprep.subr.mxu0 0.0
        %v3611 = vand.u32 %v3131, 4294901760
        %v3612 = vsub.f32 %v3131, %v3611
        %v3613 = vand.u32 %v3612, 4294901760
        %3614 = vmatpush1.msra.mxu0 %v3613
        %3615 = vmatprep.subr.mxu0 0.0
        %v3616 = vand.u32 %v3132, 4294901760
        %v3617 = vsub.f32 %v3132, %v3616
        %v3618 = vand.u32 %v3617, 4294901760
        %3619 = vmatpush1.msra.mxu0 %v3618
        %3620 = vmatprep.subr.mxu0 0.0
        %v3621 = vand.u32 %v3133, 4294901760
        %v3622 = vsub.f32 %v3133, %v3621
        %v3623 = vand.u32 %v3622, 4294901760
        %3624 = vmatpush1.msra.mxu0 %v3623
        %3625 = vmatprep.subr.mxu0 0.0
        %v3626 = vand.u32 %v3134, 4294901760
        %v3627 = vsub.f32 %v3134, %v3626
        %v3628 = vand.u32 %v3627, 4294901760
        %3629 = vmatpush1.msra.mxu0 %v3628
        %3630 = vmatprep.subr.mxu0 0.0
        %v3631 = vand.u32 %v3135, 4294901760
        %v3632 = vsub.f32 %v3135, %v3631
        %v3633 = vand.u32 %v3632, 4294901760
        %3634 = vmatpush1.msra.mxu0 %v3633
        %3635 = vmatprep.subr.mxu0 0.0
        %v3636 = vand.u32 %v3136, 4294901760
        %v3637 = vsub.f32 %v3136, %v3636
        %v3638 = vand.u32 %v3637, 4294901760
        %3639 = vmatpush1.msra.mxu0 %v3638
        %3640 = vmatprep.subr.mxu0 0.0
        %v3641 = vand.u32 %v3137, 4294901760
        %v3642 = vsub.f32 %v3137, %v3641
        %v3643 = vand.u32 %v3642, 4294901760
        %3644 = vmatpush1.msra.mxu0 %v3643
        %3645 = vmatprep.subr.mxu0 0.0
        %v3646 = vand.u32 %v3138, 4294901760
        %v3647 = vsub.f32 %v3138, %v3646
        %v3648 = vand.u32 %v3647, 4294901760
        %3649 = vmatpush1.msra.mxu0 %v3648
        %3650 = vmatprep.subr.mxu0 0.0
        %v3651 = vand.u32 %v3139, 4294901760
        %v3652 = vsub.f32 %v3139, %v3651
        %v3653 = vand.u32 %v3652, 4294901760
        %3654 = vmatpush1.msra.mxu0 %v3653
        %3655 = vmatprep.subr.mxu0 0.0
        %3656 = vmatpush1.msra.mxu0 0.0
        %3657 = vmatprep.subr.mxu0 0.0
        %3658 = vmatpush1.msra.mxu0 0.0
        %3659 = vmatprep.subr.mxu0 0.0
        %3660 = vmatpush1.msra.mxu0 0.0
        %3661 = vmatprep.subr.mxu0 0.0
        %3662 = vmatpush1.msra.mxu0 0.0
        %3663 = vmatprep.subr.mxu0 0.0
        %3664 = vmatpush1.msra.mxu0 0.0
        %3665 = vmatprep.subr.mxu0 0.0
        %3666 = vmatpush1.msra.mxu0 0.0
        %3667 = vmatprep.subr.mxu0 0.0
        %3668 = vmatpush1.msra.mxu0 0.0
        %3669 = vmatprep.subr.mxu0 0.0
        %3670 = vmatpush1.msra.mxu0 0.0
        %3671 = vmatprep.subr.mxu0 0.0
        %3672 = vmatpush1.msra.mxu0 0.0
        %3673 = vmatprep.subr.mxu0 0.0
        %3674 = vmatpush1.msra.mxu0 0.0
        %3675 = vmatprep.subr.mxu0 0.0
        %3676 = vmatpush1.msra.mxu0 0.0
        %3677 = vmatprep.subr.mxu0 0.0
        %3678 = vmatpush1.msra.mxu0 0.0
        %3679 = vmatprep.subr.mxu0 0.0
        %3680 = vmatpush1.msra.mxu0 0.0
        %3681 = vmatprep.subr.mxu0 0.0
        %3682 = vmatpush1.msra.mxu0 0.0
        %3683 = vmatprep.subr.mxu0 0.0
        %3684 = vmatpush1.msra.mxu0 0.0
        %3685 = vmatprep.subr.mxu0 0.0
        %3686 = vmatpush1.msra.mxu0 0.0
        %3687 = vmatprep.mubr.f32.mxu0 0.0
        %v3688 = vand.u32 %v3122, 4294901760
        %3689 = vmatmul.mubr.f32.gmra.mrb[0].mxu0 %v3688
        %v3690 = vpop.f32.mrb[0].mxu0
        %v3691 = vadd.f32 %v3572, %v3690
        %v3692 = vpop.f32.mrb[0].mxu0
        %3693 = vdwg.mxu0
        %3694 = vmatprep.subr.mxu0 0.0
        %v3695 = vand.u32 %v3124, 4294901760
        %3696 = vmatpush1.msra.mxu0 %v3695
        %3697 = vmatprep.subr.mxu0 0.0
        %v3698 = vand.u32 %v3125, 4294901760
        %3699 = vmatpush1.msra.mxu0 %v3698
        %3700 = vmatprep.subr.mxu0 0.0
        %v3701 = vand.u32 %v3126, 4294901760
        %3702 = vmatpush1.msra.mxu0 %v3701
        %3703 = vmatprep.subr.mxu0 0.0
        %v3704 = vand.u32 %v3127, 4294901760
        %3705 = vmatpush1.msra.mxu0 %v3704
        %3706 = vmatprep.subr.mxu0 0.0
        %v3707 = vand.u32 %v3128, 4294901760
        %3708 = vmatpush1.msra.mxu0 %v3707
        %3709 = vmatprep.subr.mxu0 0.0
        %v3710 = vand.u32 %v3129, 4294901760
        %3711 = vmatpush1.msra.mxu0 %v3710
        %3712 = vmatprep.subr.mxu0 0.0
        %v3713 = vand.u32 %v3130, 4294901760
        %3714 = vmatpush1.msra.mxu0 %v3713
        %3715 = vmatprep.subr.mxu0 0.0
        %v3716 = vand.u32 %v3131, 4294901760
        %3717 = vmatpush1.msra.mxu0 %v3716
        %3718 = vmatprep.subr.mxu0 0.0
        %v3719 = vand.u32 %v3132, 4294901760
        %3720 = vmatpush1.msra.mxu0 %v3719
        %3721 = vmatprep.subr.mxu0 0.0
        %v3722 = vand.u32 %v3133, 4294901760
        %3723 = vmatpush1.msra.mxu0 %v3722
        %3724 = vmatprep.subr.mxu0 0.0
        %v3725 = vand.u32 %v3134, 4294901760
        %3726 = vmatpush1.msra.mxu0 %v3725
        %3727 = vmatprep.subr.mxu0 0.0
        %v3728 = vand.u32 %v3135, 4294901760
        %3729 = vmatpush1.msra.mxu0 %v3728
        %3730 = vmatprep.subr.mxu0 0.0
        %v3731 = vand.u32 %v3136, 4294901760
        %3732 = vmatpush1.msra.mxu0 %v3731
        %3733 = vmatprep.subr.mxu0 0.0
        %v3734 = vand.u32 %v3137, 4294901760
        %3735 = vmatpush1.msra.mxu0 %v3734
        %3736 = vmatprep.subr.mxu0 0.0
        %v3737 = vand.u32 %v3138, 4294901760
        %3738 = vmatpush1.msra.mxu0 %v3737
        %3739 = vmatprep.subr.mxu0 0.0
        %v3740 = vand.u32 %v3139, 4294901760
        %3741 = vmatpush1.msra.mxu0 %v3740
        %3742 = vmatprep.subr.mxu0 0.0
        %3743 = vmatpush1.msra.mxu0 0.0
        %3744 = vmatprep.subr.mxu0 0.0
        %3745 = vmatpush1.msra.mxu0 0.0
        %3746 = vmatprep.subr.mxu0 0.0
        %3747 = vmatpush1.msra.mxu0 0.0
        %3748 = vmatprep.subr.mxu0 0.0
        %3749 = vmatpush1.msra.mxu0 0.0
        %3750 = vmatprep.subr.mxu0 0.0
        %3751 = vmatpush1.msra.mxu0 0.0
        %3752 = vmatprep.subr.mxu0 0.0
        %3753 = vmatpush1.msra.mxu0 0.0
        %3754 = vmatprep.subr.mxu0 0.0
        %3755 = vmatpush1.msra.mxu0 0.0
        %3756 = vmatprep.subr.mxu0 0.0
        %3757 = vmatpush1.msra.mxu0 0.0
        %3758 = vmatprep.subr.mxu0 0.0
        %3759 = vmatpush1.msra.mxu0 0.0
        %3760 = vmatprep.subr.mxu0 0.0
        %3761 = vmatpush1.msra.mxu0 0.0
        %3762 = vmatprep.subr.mxu0 0.0
        %3763 = vmatpush1.msra.mxu0 0.0
        %3764 = vmatprep.subr.mxu0 0.0
        %3765 = vmatpush1.msra.mxu0 0.0
        %3766 = vmatprep.subr.mxu0 0.0
        %3767 = vmatpush1.msra.mxu0 0.0
        %3768 = vmatprep.subr.mxu0 0.0
        %3769 = vmatpush1.msra.mxu0 0.0
        %3770 = vmatprep.subr.mxu0 0.0
        %3771 = vmatpush1.msra.mxu0 0.0
        %3772 = vmatprep.subr.mxu0 0.0
        %3773 = vmatpush1.msra.mxu0 0.0
        %3774 = vmatprep.mubr.f32.mxu0 0.0
        %v3775 = vand.u32 %v3122, 4294901760
        %3776 = vmatmul.mubr.f32.gmra.mrb[0].mxu0 %v3775
        %v3777 = vpop.f32.mrb[0].mxu0
        %v3778 = vadd.f32 %v3691, %v3777
        %v3779 = vpop.f32.mrb[0].mxu0
        %3780 = vdwg.mxu0
        %3781 = vst [vmem:[%s476] sm:$0xff] %v3778
        %p3782 = scmp.lt.s32.totalorder %s27, 3
        %s3783 = scalar_select %p3782, %s27, 3
        %s3784 = smul.addr %s3783, 8
        %s3785 = scalar_lea.vmem %s12, %s3784
        // Predicated region
        $region85: #{_lsm_sequence_forward.1} parent=59 // pred_check
          %p3786 = pneg %p255
        $region86: #{_lsm_sequence_forward.1} parent=59 // pred_check_branch
          %3788 = sbr.rel (%p3786) target = $region88
        $region87: #{_lsm_sequence_forward.1} parent=59 // pred_region
          _
        $region88: #{_lsm_sequence_forward.1} parent=59 // pred_fallthru
          _
        // Predicated region
        $region89: #{_lsm_sequence_forward.1} parent=59 // pred_check
          %p3789 = pneg %p276
        $region90: #{_lsm_sequence_forward.1} parent=59 // pred_check_branch
          %3791 = sbr.rel (%p3789) target = $region92
        $region91: #{_lsm_sequence_forward.1} parent=59 // pred_region
          _
        $region92: #{_lsm_sequence_forward.1} parent=59 // pred_fallthru
          _
        // Predicated region
        $region93: #{_lsm_sequence_forward.1} parent=59 // pred_check
          %p3792 = pneg %p302
        $region94: #{_lsm_sequence_forward.1} parent=59 // pred_check_branch
          %3794 = sbr.rel (%p3792) target = $region96
        $region95: #{_lsm_sequence_forward.1} parent=59 // pred_region
          _
        $region96: #{_lsm_sequence_forward.1} parent=59 // pred_fallthru
          _
        // Predicated region
        $region97: #{_lsm_sequence_forward.1} parent=59 // pred_check
          %p3795 = pneg %p255
        $region98: #{_lsm_sequence_forward.1} parent=59 // pred_check_branch
          %3797 = sbr.rel (%p3795) target = $region100
        $region99: #{_lsm_sequence_forward.1} parent=59 // pred_region
          _
        $region100: #{_lsm_sequence_forward.1} parent=59 // pred_fallthru
          _
        // Predicated region
        $region101: #{_lsm_sequence_forward.1} parent=59 // pred_check
          %p3798 = pneg %p276
        $region102: #{_lsm_sequence_forward.1} parent=59 // pred_check_branch
          %3800 = sbr.rel (%p3798) target = $region104
        $region103: #{_lsm_sequence_forward.1} parent=59 // pred_region
          _
        $region104: #{_lsm_sequence_forward.1} parent=59 // pred_fallthru
          _
      $region60: #{_lsm_sequence_forward.1} parent=5 // pred_fallthru
        _
      %p3801 = scmp.le.s32.totalorder 2, %s22
      // Predicated region
      $region105: #{_lsm_sequence_forward.1} parent=5 // pred_check
        %p3802 = pneg %p3801
      $region106: #{_lsm_sequence_forward.1} parent=5 // pred_check_branch
        %3804 = sbr.rel (%p3802) target = $region108
      $region107: #{_lsm_sequence_forward.1} parent=5 // pred_region
        %s3805 = ssub.s32 %s22, 2
        // Predicated region
        $region109: #{_lsm_sequence_forward.1} parent=107 // pred_check
          %p3806 = pneg %p308
        $region110: #{_lsm_sequence_forward.1} parent=107 // pred_check_branch
          %3808 = sbr.rel (%p3806) target = $region112
        $region111: #{_lsm_sequence_forward.1} parent=107 // pred_region
          %p3809 = scmp.lt.s32.totalorder %s28, 3
          %s3810 = scalar_select %p3809, %s28, 3
          %s3811 = smul.addr %s3810, 8
          %s3812 = scalar_lea.vmem %s12, %s3811
        $region112: #{_lsm_sequence_forward.1} parent=107 // pred_fallthru
          _
      $region108: #{_lsm_sequence_forward.1} parent=5 // pred_fallthru
        _
    $region6: #{_lsm_sequence_forward.1} parent=1 // loop_footer
      %s26 = sadd.s32 1, %s22
    $region7: #{_lsm_sequence_forward.1} parent=1 // loop_footer_branch
      %21 = sbr.rel target = $region3
    $region8: #{_lsm_sequence_forward.1} parent=1 // loop_exit
      _
    %3813 = vsyncpa [#allocation3], 1
    %s3814 = scalar_lea.sflag [#allocation3], 1
    %3815 = vsyncpa %s3814, 1
    %3816 = vsyncpa [#allocation5], 1
    %3817 = vsyncpa [#allocation8], 1

</llo_original>
